<compile_context>
chip_gen: v7x
topology: tpu7x:2x2x1
jax: 0.10.0
libtpu: 0.0.40
codegen_flags: <defaults>
</compile_context>

<pallas_src>
import functools

import jax
import jax.numpy as jnp
from jax.experimental import pallas as pl
from jax.experimental.pallas import tpu as pltpu


# --------------------------------------------------------------------------
# Pallas kernel
# --------------------------------------------------------------------------

def _gcnl_kernel(x_ref, a_ref, w_ref, b_ref, o_ref, *, n_gate):
    """Fused gated GCN on one batch tile.

    x_ref : (bt, N, Cin)    activation tile
    a_ref : (N, N)          adjacency (shared across batch)
    w_ref : (Cin, 2*Cp)     [W1 | W2], Cp = Cout padded to a lane multiple
    b_ref : (1, 2*Cp)       [b1 | b2]
    o_ref : (bt, N, Cp)
    """
    bt, n_nodes, cin = x_ref.shape
    hp = jax.lax.Precision.HIGHEST

    # Stage 1 -- adjacency matmul FIRST (narrow Cin side).  A is loaded once
    # and reused across the batch tile; each dot is a plain 2-D MXU call, no
    # broadcast_to(A) materialisation and no batched einsum.
    a = a_ref[...]
    ax = jnp.concatenate(
        [jnp.dot(a, x_ref[b], precision=hp, preferred_element_type=jnp.float32)
         for b in range(bt)],
        axis=0)                                          # (bt*N, Cin) row-packed

    # Stage 2 -- the big matmul: one wide packed-row MXU call over all
    # (batch, node) rows, bias added AFTER the adjacency matmul (bug fix).
    y = jnp.dot(ax, w_ref[...], precision=hp,
                preferred_element_type=jnp.float32) + b_ref[...]   # (bt*N, 2*Cp)

    # Lane-aligned gate split + gating; output stays lane-dense.
    lhs = y[:, :n_gate]
    rhs = y[:, n_gate:]
    out = lhs * jax.nn.sigmoid(rhs)                      # (bt*N, Cp)
    o_ref[...] = out.reshape(bt, n_nodes, n_gate)


# --------------------------------------------------------------------------
# Wrapper
# --------------------------------------------------------------------------

def _round_up(x, m):
    return (x + m - 1) // m * m


def _pick_batch_tile(batch, n_nodes, cin, cp, vmem_budget_bytes=24 << 20):
    """Largest batch tile whose per-step footprint fits the VMEM budget.

    Prefers a single grid step (bt == batch): on single-TC chips (v5e/v6e)
    extra steps only add per-step pipeline overhead, and on v7x the second
    TensorCore only pays off once each step packs substantial work.  The
    budget targets v7x's ~32 MiB scoped VMEM (smallest of the generations).
    """
    f32 = 4

    def footprint(bt):
        x_blk = bt * n_nodes * cin * f32
        o_blk = bt * n_nodes * cp * f32
        a_blk = n_nodes * n_nodes * f32
        w_blk = cin * 2 * cp * f32 + 2 * cp * f32
        ax_tmp = bt * n_nodes * max(cin, 128) * f32      # lane-padded intermediate
        y_tmp = bt * n_nodes * 2 * cp * f32
        return 2 * (x_blk + o_blk) + a_blk + w_blk + ax_tmp + y_tmp

    divisors = [d for d in range(1, batch + 1) if batch % d == 0]
    fitting = [d for d in divisors if footprint(d) <= vmem_budget_bytes]
    if not fitting:
        return 1
    bt = max(fitting)
    if bt < batch:
        # When forced to tile, prefer steps that pack a multiple of 256
        # (batch, node) rows so the MXU row dimension stays full.
        full_rows = [d for d in fitting if (d * n_nodes) % 256 == 0]
        if full_rows:
            bt = max(full_rows)
    return bt


def gcnl(x, adj, w1, b1, w2, b2, *, batch_tile=None):
    """GCNL forward. x: (B, N, Cin), adj: (N, N), w*: (Cin, Cout), b*: (Cout,)."""
    B, N, Cin = x.shape
    Cout = w1.shape[1]

    # Lane-align the gate width so the in-kernel split / stores are lane-dense.
    Cp = _round_up(Cout, 128)
    pad = Cp - Cout

    def prep_gate(w, bvec):
        w = jnp.pad(w.astype(jnp.float32), ((0, 0), (0, pad)))
        bvec = jnp.pad(bvec.astype(jnp.float32), (0, pad))
        return w, bvec

    w1p, b1p = prep_gate(w1, b1)
    w2p, b2p = prep_gate(w2, b2)
    w_cat = jnp.concatenate([w1p, w2p], axis=1)                    # (Cin, 2*Cp)
    b_cat = jnp.concatenate([b1p, b2p]).reshape(1, 2 * Cp)         # (1, 2*Cp)

    bt = batch_tile if batch_tile is not None else _pick_batch_tile(B, N, Cin, Cp)
    assert B % bt == 0, (B, bt)

    kernel = functools.partial(_gcnl_kernel, n_gate=Cp)
    out = pl.pallas_call(
        kernel,
        out_shape=jax.ShapeDtypeStruct((B, N, Cp), jnp.float32),
        grid=(B // bt,),
        in_specs=[
            pl.BlockSpec((bt, N, Cin), lambda i: (i, 0, 0)),
            pl.BlockSpec((N, N), lambda i: (0, 0)),
            pl.BlockSpec((Cin, 2 * Cp), lambda i: (0, 0)),
            pl.BlockSpec((1, 2 * Cp), lambda i: (0, 0)),
        ],
        out_specs=pl.BlockSpec((bt, N, Cp), lambda i: (i, 0, 0)),
        compiler_params=pltpu.CompilerParams(
            dimension_semantics=("parallel",)),
    )(x.astype(jnp.float32), adj.astype(jnp.float32), w_cat, b_cat)

    if pad:
        out = out[..., :Cout]
    return out


# --------------------------------------------------------------------------
# Pure-JAX reference (mirrors the PyTorch module exactly)
# --------------------------------------------------------------------------

def gcnl_reference(x, adj, w1, b1, w2, b2):
    hp = jax.lax.Precision.HIGHEST
    lhs = jnp.matmul(adj, jnp.matmul(x, w1, precision=hp), precision=hp) + b1
    rhs = jnp.matmul(adj, jnp.matmul(x, w2, precision=hp), precision=hp) + b2
    return lhs * jax.nn.sigmoid(rhs)


# --------------------------------------------------------------------------
# Main
# --------------------------------------------------------------------------

if __name__ == "__main__":
    B, N, Cin, Cout = 8, 16, 32, 128   # batch, nodes, number_of_feature, number_of_filter

    key = jax.random.PRNGKey(0)
    kx, ka, kw1, kb1, kw2, kb2 = jax.random.split(key, 6)

    # PyTorch GCN.reset_parameters: uniform(-1/sqrt(out_features), +1/sqrt(out_features))
    stdv = 1.0 / (Cout ** 0.5)
    X = jax.random.normal(kx, (B, N, Cin), jnp.float32)
    A = jax.random.uniform(ka, (N, N), jnp.float32)
    w1 = jax.random.uniform(kw1, (Cin, Cout), jnp.float32, -stdv, stdv)
    b1 = jax.random.uniform(kb1, (Cout,), jnp.float32, -stdv, stdv)
    w2 = jax.random.uniform(kw2, (Cin, Cout), jnp.float32, -stdv, stdv)
    b2 = jax.random.uniform(kb2, (Cout,), jnp.float32, -stdv, stdv)

    out = jax.jit(gcnl)(X, A, w1, b1, w2, b2)
    jax.block_until_ready(out)

    ref = gcnl_reference(X, A, w1, b1, w2, b2)

    assert out.shape == (B, N, Cout), out.shape
    assert bool(jnp.isfinite(out).all())
    max_err = float(jnp.max(jnp.abs(out - ref)))
    assert bool(jnp.allclose(out, ref, rtol=1e-3, atol=5e-3)), max_err
    print("KERNEL_OK")
</pallas_src>

<mosaic_0001>
module attributes {stable_mosaic.version = 11 : i64} {
  func.func @_gcnl_kernel(%arg0: i32, %arg1: memref<8x16x32xf32, #tpu.memory_space<vmem>>, %arg2: memref<16x16xf32, #tpu.memory_space<vmem>>, %arg3: memref<32x256xf32, #tpu.memory_space<vmem>>, %arg4: memref<1x256xf32, #tpu.memory_space<vmem>>, %arg5: memref<8x16x128xf32, #tpu.memory_space<vmem>>) attributes {dimension_semantics = [#tpu.dimension_semantics<parallel>], iteration_bounds = array<i64: 1>, scalar_prefetch = 0 : i64, scratch_operands = 0 : i64, tpu.core_type = #tpu.core_type<tc>, window_params = [{transform_indices = @transform_0, window_bounds = array<i64: 8, 16, 32>}, {pipeline_mode = #tpu.pipeline_mode<synchronous>, transform_indices = @transform_1, window_bounds = array<i64: 16, 16>}, {pipeline_mode = #tpu.pipeline_mode<synchronous>, transform_indices = @transform_2, window_bounds = array<i64: 32, 256>}, {pipeline_mode = #tpu.pipeline_mode<synchronous>, transform_indices = @transform_3, window_bounds = array<i64: 1, 256>}, {transform_indices = @transform_4, window_bounds = array<i64: 8, 16, 128>}]} {
    %c0 = arith.constant 0 : index
    %c0_0 = arith.constant 0 : index
    %0 = vector.load %arg2[%c0, %c0_0] : memref<16x16xf32, #tpu.memory_space<vmem>>, vector<16x16xf32>
    %c0_1 = arith.constant 0 : index
    %c0_2 = arith.constant 0 : index
    %c0_3 = arith.constant 0 : index
    %1 = vector.load %arg1[%c0_1, %c0_2, %c0_3] : memref<8x16x32xf32, #tpu.memory_space<vmem>>, vector<1x16x32xf32>
    %2 = vector.shape_cast %1 : vector<1x16x32xf32> to vector<16x32xf32>
    %cst = arith.constant dense<0.000000e+00> : vector<16x32xf32>
    %3 = tpu.matmul %0, %2, %cst {dimension_numbers = #tpu.dot_dimension_numbers<[1], [0], [0], [1], [0, 0, 1, 1], [], []>, precision = #tpu.contract_precision<fp32>} : vector<16x16xf32>, vector<16x32xf32>, vector<16x32xf32> -> vector<16x32xf32>
    %c1 = arith.constant 1 : index
    %c0_4 = arith.constant 0 : index
    %c0_5 = arith.constant 0 : index
    %4 = vector.load %arg1[%c1, %c0_4, %c0_5] : memref<8x16x32xf32, #tpu.memory_space<vmem>>, vector<1x16x32xf32>
    %5 = vector.shape_cast %4 : vector<1x16x32xf32> to vector<16x32xf32>
    %cst_6 = arith.constant dense<0.000000e+00> : vector<16x32xf32>
    %6 = tpu.matmul %0, %5, %cst_6 {dimension_numbers = #tpu.dot_dimension_numbers<[1], [0], [0], [1], [0, 0, 1, 1], [], []>, precision = #tpu.contract_precision<fp32>} : vector<16x16xf32>, vector<16x32xf32>, vector<16x32xf32> -> vector<16x32xf32>
    %c2 = arith.constant 2 : index
    %c0_7 = arith.constant 0 : index
    %c0_8 = arith.constant 0 : index
    %7 = vector.load %arg1[%c2, %c0_7, %c0_8] : memref<8x16x32xf32, #tpu.memory_space<vmem>>, vector<1x16x32xf32>
    %8 = vector.shape_cast %7 : vector<1x16x32xf32> to vector<16x32xf32>
    %cst_9 = arith.constant dense<0.000000e+00> : vector<16x32xf32>
    %9 = tpu.matmul %0, %8, %cst_9 {dimension_numbers = #tpu.dot_dimension_numbers<[1], [0], [0], [1], [0, 0, 1, 1], [], []>, precision = #tpu.contract_precision<fp32>} : vector<16x16xf32>, vector<16x32xf32>, vector<16x32xf32> -> vector<16x32xf32>
    %c3 = arith.constant 3 : index
    %c0_10 = arith.constant 0 : index
    %c0_11 = arith.constant 0 : index
    %10 = vector.load %arg1[%c3, %c0_10, %c0_11] : memref<8x16x32xf32, #tpu.memory_space<vmem>>, vector<1x16x32xf32>
    %11 = vector.shape_cast %10 : vector<1x16x32xf32> to vector<16x32xf32>
    %cst_12 = arith.constant dense<0.000000e+00> : vector<16x32xf32>
    %12 = tpu.matmul %0, %11, %cst_12 {dimension_numbers = #tpu.dot_dimension_numbers<[1], [0], [0], [1], [0, 0, 1, 1], [], []>, precision = #tpu.contract_precision<fp32>} : vector<16x16xf32>, vector<16x32xf32>, vector<16x32xf32> -> vector<16x32xf32>
    %c4 = arith.constant 4 : index
    %c0_13 = arith.constant 0 : index
    %c0_14 = arith.constant 0 : index
    %13 = vector.load %arg1[%c4, %c0_13, %c0_14] : memref<8x16x32xf32, #tpu.memory_space<vmem>>, vector<1x16x32xf32>
    %14 = vector.shape_cast %13 : vector<1x16x32xf32> to vector<16x32xf32>
    %cst_15 = arith.constant dense<0.000000e+00> : vector<16x32xf32>
    %15 = tpu.matmul %0, %14, %cst_15 {dimension_numbers = #tpu.dot_dimension_numbers<[1], [0], [0], [1], [0, 0, 1, 1], [], []>, precision = #tpu.contract_precision<fp32>} : vector<16x16xf32>, vector<16x32xf32>, vector<16x32xf32> -> vector<16x32xf32>
    %c5 = arith.constant 5 : index
    %c0_16 = arith.constant 0 : index
    %c0_17 = arith.constant 0 : index
    %16 = vector.load %arg1[%c5, %c0_16, %c0_17] : memref<8x16x32xf32, #tpu.memory_space<vmem>>, vector<1x16x32xf32>
    %17 = vector.shape_cast %16 : vector<1x16x32xf32> to vector<16x32xf32>
    %cst_18 = arith.constant dense<0.000000e+00> : vector<16x32xf32>
    %18 = tpu.matmul %0, %17, %cst_18 {dimension_numbers = #tpu.dot_dimension_numbers<[1], [0], [0], [1], [0, 0, 1, 1], [], []>, precision = #tpu.contract_precision<fp32>} : vector<16x16xf32>, vector<16x32xf32>, vector<16x32xf32> -> vector<16x32xf32>
    %c6 = arith.constant 6 : index
    %c0_19 = arith.constant 0 : index
    %c0_20 = arith.constant 0 : index
    %19 = vector.load %arg1[%c6, %c0_19, %c0_20] : memref<8x16x32xf32, #tpu.memory_space<vmem>>, vector<1x16x32xf32>
    %20 = vector.shape_cast %19 : vector<1x16x32xf32> to vector<16x32xf32>
    %cst_21 = arith.constant dense<0.000000e+00> : vector<16x32xf32>
    %21 = tpu.matmul %0, %20, %cst_21 {dimension_numbers = #tpu.dot_dimension_numbers<[1], [0], [0], [1], [0, 0, 1, 1], [], []>, precision = #tpu.contract_precision<fp32>} : vector<16x16xf32>, vector<16x32xf32>, vector<16x32xf32> -> vector<16x32xf32>
    %c7 = arith.constant 7 : index
    %c0_22 = arith.constant 0 : index
    %c0_23 = arith.constant 0 : index
    %22 = vector.load %arg1[%c7, %c0_22, %c0_23] : memref<8x16x32xf32, #tpu.memory_space<vmem>>, vector<1x16x32xf32>
    %23 = vector.shape_cast %22 : vector<1x16x32xf32> to vector<16x32xf32>
    %cst_24 = arith.constant dense<0.000000e+00> : vector<16x32xf32>
    %24 = tpu.matmul %0, %23, %cst_24 {dimension_numbers = #tpu.dot_dimension_numbers<[1], [0], [0], [1], [0, 0, 1, 1], [], []>, precision = #tpu.contract_precision<fp32>} : vector<16x16xf32>, vector<16x32xf32>, vector<16x32xf32> -> vector<16x32xf32>
    %25 = tpu.concatenate %3, %6, %9, %12, %15, %18, %21, %24 in 0 : vector<16x32xf32>, vector<16x32xf32>, vector<16x32xf32>, vector<16x32xf32>, vector<16x32xf32>, vector<16x32xf32>, vector<16x32xf32>, vector<16x32xf32> -> vector<128x32xf32>
    %c0_25 = arith.constant 0 : index
    %c0_26 = arith.constant 0 : index
    %26 = vector.load %arg3[%c0_25, %c0_26] : memref<32x256xf32, #tpu.memory_space<vmem>>, vector<32x256xf32>
    %cst_27 = arith.constant dense<0.000000e+00> : vector<128x256xf32>
    %27 = tpu.matmul %25, %26, %cst_27 {dimension_numbers = #tpu.dot_dimension_numbers<[1], [0], [0], [1], [0, 0, 1, 1], [], []>, precision = #tpu.contract_precision<fp32>} : vector<128x32xf32>, vector<32x256xf32>, vector<128x256xf32> -> vector<128x256xf32>
    %c0_28 = arith.constant 0 : index
    %c0_29 = arith.constant 0 : index
    %28 = vector.load %arg4[%c0_28, %c0_29] : memref<1x256xf32, #tpu.memory_space<vmem>>, vector<1x256xf32>
    %29 = vector.broadcast %28 : vector<1x256xf32> to vector<128x256xf32>
    %30 = arith.addf %27, %29 : vector<128x256xf32>
    %31 = vector.extract_strided_slice %30 {offsets = [0, 0], sizes = [128, 128], strides = [1, 1]} : vector<128x256xf32> to vector<128x128xf32>
    %32 = vector.extract_strided_slice %30 {offsets = [0, 128], sizes = [128, 128], strides = [1, 1]} : vector<128x256xf32> to vector<128x128xf32>
    %33 = arith.negf %32 : vector<128x128xf32>
    %34 = math.exp %33 : vector<128x128xf32>
    %cst_30 = arith.constant 1.000000e+00 : f32
    %35 = vector.broadcast %cst_30 : f32 to vector<128x128xf32>
    %36 = arith.addf %35, %34 : vector<128x128xf32>
    %37 = arith.divf %35, %36 : vector<128x128xf32>
    %38 = arith.mulf %31, %37 : vector<128x128xf32>
    %39 = vector.shape_cast %38 : vector<128x128xf32> to vector<8x16x128xf32>
    %c0_31 = arith.constant 0 : index
    %c0_32 = arith.constant 0 : index
    %c0_33 = arith.constant 0 : index
    %40 = vector.load %arg5[%c0_31, %c0_32, %c0_33] : memref<8x16x128xf32, #tpu.memory_space<vmem>>, vector<8x16x128xf32>
    tpu.vector_store %arg5[%c0_31, %c0_32, %c0_33], %39 {strides = array<i32>} : memref<8x16x128xf32, #tpu.memory_space<vmem>>, vector<8x16x128xf32>,
    return
  }
  func.func @transform_0(%arg0: i32) -> (i32, i32, i32) {
    %c0_i32 = arith.constant 0 : i32
    %c0_i32_0 = arith.constant 0 : i32
    %c0_i32_1 = arith.constant 0 : i32
    return %arg0, %c0_i32, %c0_i32_0 : i32, i32, i32
  }
  func.func @transform_1(%arg0: i32) -> (i32, i32) {
    %c0_i32 = arith.constant 0 : i32
    %c0_i32_0 = arith.constant 0 : i32
    %c0_i32_1 = arith.constant 0 : i32
    return %c0_i32, %c0_i32_0 : i32, i32
  }
  func.func @transform_2(%arg0: i32) -> (i32, i32) {
    %c0_i32 = arith.constant 0 : i32
    %c0_i32_0 = arith.constant 0 : i32
    %c0_i32_1 = arith.constant 0 : i32
    return %c0_i32, %c0_i32_0 : i32, i32
  }
  func.func @transform_3(%arg0: i32) -> (i32, i32) {
    %c0_i32 = arith.constant 0 : i32
    %c0_i32_0 = arith.constant 0 : i32
    %c0_i32_1 = arith.constant 0 : i32
    return %c0_i32, %c0_i32_0 : i32, i32
  }
  func.func @transform_4(%arg0: i32) -> (i32, i32, i32) {
    %c0_i32 = arith.constant 0 : i32
    %c0_i32_0 = arith.constant 0 : i32
    %c0_i32_1 = arith.constant 0 : i32
    return %arg0, %c0_i32, %c0_i32_0 : i32, i32, i32
  }
}

</mosaic_0001>

<llo_original>
// kernel: gcnl.1
$region0: #{gcnl.1}
  #allocation0 [shape = 'u32[]', space=smem, size = 0x4, offset = 0x4, fixed_abs, tag = 'smem constant byte address 0x4 - core index']
  #allocation1 [shape = 'u32[144,128]{1,0:T(1,128)}', space=vmem, size = 0x12000, scoped, tag = 'internal scratch']
  %s0 = inlined_call_operand.vmem [shape: f32[8,16,32], index: 0, kind: input, shape index: {}]
  %s1 = inlined_call_operand.hbm [shape: f32[16,16], index: 1, kind: input, shape index: {}]
  %s2 = inlined_call_operand.vmem [shape: f32[32,256], index: 2, kind: input, shape index: {}]
  %s3 = inlined_call_operand.vmem [shape: f32[1,256], index: 3, kind: input, shape index: {}]
  %s4 = inlined_call_operand.hbm [shape: f32[8,16,128], index: 4, kind: output, shape index: {}]
  %s5 = sld [smem:[#allocation0]]
  $region30: #{gcnl.1} parent=0
    _
  %s7 = ssub.s32 1, %s5
  %s8 = scalar_select 0, %s7, %s5
  $region1: #{gcnl.1} parent=0
    #allocation2 [shape = 'u8[8192]{0}', space=vmem, size = 0x2000, scoped, tag = 'input window, operand 1, single buffered']
    #allocation3 [shape = 's32[1]{0}', space=sflag, size = 0x4, scoped, tag = 'scoped memory for gcnl.1']
    #allocation4 [shape = 's32[1]{0}', space=sflag, size = 0x4, scoped, tag = 'scoped memory for gcnl.1']
    #allocation5 [shape = 'u8[65536]{0}', space=vmem, size = 0x10000, scoped, tag = 'output window, operand 0, single buffered']
    %9 = vsyncpa [#allocation3], 0
    %10 = vsyncpa [#allocation4], 0
    // Predicated region
    $region2: #{gcnl.1} parent=1 // pred_check
      _
    $region3: #{gcnl.1} parent=1 // pred_check_branch
      %12 = sbr.rel (0) target = $region5
    $region4: #{gcnl.1} parent=1 // pred_region
      _
    $region5: #{gcnl.1} parent=1 // pred_fallthru
      _
    // Predicated region
    $region6: #{gcnl.1} parent=1 // pred_check
      _
    $region7: #{gcnl.1} parent=1 // pred_check_branch
      %14 = sbr.rel (0) target = $region9
    $region8: #{gcnl.1} parent=1 // pred_region
      %s16 = ssub.s32 256, 256
      %17 = vsyncadd [#allocation3], %s16
      %s18 = sshll.u32 [#allocation2], 4
      %s19 = int_to_ptr.vmem [resolvable:$true] %s18
      %24 = dma.hbm_to_vmem [thread:$0]  %s1, 256, %s19, [#allocation3], 128, 128, 8
    $region9: #{gcnl.1} parent=1 // pred_fallthru
      _
    // Predicated region
    $region10: #{gcnl.1} parent=1 // pred_check
      _
    $region11: #{gcnl.1} parent=1 // pred_check_branch
      %26 = sbr.rel (0) target = $region13
    $region12: #{gcnl.1} parent=1 // pred_region
      _
    $region13: #{gcnl.1} parent=1 // pred_fallthru
      _
    // Predicated region
    $region14: #{gcnl.1} parent=1 // pred_check
      _
    $region15: #{gcnl.1} parent=1 // pred_check_branch
      %28 = sbr.rel (0) target = $region17
    $region16: #{gcnl.1} parent=1 // pred_region
      _
    $region17: #{gcnl.1} parent=1 // pred_fallthru
      _
    // Predicated region
    $region18: #{gcnl.1} parent=1 // pred_check
      _
    $region19: #{gcnl.1} parent=1 // pred_check_branch
      %30 = sbr.rel (0) target = $region21
    $region20: #{gcnl.1} parent=1 // pred_region
      %31 = dma.done [#allocation3], 256
    $region21: #{gcnl.1} parent=1 // pred_fallthru
      _
    %v32 = vld [vmem:[#allocation2] sm:$0xff]
    %v33 = vld [vmem:[#allocation2 + $0x8] sm:$0xff]
    %v34 = vld [vmem:[%s0] sm:$0xff]
    %v35 = vld [vmem:[%s0 + $0x8] sm:$0xff]
    %vm36 = vcmask 130048
    %v38 = vsel %vm36, %v32, 0
    %v41 = vsel %vm36, %v33, 0
    %43 = vmatprep.subr.mxu0 0.0
    %v44 = vand.u32 %v34, 4294901760
    %45 = vmatpush1.msra.mxu0 %v44
    %46 = vmatprep.subr.mxu0 0.0
    %v47 = vand.u32 %v35, 4294901760
    %48 = vmatpush1.msra.mxu0 %v47
    %49 = vmatprep.subr.mxu0 0.0
    %50 = vmatpush1.msra.mxu0 0.0
    %51 = vmatprep.subr.mxu0 0.0
    %52 = vmatpush1.msra.mxu0 0.0
    %53 = vmatprep.subr.mxu0 0.0
    %54 = vmatpush1.msra.mxu0 0.0
    %55 = vmatprep.subr.mxu0 0.0
    %56 = vmatpush1.msra.mxu0 0.0
    %57 = vmatprep.subr.mxu0 0.0
    %58 = vmatpush1.msra.mxu0 0.0
    %59 = vmatprep.subr.mxu0 0.0
    %60 = vmatpush1.msra.mxu0 0.0
    %61 = vmatprep.subr.mxu0 0.0
    %62 = vmatpush1.msra.mxu0 0.0
    %63 = vmatprep.subr.mxu0 0.0
    %64 = vmatpush1.msra.mxu0 0.0
    %65 = vmatprep.subr.mxu0 0.0
    %66 = vmatpush1.msra.mxu0 0.0
    %67 = vmatprep.subr.mxu0 0.0
    %68 = vmatpush1.msra.mxu0 0.0
    %69 = vmatprep.subr.mxu0 0.0
    %70 = vmatpush1.msra.mxu0 0.0
    %71 = vmatprep.subr.mxu0 0.0
    %72 = vmatpush1.msra.mxu0 0.0
    %73 = vmatprep.subr.mxu0 0.0
    %74 = vmatpush1.msra.mxu0 0.0
    %75 = vmatprep.subr.mxu0 0.0
    %76 = vmatpush1.msra.mxu0 0.0
    %77 = vmatprep.subr.mxu0 0.0
    %78 = vmatpush1.msra.mxu0 0.0
    %79 = vmatprep.subr.mxu0 0.0
    %80 = vmatpush1.msra.mxu0 0.0
    %81 = vmatprep.subr.mxu0 0.0
    %82 = vmatpush1.msra.mxu0 0.0
    %83 = vmatprep.subr.mxu0 0.0
    %84 = vmatpush1.msra.mxu0 0.0
    %85 = vmatprep.subr.mxu0 0.0
    %86 = vmatpush1.msra.mxu0 0.0
    %87 = vmatprep.subr.mxu0 0.0
    %88 = vmatpush1.msra.mxu0 0.0
    %89 = vmatprep.subr.mxu0 0.0
    %90 = vmatpush1.msra.mxu0 0.0
    %91 = vmatprep.subr.mxu0 0.0
    %92 = vmatpush1.msra.mxu0 0.0
    %93 = vmatprep.subr.mxu0 0.0
    %94 = vmatpush1.msra.mxu0 0.0
    %95 = vmatprep.subr.mxu0 0.0
    %96 = vmatpush1.msra.mxu0 0.0
    %97 = vmatprep.subr.mxu0 0.0
    %98 = vmatpush1.msra.mxu0 0.0
    %99 = vmatprep.subr.mxu0 0.0
    %100 = vmatpush1.msra.mxu0 0.0
    %101 = vmatprep.subr.mxu0 0.0
    %102 = vmatpush1.msra.mxu0 0.0
    %103 = vmatprep.subr.mxu0 0.0
    %104 = vmatpush1.msra.mxu0 0.0
    %105 = vmatprep.subr.mxu0 0.0
    %106 = vmatpush1.msra.mxu0 0.0
    %107 = vmatprep.subr.mxu0 0.0
    %108 = vmatpush1.msra.mxu0 0.0
    %109 = vmatprep.mubr.f32.mxu0 0.0
    %v110 = vand.u32 %v38, 4294901760
    %v111 = vsub.f32 %v38, %v110
    %v112 = vand.u32 %v111, 4294901760
    %v113 = vsub.f32 %v111, %v112
    %v114 = vand.u32 %v113, 4294901760
    %115 = vmatmul.mubr.f32.gmra.mrb[0].mxu0 %v114
    %v116 = vpop.f32.mrb[0].mxu0
    %v117 = vadd.f32 0.0, %v116
    %v118 = vpop.f32.mrb[0].mxu0
    %119 = vmatprep.mubr.f32.mxu0 0.0
    %v120 = vand.u32 %v41, 4294901760
    %v121 = vsub.f32 %v41, %v120
    %v122 = vand.u32 %v121, 4294901760
    %v123 = vsub.f32 %v121, %v122
    %v124 = vand.u32 %v123, 4294901760
    %125 = vmatmul.mubr.f32.gmra.mrb[0].mxu0 %v124
    %v126 = vpop.f32.mrb[0].mxu0
    %v127 = vadd.f32 0.0, %v126
    %v128 = vpop.f32.mrb[0].mxu0
    %129 = vdwg.mxu0
    %130 = vmatprep.subr.mxu0 0.0
    %v131 = vand.u32 %v34, 4294901760
    %v132 = vsub.f32 %v34, %v131
    %v133 = vand.u32 %v132, 4294901760
    %v134 = vsub.f32 %v132, %v133
    %v135 = vand.u32 %v134, 4294901760
    %136 = vmatpush1.msra.mxu0 %v135
    %137 = vmatprep.subr.mxu0 0.0
    %v138 = vand.u32 %v35, 4294901760
    %v139 = vsub.f32 %v35, %v138
    %v140 = vand.u32 %v139, 4294901760
    %v141 = vsub.f32 %v139, %v140
    %v142 = vand.u32 %v141, 4294901760
    %143 = vmatpush1.msra.mxu0 %v142
    %144 = vmatprep.subr.mxu0 0.0
    %145 = vmatpush1.msra.mxu0 0.0
    %146 = vmatprep.subr.mxu0 0.0
    %147 = vmatpush1.msra.mxu0 0.0
    %148 = vmatprep.subr.mxu0 0.0
    %149 = vmatpush1.msra.mxu0 0.0
    %150 = vmatprep.subr.mxu0 0.0
    %151 = vmatpush1.msra.mxu0 0.0
    %152 = vmatprep.subr.mxu0 0.0
    %153 = vmatpush1.msra.mxu0 0.0
    %154 = vmatprep.subr.mxu0 0.0
    %155 = vmatpush1.msra.mxu0 0.0
    %156 = vmatprep.subr.mxu0 0.0
    %157 = vmatpush1.msra.mxu0 0.0
    %158 = vmatprep.subr.mxu0 0.0
    %159 = vmatpush1.msra.mxu0 0.0
    %160 = vmatprep.subr.mxu0 0.0
    %161 = vmatpush1.msra.mxu0 0.0
    %162 = vmatprep.subr.mxu0 0.0
    %163 = vmatpush1.msra.mxu0 0.0
    %164 = vmatprep.subr.mxu0 0.0
    %165 = vmatpush1.msra.mxu0 0.0
    %166 = vmatprep.subr.mxu0 0.0
    %167 = vmatpush1.msra.mxu0 0.0
    %168 = vmatprep.subr.mxu0 0.0
    %169 = vmatpush1.msra.mxu0 0.0
    %170 = vmatprep.subr.mxu0 0.0
    %171 = vmatpush1.msra.mxu0 0.0
    %172 = vmatprep.subr.mxu0 0.0
    %173 = vmatpush1.msra.mxu0 0.0
    %174 = vmatprep.subr.mxu0 0.0
    %175 = vmatpush1.msra.mxu0 0.0
    %176 = vmatprep.subr.mxu0 0.0
    %177 = vmatpush1.msra.mxu0 0.0
    %178 = vmatprep.subr.mxu0 0.0
    %179 = vmatpush1.msra.mxu0 0.0
    %180 = vmatprep.subr.mxu0 0.0
    %181 = vmatpush1.msra.mxu0 0.0
    %182 = vmatprep.subr.mxu0 0.0
    %183 = vmatpush1.msra.mxu0 0.0
    %184 = vmatprep.subr.mxu0 0.0
    %185 = vmatpush1.msra.mxu0 0.0
    %186 = vmatprep.subr.mxu0 0.0
    %187 = vmatpush1.msra.mxu0 0.0
    %188 = vmatprep.subr.mxu0 0.0
    %189 = vmatpush1.msra.mxu0 0.0
    %190 = vmatprep.subr.mxu0 0.0
    %191 = vmatpush1.msra.mxu0 0.0
    %192 = vmatprep.subr.mxu0 0.0
    %193 = vmatpush1.msra.mxu0 0.0
    %194 = vmatprep.subr.mxu0 0.0
    %195 = vmatpush1.msra.mxu0 0.0
    %196 = vmatprep.subr.mxu0 0.0
    %197 = vmatpush1.msra.mxu0 0.0
    %198 = vmatprep.subr.mxu0 0.0
    %199 = vmatpush1.msra.mxu0 0.0
    %200 = vmatprep.subr.mxu0 0.0
    %201 = vmatpush1.msra.mxu0 0.0
    %202 = vmatprep.subr.mxu0 0.0
    %203 = vmatpush1.msra.mxu0 0.0
    %204 = vmatprep.mubr.f32.mxu0 0.0
    %v205 = vand.u32 %v38, 4294901760
    %206 = vmatmul.mubr.f32.gmra.mrb[0].mxu0 %v205
    %v207 = vpop.f32.mrb[0].mxu0
    %v208 = vadd.f32 %v117, %v207
    %v209 = vpop.f32.mrb[0].mxu0
    %210 = vmatprep.mubr.f32.mxu0 0.0
    %v211 = vand.u32 %v41, 4294901760
    %212 = vmatmul.mubr.f32.gmra.mrb[0].mxu0 %v211
    %v213 = vpop.f32.mrb[0].mxu0
    %v214 = vadd.f32 %v127, %v213
    %v215 = vpop.f32.mrb[0].mxu0
    %216 = vdwg.mxu0
    %217 = vmatprep.subr.mxu0 0.0
    %v218 = vand.u32 %v34, 4294901760
    %v219 = vsub.f32 %v34, %v218
    %220 = vmatpush1.msra.mxu0 %v219
    %221 = vmatprep.subr.mxu0 0.0
    %v222 = vand.u32 %v35, 4294901760
    %v223 = vsub.f32 %v35, %v222
    %224 = vmatpush1.msra.mxu0 %v223
    %225 = vmatprep.subr.mxu0 0.0
    %226 = vmatpush1.msra.mxu0 0.0
    %227 = vmatprep.subr.mxu0 0.0
    %228 = vmatpush1.msra.mxu0 0.0
    %229 = vmatprep.subr.mxu0 0.0
    %230 = vmatpush1.msra.mxu0 0.0
    %231 = vmatprep.subr.mxu0 0.0
    %232 = vmatpush1.msra.mxu0 0.0
    %233 = vmatprep.subr.mxu0 0.0
    %234 = vmatpush1.msra.mxu0 0.0
    %235 = vmatprep.subr.mxu0 0.0
    %236 = vmatpush1.msra.mxu0 0.0
    %237 = vmatprep.subr.mxu0 0.0
    %238 = vmatpush1.msra.mxu0 0.0
    %239 = vmatprep.subr.mxu0 0.0
    %240 = vmatpush1.msra.mxu0 0.0
    %241 = vmatprep.subr.mxu0 0.0
    %242 = vmatpush1.msra.mxu0 0.0
    %243 = vmatprep.subr.mxu0 0.0
    %244 = vmatpush1.msra.mxu0 0.0
    %245 = vmatprep.subr.mxu0 0.0
    %246 = vmatpush1.msra.mxu0 0.0
    %247 = vmatprep.subr.mxu0 0.0
    %248 = vmatpush1.msra.mxu0 0.0
    %249 = vmatprep.subr.mxu0 0.0
    %250 = vmatpush1.msra.mxu0 0.0
    %251 = vmatprep.subr.mxu0 0.0
    %252 = vmatpush1.msra.mxu0 0.0
    %253 = vmatprep.subr.mxu0 0.0
    %254 = vmatpush1.msra.mxu0 0.0
    %255 = vmatprep.subr.mxu0 0.0
    %256 = vmatpush1.msra.mxu0 0.0
    %257 = vmatprep.subr.mxu0 0.0
    %258 = vmatpush1.msra.mxu0 0.0
    %259 = vmatprep.subr.mxu0 0.0
    %260 = vmatpush1.msra.mxu0 0.0
    %261 = vmatprep.subr.mxu0 0.0
    %262 = vmatpush1.msra.mxu0 0.0
    %263 = vmatprep.subr.mxu0 0.0
    %264 = vmatpush1.msra.mxu0 0.0
    %265 = vmatprep.subr.mxu0 0.0
    %266 = vmatpush1.msra.mxu0 0.0
    %267 = vmatprep.subr.mxu0 0.0
    %268 = vmatpush1.msra.mxu0 0.0
    %269 = vmatprep.subr.mxu0 0.0
    %270 = vmatpush1.msra.mxu0 0.0
    %271 = vmatprep.subr.mxu0 0.0
    %272 = vmatpush1.msra.mxu0 0.0
    %273 = vmatprep.subr.mxu0 0.0
    %274 = vmatpush1.msra.mxu0 0.0
    %275 = vmatprep.subr.mxu0 0.0
    %276 = vmatpush1.msra.mxu0 0.0
    %277 = vmatprep.subr.mxu0 0.0
    %278 = vmatpush1.msra.mxu0 0.0
    %279 = vmatprep.subr.mxu0 0.0
    %280 = vmatpush1.msra.mxu0 0.0
    %281 = vmatprep.subr.mxu0 0.0
    %282 = vmatpush1.msra.mxu0 0.0
    %283 = vmatprep.subr.mxu0 0.0
    %284 = vmatpush1.msra.mxu0 0.0
    %285 = vmatprep.mubr.f32.mxu0 0.0
    %v286 = vand.u32 %v38, 4294901760
    %v287 = vsub.f32 %v38, %v286
    %288 = vmatmul.mubr.f32.gmra.mrb[0].mxu0 %v287
    %v289 = vpop.f32.mrb[0].mxu0
    %v290 = vadd.f32 %v208, %v289
    %v291 = vpop.f32.mrb[0].mxu0
    %292 = vmatprep.mubr.f32.mxu0 0.0
    %v293 = vand.u32 %v41, 4294901760
    %v294 = vsub.f32 %v41, %v293
    %295 = vmatmul.mubr.f32.gmra.mrb[0].mxu0 %v294
    %v296 = vpop.f32.mrb[0].mxu0
    %v297 = vadd.f32 %v214, %v296
    %v298 = vpop.f32.mrb[0].mxu0
    %299 = vdwg.mxu0
    %300 = vmatprep.subr.mxu0 0.0
    %v301 = vand.u32 %v34, 4294901760
    %302 = vmatpush1.msra.mxu0 %v301
    %303 = vmatprep.subr.mxu0 0.0
    %v304 = vand.u32 %v35, 4294901760
    %305 = vmatpush1.msra.mxu0 %v304
    %306 = vmatprep.subr.mxu0 0.0
    %307 = vmatpush1.msra.mxu0 0.0
    %308 = vmatprep.subr.mxu0 0.0
    %309 = vmatpush1.msra.mxu0 0.0
    %310 = vmatprep.subr.mxu0 0.0
    %311 = vmatpush1.msra.mxu0 0.0
    %312 = vmatprep.subr.mxu0 0.0
    %313 = vmatpush1.msra.mxu0 0.0
    %314 = vmatprep.subr.mxu0 0.0
    %315 = vmatpush1.msra.mxu0 0.0
    %316 = vmatprep.subr.mxu0 0.0
    %317 = vmatpush1.msra.mxu0 0.0
    %318 = vmatprep.subr.mxu0 0.0
    %319 = vmatpush1.msra.mxu0 0.0
    %320 = vmatprep.subr.mxu0 0.0
    %321 = vmatpush1.msra.mxu0 0.0
    %322 = vmatprep.subr.mxu0 0.0
    %323 = vmatpush1.msra.mxu0 0.0
    %324 = vmatprep.subr.mxu0 0.0
    %325 = vmatpush1.msra.mxu0 0.0
    %326 = vmatprep.subr.mxu0 0.0
    %327 = vmatpush1.msra.mxu0 0.0
    %328 = vmatprep.subr.mxu0 0.0
    %329 = vmatpush1.msra.mxu0 0.0
    %330 = vmatprep.subr.mxu0 0.0
    %331 = vmatpush1.msra.mxu0 0.0
    %332 = vmatprep.subr.mxu0 0.0
    %333 = vmatpush1.msra.mxu0 0.0
    %334 = vmatprep.subr.mxu0 0.0
    %335 = vmatpush1.msra.mxu0 0.0
    %336 = vmatprep.subr.mxu0 0.0
    %337 = vmatpush1.msra.mxu0 0.0
    %338 = vmatprep.subr.mxu0 0.0
    %339 = vmatpush1.msra.mxu0 0.0
    %340 = vmatprep.subr.mxu0 0.0
    %341 = vmatpush1.msra.mxu0 0.0
    %342 = vmatprep.subr.mxu0 0.0
    %343 = vmatpush1.msra.mxu0 0.0
    %344 = vmatprep.subr.mxu0 0.0
    %345 = vmatpush1.msra.mxu0 0.0
    %346 = vmatprep.subr.mxu0 0.0
    %347 = vmatpush1.msra.mxu0 0.0
    %348 = vmatprep.subr.mxu0 0.0
    %349 = vmatpush1.msra.mxu0 0.0
    %350 = vmatprep.subr.mxu0 0.0
    %351 = vmatpush1.msra.mxu0 0.0
    %352 = vmatprep.subr.mxu0 0.0
    %353 = vmatpush1.msra.mxu0 0.0
    %354 = vmatprep.subr.mxu0 0.0
    %355 = vmatpush1.msra.mxu0 0.0
    %356 = vmatprep.subr.mxu0 0.0
    %357 = vmatpush1.msra.mxu0 0.0
    %358 = vmatprep.subr.mxu0 0.0
    %359 = vmatpush1.msra.mxu0 0.0
    %360 = vmatprep.subr.mxu0 0.0
    %361 = vmatpush1.msra.mxu0 0.0
    %362 = vmatprep.subr.mxu0 0.0
    %363 = vmatpush1.msra.mxu0 0.0
    %364 = vmatprep.subr.mxu0 0.0
    %365 = vmatpush1.msra.mxu0 0.0
    %366 = vmatprep.mubr.f32.mxu0 0.0
    %v367 = vand.u32 %v38, 4294901760
    %v368 = vsub.f32 %v38, %v367
    %v369 = vand.u32 %v368, 4294901760
    %370 = vmatmul.mubr.f32.gmra.mrb[0].mxu0 %v369
    %v371 = vpop.f32.mrb[0].mxu0
    %v372 = vadd.f32 %v290, %v371
    %v373 = vpop.f32.mrb[0].mxu0
    %374 = vmatprep.mubr.f32.mxu0 0.0
    %v375 = vand.u32 %v41, 4294901760
    %v376 = vsub.f32 %v41, %v375
    %v377 = vand.u32 %v376, 4294901760
    %378 = vmatmul.mubr.f32.gmra.mrb[0].mxu0 %v377
    %v379 = vpop.f32.mrb[0].mxu0
    %v380 = vadd.f32 %v297, %v379
    %v381 = vpop.f32.mrb[0].mxu0
    %382 = vdwg.mxu0
    %383 = vmatprep.subr.mxu0 0.0
    %v384 = vand.u32 %v34, 4294901760
    %v385 = vsub.f32 %v34, %v384
    %v386 = vand.u32 %v385, 4294901760
    %387 = vmatpush1.msra.mxu0 %v386
    %388 = vmatprep.subr.mxu0 0.0
    %v389 = vand.u32 %v35, 4294901760
    %v390 = vsub.f32 %v35, %v389
    %v391 = vand.u32 %v390, 4294901760
    %392 = vmatpush1.msra.mxu0 %v391
    %393 = vmatprep.subr.mxu0 0.0
    %394 = vmatpush1.msra.mxu0 0.0
    %395 = vmatprep.subr.mxu0 0.0
    %396 = vmatpush1.msra.mxu0 0.0
    %397 = vmatprep.subr.mxu0 0.0
    %398 = vmatpush1.msra.mxu0 0.0
    %399 = vmatprep.subr.mxu0 0.0
    %400 = vmatpush1.msra.mxu0 0.0
    %401 = vmatprep.subr.mxu0 0.0
    %402 = vmatpush1.msra.mxu0 0.0
    %403 = vmatprep.subr.mxu0 0.0
    %404 = vmatpush1.msra.mxu0 0.0
    %405 = vmatprep.subr.mxu0 0.0
    %406 = vmatpush1.msra.mxu0 0.0
    %407 = vmatprep.subr.mxu0 0.0
    %408 = vmatpush1.msra.mxu0 0.0
    %409 = vmatprep.subr.mxu0 0.0
    %410 = vmatpush1.msra.mxu0 0.0
    %411 = vmatprep.subr.mxu0 0.0
    %412 = vmatpush1.msra.mxu0 0.0
    %413 = vmatprep.subr.mxu0 0.0
    %414 = vmatpush1.msra.mxu0 0.0
    %415 = vmatprep.subr.mxu0 0.0
    %416 = vmatpush1.msra.mxu0 0.0
    %417 = vmatprep.subr.mxu0 0.0
    %418 = vmatpush1.msra.mxu0 0.0
    %419 = vmatprep.subr.mxu0 0.0
    %420 = vmatpush1.msra.mxu0 0.0
    %421 = vmatprep.subr.mxu0 0.0
    %422 = vmatpush1.msra.mxu0 0.0
    %423 = vmatprep.subr.mxu0 0.0
    %424 = vmatpush1.msra.mxu0 0.0
    %425 = vmatprep.subr.mxu0 0.0
    %426 = vmatpush1.msra.mxu0 0.0
    %427 = vmatprep.subr.mxu0 0.0
    %428 = vmatpush1.msra.mxu0 0.0
    %429 = vmatprep.subr.mxu0 0.0
    %430 = vmatpush1.msra.mxu0 0.0
    %431 = vmatprep.subr.mxu0 0.0
    %432 = vmatpush1.msra.mxu0 0.0
    %433 = vmatprep.subr.mxu0 0.0
    %434 = vmatpush1.msra.mxu0 0.0
    %435 = vmatprep.subr.mxu0 0.0
    %436 = vmatpush1.msra.mxu0 0.0
    %437 = vmatprep.subr.mxu0 0.0
    %438 = vmatpush1.msra.mxu0 0.0
    %439 = vmatprep.subr.mxu0 0.0
    %440 = vmatpush1.msra.mxu0 0.0
    %441 = vmatprep.subr.mxu0 0.0
    %442 = vmatpush1.msra.mxu0 0.0
    %443 = vmatprep.subr.mxu0 0.0
    %444 = vmatpush1.msra.mxu0 0.0
    %445 = vmatprep.subr.mxu0 0.0
    %446 = vmatpush1.msra.mxu0 0.0
    %447 = vmatprep.subr.mxu0 0.0
    %448 = vmatpush1.msra.mxu0 0.0
    %449 = vmatprep.subr.mxu0 0.0
    %450 = vmatpush1.msra.mxu0 0.0
    %451 = vmatprep.subr.mxu0 0.0
    %452 = vmatpush1.msra.mxu0 0.0
    %453 = vmatprep.mubr.f32.mxu0 0.0
    %v454 = vand.u32 %v38, 4294901760
    %455 = vmatmul.mubr.f32.gmra.mrb[0].mxu0 %v454
    %v456 = vpop.f32.mrb[0].mxu0
    %v457 = vadd.f32 %v372, %v456
    %v458 = vpop.f32.mrb[0].mxu0
    %459 = vmatprep.mubr.f32.mxu0 0.0
    %v460 = vand.u32 %v41, 4294901760
    %461 = vmatmul.mubr.f32.gmra.mrb[0].mxu0 %v460
    %v462 = vpop.f32.mrb[0].mxu0
    %v463 = vadd.f32 %v380, %v462
    %v464 = vpop.f32.mrb[0].mxu0
    %465 = vdwg.mxu0
    %466 = vmatprep.subr.mxu0 0.0
    %v467 = vand.u32 %v34, 4294901760
    %468 = vmatpush1.msra.mxu0 %v467
    %469 = vmatprep.subr.mxu0 0.0
    %v470 = vand.u32 %v35, 4294901760
    %471 = vmatpush1.msra.mxu0 %v470
    %472 = vmatprep.subr.mxu0 0.0
    %473 = vmatpush1.msra.mxu0 0.0
    %474 = vmatprep.subr.mxu0 0.0
    %475 = vmatpush1.msra.mxu0 0.0
    %476 = vmatprep.subr.mxu0 0.0
    %477 = vmatpush1.msra.mxu0 0.0
    %478 = vmatprep.subr.mxu0 0.0
    %479 = vmatpush1.msra.mxu0 0.0
    %480 = vmatprep.subr.mxu0 0.0
    %481 = vmatpush1.msra.mxu0 0.0
    %482 = vmatprep.subr.mxu0 0.0
    %483 = vmatpush1.msra.mxu0 0.0
    %484 = vmatprep.subr.mxu0 0.0
    %485 = vmatpush1.msra.mxu0 0.0
    %486 = vmatprep.subr.mxu0 0.0
    %487 = vmatpush1.msra.mxu0 0.0
    %488 = vmatprep.subr.mxu0 0.0
    %489 = vmatpush1.msra.mxu0 0.0
    %490 = vmatprep.subr.mxu0 0.0
    %491 = vmatpush1.msra.mxu0 0.0
    %492 = vmatprep.subr.mxu0 0.0
    %493 = vmatpush1.msra.mxu0 0.0
    %494 = vmatprep.subr.mxu0 0.0
    %495 = vmatpush1.msra.mxu0 0.0
    %496 = vmatprep.subr.mxu0 0.0
    %497 = vmatpush1.msra.mxu0 0.0
    %498 = vmatprep.subr.mxu0 0.0
    %499 = vmatpush1.msra.mxu0 0.0
    %500 = vmatprep.subr.mxu0 0.0
    %501 = vmatpush1.msra.mxu0 0.0
    %502 = vmatprep.subr.mxu0 0.0
    %503 = vmatpush1.msra.mxu0 0.0
    %504 = vmatprep.subr.mxu0 0.0
    %505 = vmatpush1.msra.mxu0 0.0
    %506 = vmatprep.subr.mxu0 0.0
    %507 = vmatpush1.msra.mxu0 0.0
    %508 = vmatprep.subr.mxu0 0.0
    %509 = vmatpush1.msra.mxu0 0.0
    %510 = vmatprep.subr.mxu0 0.0
    %511 = vmatpush1.msra.mxu0 0.0
    %512 = vmatprep.subr.mxu0 0.0
    %513 = vmatpush1.msra.mxu0 0.0
    %514 = vmatprep.subr.mxu0 0.0
    %515 = vmatpush1.msra.mxu0 0.0
    %516 = vmatprep.subr.mxu0 0.0
    %517 = vmatpush1.msra.mxu0 0.0
    %518 = vmatprep.subr.mxu0 0.0
    %519 = vmatpush1.msra.mxu0 0.0
    %520 = vmatprep.subr.mxu0 0.0
    %521 = vmatpush1.msra.mxu0 0.0
    %522 = vmatprep.subr.mxu0 0.0
    %523 = vmatpush1.msra.mxu0 0.0
    %524 = vmatprep.subr.mxu0 0.0
    %525 = vmatpush1.msra.mxu0 0.0
    %526 = vmatprep.subr.mxu0 0.0
    %527 = vmatpush1.msra.mxu0 0.0
    %528 = vmatprep.subr.mxu0 0.0
    %529 = vmatpush1.msra.mxu0 0.0
    %530 = vmatprep.subr.mxu0 0.0
    %531 = vmatpush1.msra.mxu0 0.0
    %532 = vmatprep.mubr.f32.mxu0 0.0
    %v533 = vand.u32 %v38, 4294901760
    %534 = vmatmul.mubr.f32.gmra.mrb[0].mxu0 %v533
    %v535 = vpop.f32.mrb[0].mxu0
    %v536 = vadd.f32 %v457, %v535
    %v537 = vpop.f32.mrb[0].mxu0
    %538 = vmatprep.mubr.f32.mxu0 0.0
    %v539 = vand.u32 %v41, 4294901760
    %540 = vmatmul.mubr.f32.gmra.mrb[0].mxu0 %v539
    %v541 = vpop.f32.mrb[0].mxu0
    %v542 = vadd.f32 %v463, %v541
    %v543 = vpop.f32.mrb[0].mxu0
    %544 = vdwg.mxu0
    %s545 = scalar_lea.vmem %s0, 16
    %v546 = vld [vmem:[%s545] sm:$0xff]
    %v547 = vld [vmem:[%s545 + $0x8] sm:$0xff]
    %548 = vmatprep.subr.mxu0 0.0
    %v549 = vand.u32 %v546, 4294901760
    %550 = vmatpush1.msra.mxu0 %v549
    %551 = vmatprep.subr.mxu0 0.0
    %v552 = vand.u32 %v547, 4294901760
    %553 = vmatpush1.msra.mxu0 %v552
    %554 = vmatprep.subr.mxu0 0.0
    %555 = vmatpush1.msra.mxu0 0.0
    %556 = vmatprep.subr.mxu0 0.0
    %557 = vmatpush1.msra.mxu0 0.0
    %558 = vmatprep.subr.mxu0 0.0
    %559 = vmatpush1.msra.mxu0 0.0
    %560 = vmatprep.subr.mxu0 0.0
    %561 = vmatpush1.msra.mxu0 0.0
    %562 = vmatprep.subr.mxu0 0.0
    %563 = vmatpush1.msra.mxu0 0.0
    %564 = vmatprep.subr.mxu0 0.0
    %565 = vmatpush1.msra.mxu0 0.0
    %566 = vmatprep.subr.mxu0 0.0
    %567 = vmatpush1.msra.mxu0 0.0
    %568 = vmatprep.subr.mxu0 0.0
    %569 = vmatpush1.msra.mxu0 0.0
    %570 = vmatprep.subr.mxu0 0.0
    %571 = vmatpush1.msra.mxu0 0.0
    %572 = vmatprep.subr.mxu0 0.0
    %573 = vmatpush1.msra.mxu0 0.0
    %574 = vmatprep.subr.mxu0 0.0
    %575 = vmatpush1.msra.mxu0 0.0
    %576 = vmatprep.subr.mxu0 0.0
    %577 = vmatpush1.msra.mxu0 0.0
    %578 = vmatprep.subr.mxu0 0.0
    %579 = vmatpush1.msra.mxu0 0.0
    %580 = vmatprep.subr.mxu0 0.0
    %581 = vmatpush1.msra.mxu0 0.0
    %582 = vmatprep.subr.mxu0 0.0
    %583 = vmatpush1.msra.mxu0 0.0
    %584 = vmatprep.subr.mxu0 0.0
    %585 = vmatpush1.msra.mxu0 0.0
    %586 = vmatprep.subr.mxu0 0.0
    %587 = vmatpush1.msra.mxu0 0.0
    %588 = vmatprep.subr.mxu0 0.0
    %589 = vmatpush1.msra.mxu0 0.0
    %590 = vmatprep.subr.mxu0 0.0
    %591 = vmatpush1.msra.mxu0 0.0
    %592 = vmatprep.subr.mxu0 0.0
    %593 = vmatpush1.msra.mxu0 0.0
    %594 = vmatprep.subr.mxu0 0.0
    %595 = vmatpush1.msra.mxu0 0.0
    %596 = vmatprep.subr.mxu0 0.0
    %597 = vmatpush1.msra.mxu0 0.0
    %598 = vmatprep.subr.mxu0 0.0
    %599 = vmatpush1.msra.mxu0 0.0
    %600 = vmatprep.subr.mxu0 0.0
    %601 = vmatpush1.msra.mxu0 0.0
    %602 = vmatprep.subr.mxu0 0.0
    %603 = vmatpush1.msra.mxu0 0.0
    %604 = vmatprep.subr.mxu0 0.0
    %605 = vmatpush1.msra.mxu0 0.0
    %606 = vmatprep.subr.mxu0 0.0
    %607 = vmatpush1.msra.mxu0 0.0
    %608 = vmatprep.subr.mxu0 0.0
    %609 = vmatpush1.msra.mxu0 0.0
    %610 = vmatprep.subr.mxu0 0.0
    %611 = vmatpush1.msra.mxu0 0.0
    %612 = vmatprep.subr.mxu0 0.0
    %613 = vmatpush1.msra.mxu0 0.0
    %614 = vmatprep.mubr.f32.mxu0 0.0
    %v615 = vand.u32 %v38, 4294901760
    %v616 = vsub.f32 %v38, %v615
    %v617 = vand.u32 %v616, 4294901760
    %v618 = vsub.f32 %v616, %v617
    %v619 = vand.u32 %v618, 4294901760
    %620 = vmatmul.mubr.f32.gmra.mrb[0].mxu0 %v619
    %v621 = vpop.f32.mrb[0].mxu0
    %v622 = vadd.f32 0.0, %v621
    %v623 = vpop.f32.mrb[0].mxu0
    %624 = vmatprep.mubr.f32.mxu0 0.0
    %v625 = vand.u32 %v41, 4294901760
    %v626 = vsub.f32 %v41, %v625
    %v627 = vand.u32 %v626, 4294901760
    %v628 = vsub.f32 %v626, %v627
    %v629 = vand.u32 %v628, 4294901760
    %630 = vmatmul.mubr.f32.gmra.mrb[0].mxu0 %v629
    %v631 = vpop.f32.mrb[0].mxu0
    %v632 = vadd.f32 0.0, %v631
    %v633 = vpop.f32.mrb[0].mxu0
    %634 = vdwg.mxu0
    %635 = vmatprep.subr.mxu0 0.0
    %v636 = vand.u32 %v546, 4294901760
    %v637 = vsub.f32 %v546, %v636
    %v638 = vand.u32 %v637, 4294901760
    %v639 = vsub.f32 %v637, %v638
    %v640 = vand.u32 %v639, 4294901760
    %641 = vmatpush1.msra.mxu0 %v640
    %642 = vmatprep.subr.mxu0 0.0
    %v643 = vand.u32 %v547, 4294901760
    %v644 = vsub.f32 %v547, %v643
    %v645 = vand.u32 %v644, 4294901760
    %v646 = vsub.f32 %v644, %v645
    %v647 = vand.u32 %v646, 4294901760
    %648 = vmatpush1.msra.mxu0 %v647
    %649 = vmatprep.subr.mxu0 0.0
    %650 = vmatpush1.msra.mxu0 0.0
    %651 = vmatprep.subr.mxu0 0.0
    %652 = vmatpush1.msra.mxu0 0.0
    %653 = vmatprep.subr.mxu0 0.0
    %654 = vmatpush1.msra.mxu0 0.0
    %655 = vmatprep.subr.mxu0 0.0
    %656 = vmatpush1.msra.mxu0 0.0
    %657 = vmatprep.subr.mxu0 0.0
    %658 = vmatpush1.msra.mxu0 0.0
    %659 = vmatprep.subr.mxu0 0.0
    %660 = vmatpush1.msra.mxu0 0.0
    %661 = vmatprep.subr.mxu0 0.0
    %662 = vmatpush1.msra.mxu0 0.0
    %663 = vmatprep.subr.mxu0 0.0
    %664 = vmatpush1.msra.mxu0 0.0
    %665 = vmatprep.subr.mxu0 0.0
    %666 = vmatpush1.msra.mxu0 0.0
    %667 = vmatprep.subr.mxu0 0.0
    %668 = vmatpush1.msra.mxu0 0.0
    %669 = vmatprep.subr.mxu0 0.0
    %670 = vmatpush1.msra.mxu0 0.0
    %671 = vmatprep.subr.mxu0 0.0
    %672 = vmatpush1.msra.mxu0 0.0
    %673 = vmatprep.subr.mxu0 0.0
    %674 = vmatpush1.msra.mxu0 0.0
    %675 = vmatprep.subr.mxu0 0.0
    %676 = vmatpush1.msra.mxu0 0.0
    %677 = vmatprep.subr.mxu0 0.0
    %678 = vmatpush1.msra.mxu0 0.0
    %679 = vmatprep.subr.mxu0 0.0
    %680 = vmatpush1.msra.mxu0 0.0
    %681 = vmatprep.subr.mxu0 0.0
    %682 = vmatpush1.msra.mxu0 0.0
    %683 = vmatprep.subr.mxu0 0.0
    %684 = vmatpush1.msra.mxu0 0.0
    %685 = vmatprep.subr.mxu0 0.0
    %686 = vmatpush1.msra.mxu0 0.0
    %687 = vmatprep.subr.mxu0 0.0
    %688 = vmatpush1.msra.mxu0 0.0
    %689 = vmatprep.subr.mxu0 0.0
    %690 = vmatpush1.msra.mxu0 0.0
    %691 = vmatprep.subr.mxu0 0.0
    %692 = vmatpush1.msra.mxu0 0.0
    %693 = vmatprep.subr.mxu0 0.0
    %694 = vmatpush1.msra.mxu0 0.0
    %695 = vmatprep.subr.mxu0 0.0
    %696 = vmatpush1.msra.mxu0 0.0
    %697 = vmatprep.subr.mxu0 0.0
    %698 = vmatpush1.msra.mxu0 0.0
    %699 = vmatprep.subr.mxu0 0.0
    %700 = vmatpush1.msra.mxu0 0.0
    %701 = vmatprep.subr.mxu0 0.0
    %702 = vmatpush1.msra.mxu0 0.0
    %703 = vmatprep.subr.mxu0 0.0
    %704 = vmatpush1.msra.mxu0 0.0
    %705 = vmatprep.subr.mxu0 0.0
    %706 = vmatpush1.msra.mxu0 0.0
    %707 = vmatprep.subr.mxu0 0.0
    %708 = vmatpush1.msra.mxu0 0.0
    %709 = vmatprep.mubr.f32.mxu0 0.0
    %v710 = vand.u32 %v38, 4294901760
    %711 = vmatmul.mubr.f32.gmra.mrb[0].mxu0 %v710
    %v712 = vpop.f32.mrb[0].mxu0
    %v713 = vadd.f32 %v622, %v712
    %v714 = vpop.f32.mrb[0].mxu0
    %715 = vmatprep.mubr.f32.mxu0 0.0
    %v716 = vand.u32 %v41, 4294901760
    %717 = vmatmul.mubr.f32.gmra.mrb[0].mxu0 %v716
    %v718 = vpop.f32.mrb[0].mxu0
    %v719 = vadd.f32 %v632, %v718
    %v720 = vpop.f32.mrb[0].mxu0
    %721 = vdwg.mxu0
    %722 = vmatprep.subr.mxu0 0.0
    %v723 = vand.u32 %v546, 4294901760
    %v724 = vsub.f32 %v546, %v723
    %725 = vmatpush1.msra.mxu0 %v724
    %726 = vmatprep.subr.mxu0 0.0
    %v727 = vand.u32 %v547, 4294901760
    %v728 = vsub.f32 %v547, %v727
    %729 = vmatpush1.msra.mxu0 %v728
    %730 = vmatprep.subr.mxu0 0.0
    %731 = vmatpush1.msra.mxu0 0.0
    %732 = vmatprep.subr.mxu0 0.0
    %733 = vmatpush1.msra.mxu0 0.0
    %734 = vmatprep.subr.mxu0 0.0
    %735 = vmatpush1.msra.mxu0 0.0
    %736 = vmatprep.subr.mxu0 0.0
    %737 = vmatpush1.msra.mxu0 0.0
    %738 = vmatprep.subr.mxu0 0.0
    %739 = vmatpush1.msra.mxu0 0.0
    %740 = vmatprep.subr.mxu0 0.0
    %741 = vmatpush1.msra.mxu0 0.0
    %742 = vmatprep.subr.mxu0 0.0
    %743 = vmatpush1.msra.mxu0 0.0
    %744 = vmatprep.subr.mxu0 0.0
    %745 = vmatpush1.msra.mxu0 0.0
    %746 = vmatprep.subr.mxu0 0.0
    %747 = vmatpush1.msra.mxu0 0.0
    %748 = vmatprep.subr.mxu0 0.0
    %749 = vmatpush1.msra.mxu0 0.0
    %750 = vmatprep.subr.mxu0 0.0
    %751 = vmatpush1.msra.mxu0 0.0
    %752 = vmatprep.subr.mxu0 0.0
    %753 = vmatpush1.msra.mxu0 0.0
    %754 = vmatprep.subr.mxu0 0.0
    %755 = vmatpush1.msra.mxu0 0.0
    %756 = vmatprep.subr.mxu0 0.0
    %757 = vmatpush1.msra.mxu0 0.0
    %758 = vmatprep.subr.mxu0 0.0
    %759 = vmatpush1.msra.mxu0 0.0
    %760 = vmatprep.subr.mxu0 0.0
    %761 = vmatpush1.msra.mxu0 0.0
    %762 = vmatprep.subr.mxu0 0.0
    %763 = vmatpush1.msra.mxu0 0.0
    %764 = vmatprep.subr.mxu0 0.0
    %765 = vmatpush1.msra.mxu0 0.0
    %766 = vmatprep.subr.mxu0 0.0
    %767 = vmatpush1.msra.mxu0 0.0
    %768 = vmatprep.subr.mxu0 0.0
    %769 = vmatpush1.msra.mxu0 0.0
    %770 = vmatprep.subr.mxu0 0.0
    %771 = vmatpush1.msra.mxu0 0.0
    %772 = vmatprep.subr.mxu0 0.0
    %773 = vmatpush1.msra.mxu0 0.0
    %774 = vmatprep.subr.mxu0 0.0
    %775 = vmatpush1.msra.mxu0 0.0
    %776 = vmatprep.subr.mxu0 0.0
    %777 = vmatpush1.msra.mxu0 0.0
    %778 = vmatprep.subr.mxu0 0.0
    %779 = vmatpush1.msra.mxu0 0.0
    %780 = vmatprep.subr.mxu0 0.0
    %781 = vmatpush1.msra.mxu0 0.0
    %782 = vmatprep.subr.mxu0 0.0
    %783 = vmatpush1.msra.mxu0 0.0
    %784 = vmatprep.subr.mxu0 0.0
    %785 = vmatpush1.msra.mxu0 0.0
    %786 = vmatprep.subr.mxu0 0.0
    %787 = vmatpush1.msra.mxu0 0.0
    %788 = vmatprep.subr.mxu0 0.0
    %789 = vmatpush1.msra.mxu0 0.0
    %790 = vmatprep.mubr.f32.mxu0 0.0
    %v791 = vand.u32 %v38, 4294901760
    %v792 = vsub.f32 %v38, %v791
    %793 = vmatmul.mubr.f32.gmra.mrb[0].mxu0 %v792
    %v794 = vpop.f32.mrb[0].mxu0
    %v795 = vadd.f32 %v713, %v794
    %v796 = vpop.f32.mrb[0].mxu0
    %797 = vmatprep.mubr.f32.mxu0 0.0
    %v798 = vand.u32 %v41, 4294901760
    %v799 = vsub.f32 %v41, %v798
    %800 = vmatmul.mubr.f32.gmra.mrb[0].mxu0 %v799
    %v801 = vpop.f32.mrb[0].mxu0
    %v802 = vadd.f32 %v719, %v801
    %v803 = vpop.f32.mrb[0].mxu0
    %804 = vdwg.mxu0
    %805 = vmatprep.subr.mxu0 0.0
    %v806 = vand.u32 %v546, 4294901760
    %807 = vmatpush1.msra.mxu0 %v806
    %808 = vmatprep.subr.mxu0 0.0
    %v809 = vand.u32 %v547, 4294901760
    %810 = vmatpush1.msra.mxu0 %v809
    %811 = vmatprep.subr.mxu0 0.0
    %812 = vmatpush1.msra.mxu0 0.0
    %813 = vmatprep.subr.mxu0 0.0
    %814 = vmatpush1.msra.mxu0 0.0
    %815 = vmatprep.subr.mxu0 0.0
    %816 = vmatpush1.msra.mxu0 0.0
    %817 = vmatprep.subr.mxu0 0.0
    %818 = vmatpush1.msra.mxu0 0.0
    %819 = vmatprep.subr.mxu0 0.0
    %820 = vmatpush1.msra.mxu0 0.0
    %821 = vmatprep.subr.mxu0 0.0
    %822 = vmatpush1.msra.mxu0 0.0
    %823 = vmatprep.subr.mxu0 0.0
    %824 = vmatpush1.msra.mxu0 0.0
    %825 = vmatprep.subr.mxu0 0.0
    %826 = vmatpush1.msra.mxu0 0.0
    %827 = vmatprep.subr.mxu0 0.0
    %828 = vmatpush1.msra.mxu0 0.0
    %829 = vmatprep.subr.mxu0 0.0
    %830 = vmatpush1.msra.mxu0 0.0
    %831 = vmatprep.subr.mxu0 0.0
    %832 = vmatpush1.msra.mxu0 0.0
    %833 = vmatprep.subr.mxu0 0.0
    %834 = vmatpush1.msra.mxu0 0.0
    %835 = vmatprep.subr.mxu0 0.0
    %836 = vmatpush1.msra.mxu0 0.0
    %837 = vmatprep.subr.mxu0 0.0
    %838 = vmatpush1.msra.mxu0 0.0
    %839 = vmatprep.subr.mxu0 0.0
    %840 = vmatpush1.msra.mxu0 0.0
    %841 = vmatprep.subr.mxu0 0.0
    %842 = vmatpush1.msra.mxu0 0.0
    %843 = vmatprep.subr.mxu0 0.0
    %844 = vmatpush1.msra.mxu0 0.0
    %845 = vmatprep.subr.mxu0 0.0
    %846 = vmatpush1.msra.mxu0 0.0
    %847 = vmatprep.subr.mxu0 0.0
    %848 = vmatpush1.msra.mxu0 0.0
    %849 = vmatprep.subr.mxu0 0.0
    %850 = vmatpush1.msra.mxu0 0.0
    %851 = vmatprep.subr.mxu0 0.0
    %852 = vmatpush1.msra.mxu0 0.0
    %853 = vmatprep.subr.mxu0 0.0
    %854 = vmatpush1.msra.mxu0 0.0
    %855 = vmatprep.subr.mxu0 0.0
    %856 = vmatpush1.msra.mxu0 0.0
    %857 = vmatprep.subr.mxu0 0.0
    %858 = vmatpush1.msra.mxu0 0.0
    %859 = vmatprep.subr.mxu0 0.0
    %860 = vmatpush1.msra.mxu0 0.0
    %861 = vmatprep.subr.mxu0 0.0
    %862 = vmatpush1.msra.mxu0 0.0
    %863 = vmatprep.subr.mxu0 0.0
    %864 = vmatpush1.msra.mxu0 0.0
    %865 = vmatprep.subr.mxu0 0.0
    %866 = vmatpush1.msra.mxu0 0.0
    %867 = vmatprep.subr.mxu0 0.0
    %868 = vmatpush1.msra.mxu0 0.0
    %869 = vmatprep.subr.mxu0 0.0
    %870 = vmatpush1.msra.mxu0 0.0
    %871 = vmatprep.mubr.f32.mxu0 0.0
    %v872 = vand.u32 %v38, 4294901760
    %v873 = vsub.f32 %v38, %v872
    %v874 = vand.u32 %v873, 4294901760
    %875 = vmatmul.mubr.f32.gmra.mrb[0].mxu0 %v874
    %v876 = vpop.f32.mrb[0].mxu0
    %v877 = vadd.f32 %v795, %v876
    %v878 = vpop.f32.mrb[0].mxu0
    %879 = vmatprep.mubr.f32.mxu0 0.0
    %v880 = vand.u32 %v41, 4294901760
    %v881 = vsub.f32 %v41, %v880
    %v882 = vand.u32 %v881, 4294901760
    %883 = vmatmul.mubr.f32.gmra.mrb[0].mxu0 %v882
    %v884 = vpop.f32.mrb[0].mxu0
    %v885 = vadd.f32 %v802, %v884
    %v886 = vpop.f32.mrb[0].mxu0
    %887 = vdwg.mxu0
    %888 = vmatprep.subr.mxu0 0.0
    %v889 = vand.u32 %v546, 4294901760
    %v890 = vsub.f32 %v546, %v889
    %v891 = vand.u32 %v890, 4294901760
    %892 = vmatpush1.msra.mxu0 %v891
    %893 = vmatprep.subr.mxu0 0.0
    %v894 = vand.u32 %v547, 4294901760
    %v895 = vsub.f32 %v547, %v894
    %v896 = vand.u32 %v895, 4294901760
    %897 = vmatpush1.msra.mxu0 %v896
    %898 = vmatprep.subr.mxu0 0.0
    %899 = vmatpush1.msra.mxu0 0.0
    %900 = vmatprep.subr.mxu0 0.0
    %901 = vmatpush1.msra.mxu0 0.0
    %902 = vmatprep.subr.mxu0 0.0
    %903 = vmatpush1.msra.mxu0 0.0
    %904 = vmatprep.subr.mxu0 0.0
    %905 = vmatpush1.msra.mxu0 0.0
    %906 = vmatprep.subr.mxu0 0.0
    %907 = vmatpush1.msra.mxu0 0.0
    %908 = vmatprep.subr.mxu0 0.0
    %909 = vmatpush1.msra.mxu0 0.0
    %910 = vmatprep.subr.mxu0 0.0
    %911 = vmatpush1.msra.mxu0 0.0
    %912 = vmatprep.subr.mxu0 0.0
    %913 = vmatpush1.msra.mxu0 0.0
    %914 = vmatprep.subr.mxu0 0.0
    %915 = vmatpush1.msra.mxu0 0.0
    %916 = vmatprep.subr.mxu0 0.0
    %917 = vmatpush1.msra.mxu0 0.0
    %918 = vmatprep.subr.mxu0 0.0
    %919 = vmatpush1.msra.mxu0 0.0
    %920 = vmatprep.subr.mxu0 0.0
    %921 = vmatpush1.msra.mxu0 0.0
    %922 = vmatprep.subr.mxu0 0.0
    %923 = vmatpush1.msra.mxu0 0.0
    %924 = vmatprep.subr.mxu0 0.0
    %925 = vmatpush1.msra.mxu0 0.0
    %926 = vmatprep.subr.mxu0 0.0
    %927 = vmatpush1.msra.mxu0 0.0
    %928 = vmatprep.subr.mxu0 0.0
    %929 = vmatpush1.msra.mxu0 0.0
    %930 = vmatprep.subr.mxu0 0.0
    %931 = vmatpush1.msra.mxu0 0.0
    %932 = vmatprep.subr.mxu0 0.0
    %933 = vmatpush1.msra.mxu0 0.0
    %934 = vmatprep.subr.mxu0 0.0
    %935 = vmatpush1.msra.mxu0 0.0
    %936 = vmatprep.subr.mxu0 0.0
    %937 = vmatpush1.msra.mxu0 0.0
    %938 = vmatprep.subr.mxu0 0.0
    %939 = vmatpush1.msra.mxu0 0.0
    %940 = vmatprep.subr.mxu0 0.0
    %941 = vmatpush1.msra.mxu0 0.0
    %942 = vmatprep.subr.mxu0 0.0
    %943 = vmatpush1.msra.mxu0 0.0
    %944 = vmatprep.subr.mxu0 0.0
    %945 = vmatpush1.msra.mxu0 0.0
    %946 = vmatprep.subr.mxu0 0.0
    %947 = vmatpush1.msra.mxu0 0.0
    %948 = vmatprep.subr.mxu0 0.0
    %949 = vmatpush1.msra.mxu0 0.0
    %950 = vmatprep.subr.mxu0 0.0
    %951 = vmatpush1.msra.mxu0 0.0
    %952 = vmatprep.subr.mxu0 0.0
    %953 = vmatpush1.msra.mxu0 0.0
    %954 = vmatprep.subr.mxu0 0.0
    %955 = vmatpush1.msra.mxu0 0.0
    %956 = vmatprep.subr.mxu0 0.0
    %957 = vmatpush1.msra.mxu0 0.0
    %958 = vmatprep.mubr.f32.mxu0 0.0
    %v959 = vand.u32 %v38, 4294901760
    %960 = vmatmul.mubr.f32.gmra.mrb[0].mxu0 %v959
    %v961 = vpop.f32.mrb[0].mxu0
    %v962 = vadd.f32 %v877, %v961
    %v963 = vpop.f32.mrb[0].mxu0
    %964 = vmatprep.mubr.f32.mxu0 0.0
    %v965 = vand.u32 %v41, 4294901760
    %966 = vmatmul.mubr.f32.gmra.mrb[0].mxu0 %v965
    %v967 = vpop.f32.mrb[0].mxu0
    %v968 = vadd.f32 %v885, %v967
    %v969 = vpop.f32.mrb[0].mxu0
    %970 = vdwg.mxu0
    %971 = vmatprep.subr.mxu0 0.0
    %v972 = vand.u32 %v546, 4294901760
    %973 = vmatpush1.msra.mxu0 %v972
    %974 = vmatprep.subr.mxu0 0.0
    %v975 = vand.u32 %v547, 4294901760
    %976 = vmatpush1.msra.mxu0 %v975
    %977 = vmatprep.subr.mxu0 0.0
    %978 = vmatpush1.msra.mxu0 0.0
    %979 = vmatprep.subr.mxu0 0.0
    %980 = vmatpush1.msra.mxu0 0.0
    %981 = vmatprep.subr.mxu0 0.0
    %982 = vmatpush1.msra.mxu0 0.0
    %983 = vmatprep.subr.mxu0 0.0
    %984 = vmatpush1.msra.mxu0 0.0
    %985 = vmatprep.subr.mxu0 0.0
    %986 = vmatpush1.msra.mxu0 0.0
    %987 = vmatprep.subr.mxu0 0.0
    %988 = vmatpush1.msra.mxu0 0.0
    %989 = vmatprep.subr.mxu0 0.0
    %990 = vmatpush1.msra.mxu0 0.0
    %991 = vmatprep.subr.mxu0 0.0
    %992 = vmatpush1.msra.mxu0 0.0
    %993 = vmatprep.subr.mxu0 0.0
    %994 = vmatpush1.msra.mxu0 0.0
    %995 = vmatprep.subr.mxu0 0.0
    %996 = vmatpush1.msra.mxu0 0.0
    %997 = vmatprep.subr.mxu0 0.0
    %998 = vmatpush1.msra.mxu0 0.0
    %999 = vmatprep.subr.mxu0 0.0
    %1000 = vmatpush1.msra.mxu0 0.0
    %1001 = vmatprep.subr.mxu0 0.0
    %1002 = vmatpush1.msra.mxu0 0.0
    %1003 = vmatprep.subr.mxu0 0.0
    %1004 = vmatpush1.msra.mxu0 0.0
    %1005 = vmatprep.subr.mxu0 0.0
    %1006 = vmatpush1.msra.mxu0 0.0
    %1007 = vmatprep.subr.mxu0 0.0
    %1008 = vmatpush1.msra.mxu0 0.0
    %1009 = vmatprep.subr.mxu0 0.0
    %1010 = vmatpush1.msra.mxu0 0.0
    %1011 = vmatprep.subr.mxu0 0.0
    %1012 = vmatpush1.msra.mxu0 0.0
    %1013 = vmatprep.subr.mxu0 0.0
    %1014 = vmatpush1.msra.mxu0 0.0
    %1015 = vmatprep.subr.mxu0 0.0
    %1016 = vmatpush1.msra.mxu0 0.0
    %1017 = vmatprep.subr.mxu0 0.0
    %1018 = vmatpush1.msra.mxu0 0.0
    %1019 = vmatprep.subr.mxu0 0.0
    %1020 = vmatpush1.msra.mxu0 0.0
    %1021 = vmatprep.subr.mxu0 0.0
    %1022 = vmatpush1.msra.mxu0 0.0
    %1023 = vmatprep.subr.mxu0 0.0
    %1024 = vmatpush1.msra.mxu0 0.0
    %1025 = vmatprep.subr.mxu0 0.0
    %1026 = vmatpush1.msra.mxu0 0.0
    %1027 = vmatprep.subr.mxu0 0.0
    %1028 = vmatpush1.msra.mxu0 0.0
    %1029 = vmatprep.subr.mxu0 0.0
    %1030 = vmatpush1.msra.mxu0 0.0
    %1031 = vmatprep.subr.mxu0 0.0
    %1032 = vmatpush1.msra.mxu0 0.0
    %1033 = vmatprep.subr.mxu0 0.0
    %1034 = vmatpush1.msra.mxu0 0.0
    %1035 = vmatprep.subr.mxu0 0.0
    %1036 = vmatpush1.msra.mxu0 0.0
    %1037 = vmatprep.mubr.f32.mxu0 0.0
    %v1038 = vand.u32 %v38, 4294901760
    %1039 = vmatmul.mubr.f32.gmra.mrb[0].mxu0 %v1038
    %v1040 = vpop.f32.mrb[0].mxu0
    %v1041 = vadd.f32 %v962, %v1040
    %v1042 = vpop.f32.mrb[0].mxu0
    %1043 = vmatprep.mubr.f32.mxu0 0.0
    %v1044 = vand.u32 %v41, 4294901760
    %1045 = vmatmul.mubr.f32.gmra.mrb[0].mxu0 %v1044
    %v1046 = vpop.f32.mrb[0].mxu0
    %v1047 = vadd.f32 %v968, %v1046
    %v1048 = vpop.f32.mrb[0].mxu0
    %1049 = vdwg.mxu0
    %s1050 = scalar_lea.vmem %s0, 32
    %v1051 = vld [vmem:[%s1050] sm:$0xff]
    %v1052 = vld [vmem:[%s1050 + $0x8] sm:$0xff]
    %1053 = vmatprep.subr.mxu0 0.0
    %v1054 = vand.u32 %v1051, 4294901760
    %1055 = vmatpush1.msra.mxu0 %v1054
    %1056 = vmatprep.subr.mxu0 0.0
    %v1057 = vand.u32 %v1052, 4294901760
    %1058 = vmatpush1.msra.mxu0 %v1057
    %1059 = vmatprep.subr.mxu0 0.0
    %1060 = vmatpush1.msra.mxu0 0.0
    %1061 = vmatprep.subr.mxu0 0.0
    %1062 = vmatpush1.msra.mxu0 0.0
    %1063 = vmatprep.subr.mxu0 0.0
    %1064 = vmatpush1.msra.mxu0 0.0
    %1065 = vmatprep.subr.mxu0 0.0
    %1066 = vmatpush1.msra.mxu0 0.0
    %1067 = vmatprep.subr.mxu0 0.0
    %1068 = vmatpush1.msra.mxu0 0.0
    %1069 = vmatprep.subr.mxu0 0.0
    %1070 = vmatpush1.msra.mxu0 0.0
    %1071 = vmatprep.subr.mxu0 0.0
    %1072 = vmatpush1.msra.mxu0 0.0
    %1073 = vmatprep.subr.mxu0 0.0
    %1074 = vmatpush1.msra.mxu0 0.0
    %1075 = vmatprep.subr.mxu0 0.0
    %1076 = vmatpush1.msra.mxu0 0.0
    %1077 = vmatprep.subr.mxu0 0.0
    %1078 = vmatpush1.msra.mxu0 0.0
    %1079 = vmatprep.subr.mxu0 0.0
    %1080 = vmatpush1.msra.mxu0 0.0
    %1081 = vmatprep.subr.mxu0 0.0
    %1082 = vmatpush1.msra.mxu0 0.0
    %1083 = vmatprep.subr.mxu0 0.0
    %1084 = vmatpush1.msra.mxu0 0.0
    %1085 = vmatprep.subr.mxu0 0.0
    %1086 = vmatpush1.msra.mxu0 0.0
    %1087 = vmatprep.subr.mxu0 0.0
    %1088 = vmatpush1.msra.mxu0 0.0
    %1089 = vmatprep.subr.mxu0 0.0
    %1090 = vmatpush1.msra.mxu0 0.0
    %1091 = vmatprep.subr.mxu0 0.0
    %1092 = vmatpush1.msra.mxu0 0.0
    %1093 = vmatprep.subr.mxu0 0.0
    %1094 = vmatpush1.msra.mxu0 0.0
    %1095 = vmatprep.subr.mxu0 0.0
    %1096 = vmatpush1.msra.mxu0 0.0
    %1097 = vmatprep.subr.mxu0 0.0
    %1098 = vmatpush1.msra.mxu0 0.0
    %1099 = vmatprep.subr.mxu0 0.0
    %1100 = vmatpush1.msra.mxu0 0.0
    %1101 = vmatprep.subr.mxu0 0.0
    %1102 = vmatpush1.msra.mxu0 0.0
    %1103 = vmatprep.subr.mxu0 0.0
    %1104 = vmatpush1.msra.mxu0 0.0
    %1105 = vmatprep.subr.mxu0 0.0
    %1106 = vmatpush1.msra.mxu0 0.0
    %1107 = vmatprep.subr.mxu0 0.0
    %1108 = vmatpush1.msra.mxu0 0.0
    %1109 = vmatprep.subr.mxu0 0.0
    %1110 = vmatpush1.msra.mxu0 0.0
    %1111 = vmatprep.subr.mxu0 0.0
    %1112 = vmatpush1.msra.mxu0 0.0
    %1113 = vmatprep.subr.mxu0 0.0
    %1114 = vmatpush1.msra.mxu0 0.0
    %1115 = vmatprep.subr.mxu0 0.0
    %1116 = vmatpush1.msra.mxu0 0.0
    %1117 = vmatprep.subr.mxu0 0.0
    %1118 = vmatpush1.msra.mxu0 0.0
    %1119 = vmatprep.mubr.f32.mxu0 0.0
    %v1120 = vand.u32 %v38, 4294901760
    %v1121 = vsub.f32 %v38, %v1120
    %v1122 = vand.u32 %v1121, 4294901760
    %v1123 = vsub.f32 %v1121, %v1122
    %v1124 = vand.u32 %v1123, 4294901760
    %1125 = vmatmul.mubr.f32.gmra.mrb[0].mxu0 %v1124
    %v1126 = vpop.f32.mrb[0].mxu0
    %v1127 = vadd.f32 0.0, %v1126
    %v1128 = vpop.f32.mrb[0].mxu0
    %1129 = vmatprep.mubr.f32.mxu0 0.0
    %v1130 = vand.u32 %v41, 4294901760
    %v1131 = vsub.f32 %v41, %v1130
    %v1132 = vand.u32 %v1131, 4294901760
    %v1133 = vsub.f32 %v1131, %v1132
    %v1134 = vand.u32 %v1133, 4294901760
    %1135 = vmatmul.mubr.f32.gmra.mrb[0].mxu0 %v1134
    %v1136 = vpop.f32.mrb[0].mxu0
    %v1137 = vadd.f32 0.0, %v1136
    %v1138 = vpop.f32.mrb[0].mxu0
    %1139 = vdwg.mxu0
    %1140 = vmatprep.subr.mxu0 0.0
    %v1141 = vand.u32 %v1051, 4294901760
    %v1142 = vsub.f32 %v1051, %v1141
    %v1143 = vand.u32 %v1142, 4294901760
    %v1144 = vsub.f32 %v1142, %v1143
    %v1145 = vand.u32 %v1144, 4294901760
    %1146 = vmatpush1.msra.mxu0 %v1145
    %1147 = vmatprep.subr.mxu0 0.0
    %v1148 = vand.u32 %v1052, 4294901760
    %v1149 = vsub.f32 %v1052, %v1148
    %v1150 = vand.u32 %v1149, 4294901760
    %v1151 = vsub.f32 %v1149, %v1150
    %v1152 = vand.u32 %v1151, 4294901760
    %1153 = vmatpush1.msra.mxu0 %v1152
    %1154 = vmatprep.subr.mxu0 0.0
    %1155 = vmatpush1.msra.mxu0 0.0
    %1156 = vmatprep.subr.mxu0 0.0
    %1157 = vmatpush1.msra.mxu0 0.0
    %1158 = vmatprep.subr.mxu0 0.0
    %1159 = vmatpush1.msra.mxu0 0.0
    %1160 = vmatprep.subr.mxu0 0.0
    %1161 = vmatpush1.msra.mxu0 0.0
    %1162 = vmatprep.subr.mxu0 0.0
    %1163 = vmatpush1.msra.mxu0 0.0
    %1164 = vmatprep.subr.mxu0 0.0
    %1165 = vmatpush1.msra.mxu0 0.0
    %1166 = vmatprep.subr.mxu0 0.0
    %1167 = vmatpush1.msra.mxu0 0.0
    %1168 = vmatprep.subr.mxu0 0.0
    %1169 = vmatpush1.msra.mxu0 0.0
    %1170 = vmatprep.subr.mxu0 0.0
    %1171 = vmatpush1.msra.mxu0 0.0
    %1172 = vmatprep.subr.mxu0 0.0
    %1173 = vmatpush1.msra.mxu0 0.0
    %1174 = vmatprep.subr.mxu0 0.0
    %1175 = vmatpush1.msra.mxu0 0.0
    %1176 = vmatprep.subr.mxu0 0.0
    %1177 = vmatpush1.msra.mxu0 0.0
    %1178 = vmatprep.subr.mxu0 0.0
    %1179 = vmatpush1.msra.mxu0 0.0
    %1180 = vmatprep.subr.mxu0 0.0
    %1181 = vmatpush1.msra.mxu0 0.0
    %1182 = vmatprep.subr.mxu0 0.0
    %1183 = vmatpush1.msra.mxu0 0.0
    %1184 = vmatprep.subr.mxu0 0.0
    %1185 = vmatpush1.msra.mxu0 0.0
    %1186 = vmatprep.subr.mxu0 0.0
    %1187 = vmatpush1.msra.mxu0 0.0
    %1188 = vmatprep.subr.mxu0 0.0
    %1189 = vmatpush1.msra.mxu0 0.0
    %1190 = vmatprep.subr.mxu0 0.0
    %1191 = vmatpush1.msra.mxu0 0.0
    %1192 = vmatprep.subr.mxu0 0.0
    %1193 = vmatpush1.msra.mxu0 0.0
    %1194 = vmatprep.subr.mxu0 0.0
    %1195 = vmatpush1.msra.mxu0 0.0
    %1196 = vmatprep.subr.mxu0 0.0
    %1197 = vmatpush1.msra.mxu0 0.0
    %1198 = vmatprep.subr.mxu0 0.0
    %1199 = vmatpush1.msra.mxu0 0.0
    %1200 = vmatprep.subr.mxu0 0.0
    %1201 = vmatpush1.msra.mxu0 0.0
    %1202 = vmatprep.subr.mxu0 0.0
    %1203 = vmatpush1.msra.mxu0 0.0
    %1204 = vmatprep.subr.mxu0 0.0
    %1205 = vmatpush1.msra.mxu0 0.0
    %1206 = vmatprep.subr.mxu0 0.0
    %1207 = vmatpush1.msra.mxu0 0.0
    %1208 = vmatprep.subr.mxu0 0.0
    %1209 = vmatpush1.msra.mxu0 0.0
    %1210 = vmatprep.subr.mxu0 0.0
    %1211 = vmatpush1.msra.mxu0 0.0
    %1212 = vmatprep.subr.mxu0 0.0
    %1213 = vmatpush1.msra.mxu0 0.0
    %1214 = vmatprep.mubr.f32.mxu0 0.0
    %v1215 = vand.u32 %v38, 4294901760
    %1216 = vmatmul.mubr.f32.gmra.mrb[0].mxu0 %v1215
    %v1217 = vpop.f32.mrb[0].mxu0
    %v1218 = vadd.f32 %v1127, %v1217
    %v1219 = vpop.f32.mrb[0].mxu0
    %1220 = vmatprep.mubr.f32.mxu0 0.0
    %v1221 = vand.u32 %v41, 4294901760
    %1222 = vmatmul.mubr.f32.gmra.mrb[0].mxu0 %v1221
    %v1223 = vpop.f32.mrb[0].mxu0
    %v1224 = vadd.f32 %v1137, %v1223
    %v1225 = vpop.f32.mrb[0].mxu0
    %1226 = vdwg.mxu0
    %1227 = vmatprep.subr.mxu0 0.0
    %v1228 = vand.u32 %v1051, 4294901760
    %v1229 = vsub.f32 %v1051, %v1228
    %1230 = vmatpush1.msra.mxu0 %v1229
    %1231 = vmatprep.subr.mxu0 0.0
    %v1232 = vand.u32 %v1052, 4294901760
    %v1233 = vsub.f32 %v1052, %v1232
    %1234 = vmatpush1.msra.mxu0 %v1233
    %1235 = vmatprep.subr.mxu0 0.0
    %1236 = vmatpush1.msra.mxu0 0.0
    %1237 = vmatprep.subr.mxu0 0.0
    %1238 = vmatpush1.msra.mxu0 0.0
    %1239 = vmatprep.subr.mxu0 0.0
    %1240 = vmatpush1.msra.mxu0 0.0
    %1241 = vmatprep.subr.mxu0 0.0
    %1242 = vmatpush1.msra.mxu0 0.0
    %1243 = vmatprep.subr.mxu0 0.0
    %1244 = vmatpush1.msra.mxu0 0.0
    %1245 = vmatprep.subr.mxu0 0.0
    %1246 = vmatpush1.msra.mxu0 0.0
    %1247 = vmatprep.subr.mxu0 0.0
    %1248 = vmatpush1.msra.mxu0 0.0
    %1249 = vmatprep.subr.mxu0 0.0
    %1250 = vmatpush1.msra.mxu0 0.0
    %1251 = vmatprep.subr.mxu0 0.0
    %1252 = vmatpush1.msra.mxu0 0.0
    %1253 = vmatprep.subr.mxu0 0.0
    %1254 = vmatpush1.msra.mxu0 0.0
    %1255 = vmatprep.subr.mxu0 0.0
    %1256 = vmatpush1.msra.mxu0 0.0
    %1257 = vmatprep.subr.mxu0 0.0
    %1258 = vmatpush1.msra.mxu0 0.0
    %1259 = vmatprep.subr.mxu0 0.0
    %1260 = vmatpush1.msra.mxu0 0.0
    %1261 = vmatprep.subr.mxu0 0.0
    %1262 = vmatpush1.msra.mxu0 0.0
    %1263 = vmatprep.subr.mxu0 0.0
    %1264 = vmatpush1.msra.mxu0 0.0
    %1265 = vmatprep.subr.mxu0 0.0
    %1266 = vmatpush1.msra.mxu0 0.0
    %1267 = vmatprep.subr.mxu0 0.0
    %1268 = vmatpush1.msra.mxu0 0.0
    %1269 = vmatprep.subr.mxu0 0.0
    %1270 = vmatpush1.msra.mxu0 0.0
    %1271 = vmatprep.subr.mxu0 0.0
    %1272 = vmatpush1.msra.mxu0 0.0
    %1273 = vmatprep.subr.mxu0 0.0
    %1274 = vmatpush1.msra.mxu0 0.0
    %1275 = vmatprep.subr.mxu0 0.0
    %1276 = vmatpush1.msra.mxu0 0.0
    %1277 = vmatprep.subr.mxu0 0.0
    %1278 = vmatpush1.msra.mxu0 0.0
    %1279 = vmatprep.subr.mxu0 0.0
    %1280 = vmatpush1.msra.mxu0 0.0
    %1281 = vmatprep.subr.mxu0 0.0
    %1282 = vmatpush1.msra.mxu0 0.0
    %1283 = vmatprep.subr.mxu0 0.0
    %1284 = vmatpush1.msra.mxu0 0.0
    %1285 = vmatprep.subr.mxu0 0.0
    %1286 = vmatpush1.msra.mxu0 0.0
    %1287 = vmatprep.subr.mxu0 0.0
    %1288 = vmatpush1.msra.mxu0 0.0
    %1289 = vmatprep.subr.mxu0 0.0
    %1290 = vmatpush1.msra.mxu0 0.0
    %1291 = vmatprep.subr.mxu0 0.0
    %1292 = vmatpush1.msra.mxu0 0.0
    %1293 = vmatprep.subr.mxu0 0.0
    %1294 = vmatpush1.msra.mxu0 0.0
    %1295 = vmatprep.mubr.f32.mxu0 0.0
    %v1296 = vand.u32 %v38, 4294901760
    %v1297 = vsub.f32 %v38, %v1296
    %1298 = vmatmul.mubr.f32.gmra.mrb[0].mxu0 %v1297
    %v1299 = vpop.f32.mrb[0].mxu0
    %v1300 = vadd.f32 %v1218, %v1299
    %v1301 = vpop.f32.mrb[0].mxu0
    %1302 = vmatprep.mubr.f32.mxu0 0.0
    %v1303 = vand.u32 %v41, 4294901760
    %v1304 = vsub.f32 %v41, %v1303
    %1305 = vmatmul.mubr.f32.gmra.mrb[0].mxu0 %v1304
    %v1306 = vpop.f32.mrb[0].mxu0
    %v1307 = vadd.f32 %v1224, %v1306
    %v1308 = vpop.f32.mrb[0].mxu0
    %1309 = vdwg.mxu0
    %1310 = vmatprep.subr.mxu0 0.0
    %v1311 = vand.u32 %v1051, 4294901760
    %1312 = vmatpush1.msra.mxu0 %v1311
    %1313 = vmatprep.subr.mxu0 0.0
    %v1314 = vand.u32 %v1052, 4294901760
    %1315 = vmatpush1.msra.mxu0 %v1314
    %1316 = vmatprep.subr.mxu0 0.0
    %1317 = vmatpush1.msra.mxu0 0.0
    %1318 = vmatprep.subr.mxu0 0.0
    %1319 = vmatpush1.msra.mxu0 0.0
    %1320 = vmatprep.subr.mxu0 0.0
    %1321 = vmatpush1.msra.mxu0 0.0
    %1322 = vmatprep.subr.mxu0 0.0
    %1323 = vmatpush1.msra.mxu0 0.0
    %1324 = vmatprep.subr.mxu0 0.0
    %1325 = vmatpush1.msra.mxu0 0.0
    %1326 = vmatprep.subr.mxu0 0.0
    %1327 = vmatpush1.msra.mxu0 0.0
    %1328 = vmatprep.subr.mxu0 0.0
    %1329 = vmatpush1.msra.mxu0 0.0
    %1330 = vmatprep.subr.mxu0 0.0
    %1331 = vmatpush1.msra.mxu0 0.0
    %1332 = vmatprep.subr.mxu0 0.0
    %1333 = vmatpush1.msra.mxu0 0.0
    %1334 = vmatprep.subr.mxu0 0.0
    %1335 = vmatpush1.msra.mxu0 0.0
    %1336 = vmatprep.subr.mxu0 0.0
    %1337 = vmatpush1.msra.mxu0 0.0
    %1338 = vmatprep.subr.mxu0 0.0
    %1339 = vmatpush1.msra.mxu0 0.0
    %1340 = vmatprep.subr.mxu0 0.0
    %1341 = vmatpush1.msra.mxu0 0.0
    %1342 = vmatprep.subr.mxu0 0.0
    %1343 = vmatpush1.msra.mxu0 0.0
    %1344 = vmatprep.subr.mxu0 0.0
    %1345 = vmatpush1.msra.mxu0 0.0
    %1346 = vmatprep.subr.mxu0 0.0
    %1347 = vmatpush1.msra.mxu0 0.0
    %1348 = vmatprep.subr.mxu0 0.0
    %1349 = vmatpush1.msra.mxu0 0.0
    %1350 = vmatprep.subr.mxu0 0.0
    %1351 = vmatpush1.msra.mxu0 0.0
    %1352 = vmatprep.subr.mxu0 0.0
    %1353 = vmatpush1.msra.mxu0 0.0
    %1354 = vmatprep.subr.mxu0 0.0
    %1355 = vmatpush1.msra.mxu0 0.0
    %1356 = vmatprep.subr.mxu0 0.0
    %1357 = vmatpush1.msra.mxu0 0.0
    %1358 = vmatprep.subr.mxu0 0.0
    %1359 = vmatpush1.msra.mxu0 0.0
    %1360 = vmatprep.subr.mxu0 0.0
    %1361 = vmatpush1.msra.mxu0 0.0
    %1362 = vmatprep.subr.mxu0 0.0
    %1363 = vmatpush1.msra.mxu0 0.0
    %1364 = vmatprep.subr.mxu0 0.0
    %1365 = vmatpush1.msra.mxu0 0.0
    %1366 = vmatprep.subr.mxu0 0.0
    %1367 = vmatpush1.msra.mxu0 0.0
    %1368 = vmatprep.subr.mxu0 0.0
    %1369 = vmatpush1.msra.mxu0 0.0
    %1370 = vmatprep.subr.mxu0 0.0
    %1371 = vmatpush1.msra.mxu0 0.0
    %1372 = vmatprep.subr.mxu0 0.0
    %1373 = vmatpush1.msra.mxu0 0.0
    %1374 = vmatprep.subr.mxu0 0.0
    %1375 = vmatpush1.msra.mxu0 0.0
    %1376 = vmatprep.mubr.f32.mxu0 0.0
    %v1377 = vand.u32 %v38, 4294901760
    %v1378 = vsub.f32 %v38, %v1377
    %v1379 = vand.u32 %v1378, 4294901760
    %1380 = vmatmul.mubr.f32.gmra.mrb[0].mxu0 %v1379
    %v1381 = vpop.f32.mrb[0].mxu0
    %v1382 = vadd.f32 %v1300, %v1381
    %v1383 = vpop.f32.mrb[0].mxu0
    %1384 = vmatprep.mubr.f32.mxu0 0.0
    %v1385 = vand.u32 %v41, 4294901760
    %v1386 = vsub.f32 %v41, %v1385
    %v1387 = vand.u32 %v1386, 4294901760
    %1388 = vmatmul.mubr.f32.gmra.mrb[0].mxu0 %v1387
    %v1389 = vpop.f32.mrb[0].mxu0
    %v1390 = vadd.f32 %v1307, %v1389
    %v1391 = vpop.f32.mrb[0].mxu0
    %1392 = vdwg.mxu0
    %1393 = vmatprep.subr.mxu0 0.0
    %v1394 = vand.u32 %v1051, 4294901760
    %v1395 = vsub.f32 %v1051, %v1394
    %v1396 = vand.u32 %v1395, 4294901760
    %1397 = vmatpush1.msra.mxu0 %v1396
    %1398 = vmatprep.subr.mxu0 0.0
    %v1399 = vand.u32 %v1052, 4294901760
    %v1400 = vsub.f32 %v1052, %v1399
    %v1401 = vand.u32 %v1400, 4294901760
    %1402 = vmatpush1.msra.mxu0 %v1401
    %1403 = vmatprep.subr.mxu0 0.0
    %1404 = vmatpush1.msra.mxu0 0.0
    %1405 = vmatprep.subr.mxu0 0.0
    %1406 = vmatpush1.msra.mxu0 0.0
    %1407 = vmatprep.subr.mxu0 0.0
    %1408 = vmatpush1.msra.mxu0 0.0
    %1409 = vmatprep.subr.mxu0 0.0
    %1410 = vmatpush1.msra.mxu0 0.0
    %1411 = vmatprep.subr.mxu0 0.0
    %1412 = vmatpush1.msra.mxu0 0.0
    %1413 = vmatprep.subr.mxu0 0.0
    %1414 = vmatpush1.msra.mxu0 0.0
    %1415 = vmatprep.subr.mxu0 0.0
    %1416 = vmatpush1.msra.mxu0 0.0
    %1417 = vmatprep.subr.mxu0 0.0
    %1418 = vmatpush1.msra.mxu0 0.0
    %1419 = vmatprep.subr.mxu0 0.0
    %1420 = vmatpush1.msra.mxu0 0.0
    %1421 = vmatprep.subr.mxu0 0.0
    %1422 = vmatpush1.msra.mxu0 0.0
    %1423 = vmatprep.subr.mxu0 0.0
    %1424 = vmatpush1.msra.mxu0 0.0
    %1425 = vmatprep.subr.mxu0 0.0
    %1426 = vmatpush1.msra.mxu0 0.0
    %1427 = vmatprep.subr.mxu0 0.0
    %1428 = vmatpush1.msra.mxu0 0.0
    %1429 = vmatprep.subr.mxu0 0.0
    %1430 = vmatpush1.msra.mxu0 0.0
    %1431 = vmatprep.subr.mxu0 0.0
    %1432 = vmatpush1.msra.mxu0 0.0
    %1433 = vmatprep.subr.mxu0 0.0
    %1434 = vmatpush1.msra.mxu0 0.0
    %1435 = vmatprep.subr.mxu0 0.0
    %1436 = vmatpush1.msra.mxu0 0.0
    %1437 = vmatprep.subr.mxu0 0.0
    %1438 = vmatpush1.msra.mxu0 0.0
    %1439 = vmatprep.subr.mxu0 0.0
    %1440 = vmatpush1.msra.mxu0 0.0
    %1441 = vmatprep.subr.mxu0 0.0
    %1442 = vmatpush1.msra.mxu0 0.0
    %1443 = vmatprep.subr.mxu0 0.0
    %1444 = vmatpush1.msra.mxu0 0.0
    %1445 = vmatprep.subr.mxu0 0.0
    %1446 = vmatpush1.msra.mxu0 0.0
    %1447 = vmatprep.subr.mxu0 0.0
    %1448 = vmatpush1.msra.mxu0 0.0
    %1449 = vmatprep.subr.mxu0 0.0
    %1450 = vmatpush1.msra.mxu0 0.0
    %1451 = vmatprep.subr.mxu0 0.0
    %1452 = vmatpush1.msra.mxu0 0.0
    %1453 = vmatprep.subr.mxu0 0.0
    %1454 = vmatpush1.msra.mxu0 0.0
    %1455 = vmatprep.subr.mxu0 0.0
    %1456 = vmatpush1.msra.mxu0 0.0
    %1457 = vmatprep.subr.mxu0 0.0
    %1458 = vmatpush1.msra.mxu0 0.0
    %1459 = vmatprep.subr.mxu0 0.0
    %1460 = vmatpush1.msra.mxu0 0.0
    %1461 = vmatprep.subr.mxu0 0.0
    %1462 = vmatpush1.msra.mxu0 0.0
    %1463 = vmatprep.mubr.f32.mxu0 0.0
    %v1464 = vand.u32 %v38, 4294901760
    %1465 = vmatmul.mubr.f32.gmra.mrb[0].mxu0 %v1464
    %v1466 = vpop.f32.mrb[0].mxu0
    %v1467 = vadd.f32 %v1382, %v1466
    %v1468 = vpop.f32.mrb[0].mxu0
    %1469 = vmatprep.mubr.f32.mxu0 0.0
    %v1470 = vand.u32 %v41, 4294901760
    %1471 = vmatmul.mubr.f32.gmra.mrb[0].mxu0 %v1470
    %v1472 = vpop.f32.mrb[0].mxu0
    %v1473 = vadd.f32 %v1390, %v1472
    %v1474 = vpop.f32.mrb[0].mxu0
    %1475 = vdwg.mxu0
    %1476 = vmatprep.subr.mxu0 0.0
    %v1477 = vand.u32 %v1051, 4294901760
    %1478 = vmatpush1.msra.mxu0 %v1477
    %1479 = vmatprep.subr.mxu0 0.0
    %v1480 = vand.u32 %v1052, 4294901760
    %1481 = vmatpush1.msra.mxu0 %v1480
    %1482 = vmatprep.subr.mxu0 0.0
    %1483 = vmatpush1.msra.mxu0 0.0
    %1484 = vmatprep.subr.mxu0 0.0
    %1485 = vmatpush1.msra.mxu0 0.0
    %1486 = vmatprep.subr.mxu0 0.0
    %1487 = vmatpush1.msra.mxu0 0.0
    %1488 = vmatprep.subr.mxu0 0.0
    %1489 = vmatpush1.msra.mxu0 0.0
    %1490 = vmatprep.subr.mxu0 0.0
    %1491 = vmatpush1.msra.mxu0 0.0
    %1492 = vmatprep.subr.mxu0 0.0
    %1493 = vmatpush1.msra.mxu0 0.0
    %1494 = vmatprep.subr.mxu0 0.0
    %1495 = vmatpush1.msra.mxu0 0.0
    %1496 = vmatprep.subr.mxu0 0.0
    %1497 = vmatpush1.msra.mxu0 0.0
    %1498 = vmatprep.subr.mxu0 0.0
    %1499 = vmatpush1.msra.mxu0 0.0
    %1500 = vmatprep.subr.mxu0 0.0
    %1501 = vmatpush1.msra.mxu0 0.0
    %1502 = vmatprep.subr.mxu0 0.0
    %1503 = vmatpush1.msra.mxu0 0.0
    %1504 = vmatprep.subr.mxu0 0.0
    %1505 = vmatpush1.msra.mxu0 0.0
    %1506 = vmatprep.subr.mxu0 0.0
    %1507 = vmatpush1.msra.mxu0 0.0
    %1508 = vmatprep.subr.mxu0 0.0
    %1509 = vmatpush1.msra.mxu0 0.0
    %1510 = vmatprep.subr.mxu0 0.0
    %1511 = vmatpush1.msra.mxu0 0.0
    %1512 = vmatprep.subr.mxu0 0.0
    %1513 = vmatpush1.msra.mxu0 0.0
    %1514 = vmatprep.subr.mxu0 0.0
    %1515 = vmatpush1.msra.mxu0 0.0
    %1516 = vmatprep.subr.mxu0 0.0
    %1517 = vmatpush1.msra.mxu0 0.0
    %1518 = vmatprep.subr.mxu0 0.0
    %1519 = vmatpush1.msra.mxu0 0.0
    %1520 = vmatprep.subr.mxu0 0.0
    %1521 = vmatpush1.msra.mxu0 0.0
    %1522 = vmatprep.subr.mxu0 0.0
    %1523 = vmatpush1.msra.mxu0 0.0
    %1524 = vmatprep.subr.mxu0 0.0
    %1525 = vmatpush1.msra.mxu0 0.0
    %1526 = vmatprep.subr.mxu0 0.0
    %1527 = vmatpush1.msra.mxu0 0.0
    %1528 = vmatprep.subr.mxu0 0.0
    %1529 = vmatpush1.msra.mxu0 0.0
    %1530 = vmatprep.subr.mxu0 0.0
    %1531 = vmatpush1.msra.mxu0 0.0
    %1532 = vmatprep.subr.mxu0 0.0
    %1533 = vmatpush1.msra.mxu0 0.0
    %1534 = vmatprep.subr.mxu0 0.0
    %1535 = vmatpush1.msra.mxu0 0.0
    %1536 = vmatprep.subr.mxu0 0.0
    %1537 = vmatpush1.msra.mxu0 0.0
    %1538 = vmatprep.subr.mxu0 0.0
    %1539 = vmatpush1.msra.mxu0 0.0
    %1540 = vmatprep.subr.mxu0 0.0
    %1541 = vmatpush1.msra.mxu0 0.0
    %1542 = vmatprep.mubr.f32.mxu0 0.0
    %v1543 = vand.u32 %v38, 4294901760
    %1544 = vmatmul.mubr.f32.gmra.mrb[0].mxu0 %v1543
    %v1545 = vpop.f32.mrb[0].mxu0
    %v1546 = vadd.f32 %v1467, %v1545
    %v1547 = vpop.f32.mrb[0].mxu0
    %1548 = vmatprep.mubr.f32.mxu0 0.0
    %v1549 = vand.u32 %v41, 4294901760
    %1550 = vmatmul.mubr.f32.gmra.mrb[0].mxu0 %v1549
    %v1551 = vpop.f32.mrb[0].mxu0
    %v1552 = vadd.f32 %v1473, %v1551
    %v1553 = vpop.f32.mrb[0].mxu0
    %1554 = vdwg.mxu0
    %s1555 = scalar_lea.vmem %s0, 48
    %v1556 = vld [vmem:[%s1555] sm:$0xff]
    %v1557 = vld [vmem:[%s1555 + $0x8] sm:$0xff]
    %1558 = vmatprep.subr.mxu0 0.0
    %v1559 = vand.u32 %v1556, 4294901760
    %1560 = vmatpush1.msra.mxu0 %v1559
    %1561 = vmatprep.subr.mxu0 0.0
    %v1562 = vand.u32 %v1557, 4294901760
    %1563 = vmatpush1.msra.mxu0 %v1562
    %1564 = vmatprep.subr.mxu0 0.0
    %1565 = vmatpush1.msra.mxu0 0.0
    %1566 = vmatprep.subr.mxu0 0.0
    %1567 = vmatpush1.msra.mxu0 0.0
    %1568 = vmatprep.subr.mxu0 0.0
    %1569 = vmatpush1.msra.mxu0 0.0
    %1570 = vmatprep.subr.mxu0 0.0
    %1571 = vmatpush1.msra.mxu0 0.0
    %1572 = vmatprep.subr.mxu0 0.0
    %1573 = vmatpush1.msra.mxu0 0.0
    %1574 = vmatprep.subr.mxu0 0.0
    %1575 = vmatpush1.msra.mxu0 0.0
    %1576 = vmatprep.subr.mxu0 0.0
    %1577 = vmatpush1.msra.mxu0 0.0
    %1578 = vmatprep.subr.mxu0 0.0
    %1579 = vmatpush1.msra.mxu0 0.0
    %1580 = vmatprep.subr.mxu0 0.0
    %1581 = vmatpush1.msra.mxu0 0.0
    %1582 = vmatprep.subr.mxu0 0.0
    %1583 = vmatpush1.msra.mxu0 0.0
    %1584 = vmatprep.subr.mxu0 0.0
    %1585 = vmatpush1.msra.mxu0 0.0
    %1586 = vmatprep.subr.mxu0 0.0
    %1587 = vmatpush1.msra.mxu0 0.0
    %1588 = vmatprep.subr.mxu0 0.0
    %1589 = vmatpush1.msra.mxu0 0.0
    %1590 = vmatprep.subr.mxu0 0.0
    %1591 = vmatpush1.msra.mxu0 0.0
    %1592 = vmatprep.subr.mxu0 0.0
    %1593 = vmatpush1.msra.mxu0 0.0
    %1594 = vmatprep.subr.mxu0 0.0
    %1595 = vmatpush1.msra.mxu0 0.0
    %1596 = vmatprep.subr.mxu0 0.0
    %1597 = vmatpush1.msra.mxu0 0.0
    %1598 = vmatprep.subr.mxu0 0.0
    %1599 = vmatpush1.msra.mxu0 0.0
    %1600 = vmatprep.subr.mxu0 0.0
    %1601 = vmatpush1.msra.mxu0 0.0
    %1602 = vmatprep.subr.mxu0 0.0
    %1603 = vmatpush1.msra.mxu0 0.0
    %1604 = vmatprep.subr.mxu0 0.0
    %1605 = vmatpush1.msra.mxu0 0.0
    %1606 = vmatprep.subr.mxu0 0.0
    %1607 = vmatpush1.msra.mxu0 0.0
    %1608 = vmatprep.subr.mxu0 0.0
    %1609 = vmatpush1.msra.mxu0 0.0
    %1610 = vmatprep.subr.mxu0 0.0
    %1611 = vmatpush1.msra.mxu0 0.0
    %1612 = vmatprep.subr.mxu0 0.0
    %1613 = vmatpush1.msra.mxu0 0.0
    %1614 = vmatprep.subr.mxu0 0.0
    %1615 = vmatpush1.msra.mxu0 0.0
    %1616 = vmatprep.subr.mxu0 0.0
    %1617 = vmatpush1.msra.mxu0 0.0
    %1618 = vmatprep.subr.mxu0 0.0
    %1619 = vmatpush1.msra.mxu0 0.0
    %1620 = vmatprep.subr.mxu0 0.0
    %1621 = vmatpush1.msra.mxu0 0.0
    %1622 = vmatprep.subr.mxu0 0.0
    %1623 = vmatpush1.msra.mxu0 0.0
    %1624 = vmatprep.mubr.f32.mxu0 0.0
    %v1625 = vand.u32 %v38, 4294901760
    %v1626 = vsub.f32 %v38, %v1625
    %v1627 = vand.u32 %v1626, 4294901760
    %v1628 = vsub.f32 %v1626, %v1627
    %v1629 = vand.u32 %v1628, 4294901760
    %1630 = vmatmul.mubr.f32.gmra.mrb[0].mxu0 %v1629
    %v1631 = vpop.f32.mrb[0].mxu0
    %v1632 = vadd.f32 0.0, %v1631
    %v1633 = vpop.f32.mrb[0].mxu0
    %1634 = vmatprep.mubr.f32.mxu0 0.0
    %v1635 = vand.u32 %v41, 4294901760
    %v1636 = vsub.f32 %v41, %v1635
    %v1637 = vand.u32 %v1636, 4294901760
    %v1638 = vsub.f32 %v1636, %v1637
    %v1639 = vand.u32 %v1638, 4294901760
    %1640 = vmatmul.mubr.f32.gmra.mrb[0].mxu0 %v1639
    %v1641 = vpop.f32.mrb[0].mxu0
    %v1642 = vadd.f32 0.0, %v1641
    %v1643 = vpop.f32.mrb[0].mxu0
    %1644 = vdwg.mxu0
    %1645 = vmatprep.subr.mxu0 0.0
    %v1646 = vand.u32 %v1556, 4294901760
    %v1647 = vsub.f32 %v1556, %v1646
    %v1648 = vand.u32 %v1647, 4294901760
    %v1649 = vsub.f32 %v1647, %v1648
    %v1650 = vand.u32 %v1649, 4294901760
    %1651 = vmatpush1.msra.mxu0 %v1650
    %1652 = vmatprep.subr.mxu0 0.0
    %v1653 = vand.u32 %v1557, 4294901760
    %v1654 = vsub.f32 %v1557, %v1653
    %v1655 = vand.u32 %v1654, 4294901760
    %v1656 = vsub.f32 %v1654, %v1655
    %v1657 = vand.u32 %v1656, 4294901760
    %1658 = vmatpush1.msra.mxu0 %v1657
    %1659 = vmatprep.subr.mxu0 0.0
    %1660 = vmatpush1.msra.mxu0 0.0
    %1661 = vmatprep.subr.mxu0 0.0
    %1662 = vmatpush1.msra.mxu0 0.0
    %1663 = vmatprep.subr.mxu0 0.0
    %1664 = vmatpush1.msra.mxu0 0.0
    %1665 = vmatprep.subr.mxu0 0.0
    %1666 = vmatpush1.msra.mxu0 0.0
    %1667 = vmatprep.subr.mxu0 0.0
    %1668 = vmatpush1.msra.mxu0 0.0
    %1669 = vmatprep.subr.mxu0 0.0
    %1670 = vmatpush1.msra.mxu0 0.0
    %1671 = vmatprep.subr.mxu0 0.0
    %1672 = vmatpush1.msra.mxu0 0.0
    %1673 = vmatprep.subr.mxu0 0.0
    %1674 = vmatpush1.msra.mxu0 0.0
    %1675 = vmatprep.subr.mxu0 0.0
    %1676 = vmatpush1.msra.mxu0 0.0
    %1677 = vmatprep.subr.mxu0 0.0
    %1678 = vmatpush1.msra.mxu0 0.0
    %1679 = vmatprep.subr.mxu0 0.0
    %1680 = vmatpush1.msra.mxu0 0.0
    %1681 = vmatprep.subr.mxu0 0.0
    %1682 = vmatpush1.msra.mxu0 0.0
    %1683 = vmatprep.subr.mxu0 0.0
    %1684 = vmatpush1.msra.mxu0 0.0
    %1685 = vmatprep.subr.mxu0 0.0
    %1686 = vmatpush1.msra.mxu0 0.0
    %1687 = vmatprep.subr.mxu0 0.0
    %1688 = vmatpush1.msra.mxu0 0.0
    %1689 = vmatprep.subr.mxu0 0.0
    %1690 = vmatpush1.msra.mxu0 0.0
    %1691 = vmatprep.subr.mxu0 0.0
    %1692 = vmatpush1.msra.mxu0 0.0
    %1693 = vmatprep.subr.mxu0 0.0
    %1694 = vmatpush1.msra.mxu0 0.0
    %1695 = vmatprep.subr.mxu0 0.0
    %1696 = vmatpush1.msra.mxu0 0.0
    %1697 = vmatprep.subr.mxu0 0.0
    %1698 = vmatpush1.msra.mxu0 0.0
    %1699 = vmatprep.subr.mxu0 0.0
    %1700 = vmatpush1.msra.mxu0 0.0
    %1701 = vmatprep.subr.mxu0 0.0
    %1702 = vmatpush1.msra.mxu0 0.0
    %1703 = vmatprep.subr.mxu0 0.0
    %1704 = vmatpush1.msra.mxu0 0.0
    %1705 = vmatprep.subr.mxu0 0.0
    %1706 = vmatpush1.msra.mxu0 0.0
    %1707 = vmatprep.subr.mxu0 0.0
    %1708 = vmatpush1.msra.mxu0 0.0
    %1709 = vmatprep.subr.mxu0 0.0
    %1710 = vmatpush1.msra.mxu0 0.0
    %1711 = vmatprep.subr.mxu0 0.0
    %1712 = vmatpush1.msra.mxu0 0.0
    %1713 = vmatprep.subr.mxu0 0.0
    %1714 = vmatpush1.msra.mxu0 0.0
    %1715 = vmatprep.subr.mxu0 0.0
    %1716 = vmatpush1.msra.mxu0 0.0
    %1717 = vmatprep.subr.mxu0 0.0
    %1718 = vmatpush1.msra.mxu0 0.0
    %1719 = vmatprep.mubr.f32.mxu0 0.0
    %v1720 = vand.u32 %v38, 4294901760
    %1721 = vmatmul.mubr.f32.gmra.mrb[0].mxu0 %v1720
    %v1722 = vpop.f32.mrb[0].mxu0
    %v1723 = vadd.f32 %v1632, %v1722
    %v1724 = vpop.f32.mrb[0].mxu0
    %1725 = vmatprep.mubr.f32.mxu0 0.0
    %v1726 = vand.u32 %v41, 4294901760
    %1727 = vmatmul.mubr.f32.gmra.mrb[0].mxu0 %v1726
    %v1728 = vpop.f32.mrb[0].mxu0
    %v1729 = vadd.f32 %v1642, %v1728
    %v1730 = vpop.f32.mrb[0].mxu0
    %1731 = vdwg.mxu0
    %1732 = vmatprep.subr.mxu0 0.0
    %v1733 = vand.u32 %v1556, 4294901760
    %v1734 = vsub.f32 %v1556, %v1733
    %1735 = vmatpush1.msra.mxu0 %v1734
    %1736 = vmatprep.subr.mxu0 0.0
    %v1737 = vand.u32 %v1557, 4294901760
    %v1738 = vsub.f32 %v1557, %v1737
    %1739 = vmatpush1.msra.mxu0 %v1738
    %1740 = vmatprep.subr.mxu0 0.0
    %1741 = vmatpush1.msra.mxu0 0.0
    %1742 = vmatprep.subr.mxu0 0.0
    %1743 = vmatpush1.msra.mxu0 0.0
    %1744 = vmatprep.subr.mxu0 0.0
    %1745 = vmatpush1.msra.mxu0 0.0
    %1746 = vmatprep.subr.mxu0 0.0
    %1747 = vmatpush1.msra.mxu0 0.0
    %1748 = vmatprep.subr.mxu0 0.0
    %1749 = vmatpush1.msra.mxu0 0.0
    %1750 = vmatprep.subr.mxu0 0.0
    %1751 = vmatpush1.msra.mxu0 0.0
    %1752 = vmatprep.subr.mxu0 0.0
    %1753 = vmatpush1.msra.mxu0 0.0
    %1754 = vmatprep.subr.mxu0 0.0
    %1755 = vmatpush1.msra.mxu0 0.0
    %1756 = vmatprep.subr.mxu0 0.0
    %1757 = vmatpush1.msra.mxu0 0.0
    %1758 = vmatprep.subr.mxu0 0.0
    %1759 = vmatpush1.msra.mxu0 0.0
    %1760 = vmatprep.subr.mxu0 0.0
    %1761 = vmatpush1.msra.mxu0 0.0
    %1762 = vmatprep.subr.mxu0 0.0
    %1763 = vmatpush1.msra.mxu0 0.0
    %1764 = vmatprep.subr.mxu0 0.0
    %1765 = vmatpush1.msra.mxu0 0.0
    %1766 = vmatprep.subr.mxu0 0.0
    %1767 = vmatpush1.msra.mxu0 0.0
    %1768 = vmatprep.subr.mxu0 0.0
    %1769 = vmatpush1.msra.mxu0 0.0
    %1770 = vmatprep.subr.mxu0 0.0
    %1771 = vmatpush1.msra.mxu0 0.0
    %1772 = vmatprep.subr.mxu0 0.0
    %1773 = vmatpush1.msra.mxu0 0.0
    %1774 = vmatprep.subr.mxu0 0.0
    %1775 = vmatpush1.msra.mxu0 0.0
    %1776 = vmatprep.subr.mxu0 0.0
    %1777 = vmatpush1.msra.mxu0 0.0
    %1778 = vmatprep.subr.mxu0 0.0
    %1779 = vmatpush1.msra.mxu0 0.0
    %1780 = vmatprep.subr.mxu0 0.0
    %1781 = vmatpush1.msra.mxu0 0.0
    %1782 = vmatprep.subr.mxu0 0.0
    %1783 = vmatpush1.msra.mxu0 0.0
    %1784 = vmatprep.subr.mxu0 0.0
    %1785 = vmatpush1.msra.mxu0 0.0
    %1786 = vmatprep.subr.mxu0 0.0
    %1787 = vmatpush1.msra.mxu0 0.0
    %1788 = vmatprep.subr.mxu0 0.0
    %1789 = vmatpush1.msra.mxu0 0.0
    %1790 = vmatprep.subr.mxu0 0.0
    %1791 = vmatpush1.msra.mxu0 0.0
    %1792 = vmatprep.subr.mxu0 0.0
    %1793 = vmatpush1.msra.mxu0 0.0
    %1794 = vmatprep.subr.mxu0 0.0
    %1795 = vmatpush1.msra.mxu0 0.0
    %1796 = vmatprep.subr.mxu0 0.0
    %1797 = vmatpush1.msra.mxu0 0.0
    %1798 = vmatprep.subr.mxu0 0.0
    %1799 = vmatpush1.msra.mxu0 0.0
    %1800 = vmatprep.mubr.f32.mxu0 0.0
    %v1801 = vand.u32 %v38, 4294901760
    %v1802 = vsub.f32 %v38, %v1801
    %1803 = vmatmul.mubr.f32.gmra.mrb[0].mxu0 %v1802
    %v1804 = vpop.f32.mrb[0].mxu0
    %v1805 = vadd.f32 %v1723, %v1804
    %v1806 = vpop.f32.mrb[0].mxu0
    %1807 = vmatprep.mubr.f32.mxu0 0.0
    %v1808 = vand.u32 %v41, 4294901760
    %v1809 = vsub.f32 %v41, %v1808
    %1810 = vmatmul.mubr.f32.gmra.mrb[0].mxu0 %v1809
    %v1811 = vpop.f32.mrb[0].mxu0
    %v1812 = vadd.f32 %v1729, %v1811
    %v1813 = vpop.f32.mrb[0].mxu0
    %1814 = vdwg.mxu0
    %1815 = vmatprep.subr.mxu0 0.0
    %v1816 = vand.u32 %v1556, 4294901760
    %1817 = vmatpush1.msra.mxu0 %v1816
    %1818 = vmatprep.subr.mxu0 0.0
    %v1819 = vand.u32 %v1557, 4294901760
    %1820 = vmatpush1.msra.mxu0 %v1819
    %1821 = vmatprep.subr.mxu0 0.0
    %1822 = vmatpush1.msra.mxu0 0.0
    %1823 = vmatprep.subr.mxu0 0.0
    %1824 = vmatpush1.msra.mxu0 0.0
    %1825 = vmatprep.subr.mxu0 0.0
    %1826 = vmatpush1.msra.mxu0 0.0
    %1827 = vmatprep.subr.mxu0 0.0
    %1828 = vmatpush1.msra.mxu0 0.0
    %1829 = vmatprep.subr.mxu0 0.0
    %1830 = vmatpush1.msra.mxu0 0.0
    %1831 = vmatprep.subr.mxu0 0.0
    %1832 = vmatpush1.msra.mxu0 0.0
    %1833 = vmatprep.subr.mxu0 0.0
    %1834 = vmatpush1.msra.mxu0 0.0
    %1835 = vmatprep.subr.mxu0 0.0
    %1836 = vmatpush1.msra.mxu0 0.0
    %1837 = vmatprep.subr.mxu0 0.0
    %1838 = vmatpush1.msra.mxu0 0.0
    %1839 = vmatprep.subr.mxu0 0.0
    %1840 = vmatpush1.msra.mxu0 0.0
    %1841 = vmatprep.subr.mxu0 0.0
    %1842 = vmatpush1.msra.mxu0 0.0
    %1843 = vmatprep.subr.mxu0 0.0
    %1844 = vmatpush1.msra.mxu0 0.0
    %1845 = vmatprep.subr.mxu0 0.0
    %1846 = vmatpush1.msra.mxu0 0.0
    %1847 = vmatprep.subr.mxu0 0.0
    %1848 = vmatpush1.msra.mxu0 0.0
    %1849 = vmatprep.subr.mxu0 0.0
    %1850 = vmatpush1.msra.mxu0 0.0
    %1851 = vmatprep.subr.mxu0 0.0
    %1852 = vmatpush1.msra.mxu0 0.0
    %1853 = vmatprep.subr.mxu0 0.0
    %1854 = vmatpush1.msra.mxu0 0.0
    %1855 = vmatprep.subr.mxu0 0.0
    %1856 = vmatpush1.msra.mxu0 0.0
    %1857 = vmatprep.subr.mxu0 0.0
    %1858 = vmatpush1.msra.mxu0 0.0
    %1859 = vmatprep.subr.mxu0 0.0
    %1860 = vmatpush1.msra.mxu0 0.0
    %1861 = vmatprep.subr.mxu0 0.0
    %1862 = vmatpush1.msra.mxu0 0.0
    %1863 = vmatprep.subr.mxu0 0.0
    %1864 = vmatpush1.msra.mxu0 0.0
    %1865 = vmatprep.subr.mxu0 0.0
    %1866 = vmatpush1.msra.mxu0 0.0
    %1867 = vmatprep.subr.mxu0 0.0
    %1868 = vmatpush1.msra.mxu0 0.0
    %1869 = vmatprep.subr.mxu0 0.0
    %1870 = vmatpush1.msra.mxu0 0.0
    %1871 = vmatprep.subr.mxu0 0.0
    %1872 = vmatpush1.msra.mxu0 0.0
    %1873 = vmatprep.subr.mxu0 0.0
    %1874 = vmatpush1.msra.mxu0 0.0
    %1875 = vmatprep.subr.mxu0 0.0
    %1876 = vmatpush1.msra.mxu0 0.0
    %1877 = vmatprep.subr.mxu0 0.0
    %1878 = vmatpush1.msra.mxu0 0.0
    %1879 = vmatprep.subr.mxu0 0.0
    %1880 = vmatpush1.msra.mxu0 0.0
    %1881 = vmatprep.mubr.f32.mxu0 0.0
    %v1882 = vand.u32 %v38, 4294901760
    %v1883 = vsub.f32 %v38, %v1882
    %v1884 = vand.u32 %v1883, 4294901760
    %1885 = vmatmul.mubr.f32.gmra.mrb[0].mxu0 %v1884
    %v1886 = vpop.f32.mrb[0].mxu0
    %v1887 = vadd.f32 %v1805, %v1886
    %v1888 = vpop.f32.mrb[0].mxu0
    %1889 = vmatprep.mubr.f32.mxu0 0.0
    %v1890 = vand.u32 %v41, 4294901760
    %v1891 = vsub.f32 %v41, %v1890
    %v1892 = vand.u32 %v1891, 4294901760
    %1893 = vmatmul.mubr.f32.gmra.mrb[0].mxu0 %v1892
    %v1894 = vpop.f32.mrb[0].mxu0
    %v1895 = vadd.f32 %v1812, %v1894
    %v1896 = vpop.f32.mrb[0].mxu0
    %1897 = vdwg.mxu0
    %1898 = vmatprep.subr.mxu0 0.0
    %v1899 = vand.u32 %v1556, 4294901760
    %v1900 = vsub.f32 %v1556, %v1899
    %v1901 = vand.u32 %v1900, 4294901760
    %1902 = vmatpush1.msra.mxu0 %v1901
    %1903 = vmatprep.subr.mxu0 0.0
    %v1904 = vand.u32 %v1557, 4294901760
    %v1905 = vsub.f32 %v1557, %v1904
    %v1906 = vand.u32 %v1905, 4294901760
    %1907 = vmatpush1.msra.mxu0 %v1906
    %1908 = vmatprep.subr.mxu0 0.0
    %1909 = vmatpush1.msra.mxu0 0.0
    %1910 = vmatprep.subr.mxu0 0.0
    %1911 = vmatpush1.msra.mxu0 0.0
    %1912 = vmatprep.subr.mxu0 0.0
    %1913 = vmatpush1.msra.mxu0 0.0
    %1914 = vmatprep.subr.mxu0 0.0
    %1915 = vmatpush1.msra.mxu0 0.0
    %1916 = vmatprep.subr.mxu0 0.0
    %1917 = vmatpush1.msra.mxu0 0.0
    %1918 = vmatprep.subr.mxu0 0.0
    %1919 = vmatpush1.msra.mxu0 0.0
    %1920 = vmatprep.subr.mxu0 0.0
    %1921 = vmatpush1.msra.mxu0 0.0
    %1922 = vmatprep.subr.mxu0 0.0
    %1923 = vmatpush1.msra.mxu0 0.0
    %1924 = vmatprep.subr.mxu0 0.0
    %1925 = vmatpush1.msra.mxu0 0.0
    %1926 = vmatprep.subr.mxu0 0.0
    %1927 = vmatpush1.msra.mxu0 0.0
    %1928 = vmatprep.subr.mxu0 0.0
    %1929 = vmatpush1.msra.mxu0 0.0
    %1930 = vmatprep.subr.mxu0 0.0
    %1931 = vmatpush1.msra.mxu0 0.0
    %1932 = vmatprep.subr.mxu0 0.0
    %1933 = vmatpush1.msra.mxu0 0.0
    %1934 = vmatprep.subr.mxu0 0.0
    %1935 = vmatpush1.msra.mxu0 0.0
    %1936 = vmatprep.subr.mxu0 0.0
    %1937 = vmatpush1.msra.mxu0 0.0
    %1938 = vmatprep.subr.mxu0 0.0
    %1939 = vmatpush1.msra.mxu0 0.0
    %1940 = vmatprep.subr.mxu0 0.0
    %1941 = vmatpush1.msra.mxu0 0.0
    %1942 = vmatprep.subr.mxu0 0.0
    %1943 = vmatpush1.msra.mxu0 0.0
    %1944 = vmatprep.subr.mxu0 0.0
    %1945 = vmatpush1.msra.mxu0 0.0
    %1946 = vmatprep.subr.mxu0 0.0
    %1947 = vmatpush1.msra.mxu0 0.0
    %1948 = vmatprep.subr.mxu0 0.0
    %1949 = vmatpush1.msra.mxu0 0.0
    %1950 = vmatprep.subr.mxu0 0.0
    %1951 = vmatpush1.msra.mxu0 0.0
    %1952 = vmatprep.subr.mxu0 0.0
    %1953 = vmatpush1.msra.mxu0 0.0
    %1954 = vmatprep.subr.mxu0 0.0
    %1955 = vmatpush1.msra.mxu0 0.0
    %1956 = vmatprep.subr.mxu0 0.0
    %1957 = vmatpush1.msra.mxu0 0.0
    %1958 = vmatprep.subr.mxu0 0.0
    %1959 = vmatpush1.msra.mxu0 0.0
    %1960 = vmatprep.subr.mxu0 0.0
    %1961 = vmatpush1.msra.mxu0 0.0
    %1962 = vmatprep.subr.mxu0 0.0
    %1963 = vmatpush1.msra.mxu0 0.0
    %1964 = vmatprep.subr.mxu0 0.0
    %1965 = vmatpush1.msra.mxu0 0.0
    %1966 = vmatprep.subr.mxu0 0.0
    %1967 = vmatpush1.msra.mxu0 0.0
    %1968 = vmatprep.mubr.f32.mxu0 0.0
    %v1969 = vand.u32 %v38, 4294901760
    %1970 = vmatmul.mubr.f32.gmra.mrb[0].mxu0 %v1969
    %v1971 = vpop.f32.mrb[0].mxu0
    %v1972 = vadd.f32 %v1887, %v1971
    %v1973 = vpop.f32.mrb[0].mxu0
    %1974 = vmatprep.mubr.f32.mxu0 0.0
    %v1975 = vand.u32 %v41, 4294901760
    %1976 = vmatmul.mubr.f32.gmra.mrb[0].mxu0 %v1975
    %v1977 = vpop.f32.mrb[0].mxu0
    %v1978 = vadd.f32 %v1895, %v1977
    %v1979 = vpop.f32.mrb[0].mxu0
    %1980 = vdwg.mxu0
    %1981 = vmatprep.subr.mxu0 0.0
    %v1982 = vand.u32 %v1556, 4294901760
    %1983 = vmatpush1.msra.mxu0 %v1982
    %1984 = vmatprep.subr.mxu0 0.0
    %v1985 = vand.u32 %v1557, 4294901760
    %1986 = vmatpush1.msra.mxu0 %v1985
    %1987 = vmatprep.subr.mxu0 0.0
    %1988 = vmatpush1.msra.mxu0 0.0
    %1989 = vmatprep.subr.mxu0 0.0
    %1990 = vmatpush1.msra.mxu0 0.0
    %1991 = vmatprep.subr.mxu0 0.0
    %1992 = vmatpush1.msra.mxu0 0.0
    %1993 = vmatprep.subr.mxu0 0.0
    %1994 = vmatpush1.msra.mxu0 0.0
    %1995 = vmatprep.subr.mxu0 0.0
    %1996 = vmatpush1.msra.mxu0 0.0
    %1997 = vmatprep.subr.mxu0 0.0
    %1998 = vmatpush1.msra.mxu0 0.0
    %1999 = vmatprep.subr.mxu0 0.0
    %2000 = vmatpush1.msra.mxu0 0.0
    %2001 = vmatprep.subr.mxu0 0.0
    %2002 = vmatpush1.msra.mxu0 0.0
    %2003 = vmatprep.subr.mxu0 0.0
    %2004 = vmatpush1.msra.mxu0 0.0
    %2005 = vmatprep.subr.mxu0 0.0
    %2006 = vmatpush1.msra.mxu0 0.0
    %2007 = vmatprep.subr.mxu0 0.0
    %2008 = vmatpush1.msra.mxu0 0.0
    %2009 = vmatprep.subr.mxu0 0.0
    %2010 = vmatpush1.msra.mxu0 0.0
    %2011 = vmatprep.subr.mxu0 0.0
    %2012 = vmatpush1.msra.mxu0 0.0
    %2013 = vmatprep.subr.mxu0 0.0
    %2014 = vmatpush1.msra.mxu0 0.0
    %2015 = vmatprep.subr.mxu0 0.0
    %2016 = vmatpush1.msra.mxu0 0.0
    %2017 = vmatprep.subr.mxu0 0.0
    %2018 = vmatpush1.msra.mxu0 0.0
    %2019 = vmatprep.subr.mxu0 0.0
    %2020 = vmatpush1.msra.mxu0 0.0
    %2021 = vmatprep.subr.mxu0 0.0
    %2022 = vmatpush1.msra.mxu0 0.0
    %2023 = vmatprep.subr.mxu0 0.0
    %2024 = vmatpush1.msra.mxu0 0.0
    %2025 = vmatprep.subr.mxu0 0.0
    %2026 = vmatpush1.msra.mxu0 0.0
    %2027 = vmatprep.subr.mxu0 0.0
    %2028 = vmatpush1.msra.mxu0 0.0
    %2029 = vmatprep.subr.mxu0 0.0
    %2030 = vmatpush1.msra.mxu0 0.0
    %2031 = vmatprep.subr.mxu0 0.0
    %2032 = vmatpush1.msra.mxu0 0.0
    %2033 = vmatprep.subr.mxu0 0.0
    %2034 = vmatpush1.msra.mxu0 0.0
    %2035 = vmatprep.subr.mxu0 0.0
    %2036 = vmatpush1.msra.mxu0 0.0
    %2037 = vmatprep.subr.mxu0 0.0
    %2038 = vmatpush1.msra.mxu0 0.0
    %2039 = vmatprep.subr.mxu0 0.0
    %2040 = vmatpush1.msra.mxu0 0.0
    %2041 = vmatprep.subr.mxu0 0.0
    %2042 = vmatpush1.msra.mxu0 0.0
    %2043 = vmatprep.subr.mxu0 0.0
    %2044 = vmatpush1.msra.mxu0 0.0
    %2045 = vmatprep.subr.mxu0 0.0
    %2046 = vmatpush1.msra.mxu0 0.0
    %2047 = vmatprep.mubr.f32.mxu0 0.0
    %v2048 = vand.u32 %v38, 4294901760
    %2049 = vmatmul.mubr.f32.gmra.mrb[0].mxu0 %v2048
    %v2050 = vpop.f32.mrb[0].mxu0
    %v2051 = vadd.f32 %v1972, %v2050
    %v2052 = vpop.f32.mrb[0].mxu0
    %2053 = vmatprep.mubr.f32.mxu0 0.0
    %v2054 = vand.u32 %v41, 4294901760
    %2055 = vmatmul.mubr.f32.gmra.mrb[0].mxu0 %v2054
    %v2056 = vpop.f32.mrb[0].mxu0
    %v2057 = vadd.f32 %v1978, %v2056
    %v2058 = vpop.f32.mrb[0].mxu0
    %2059 = vdwg.mxu0
    %s2060 = scalar_lea.vmem %s0, 64
    %v2061 = vld [vmem:[%s2060] sm:$0xff]
    %v2062 = vld [vmem:[%s2060 + $0x8] sm:$0xff]
    %2063 = vmatprep.subr.mxu0 0.0
    %v2064 = vand.u32 %v2061, 4294901760
    %2065 = vmatpush1.msra.mxu0 %v2064
    %2066 = vmatprep.subr.mxu0 0.0
    %v2067 = vand.u32 %v2062, 4294901760
    %2068 = vmatpush1.msra.mxu0 %v2067
    %2069 = vmatprep.subr.mxu0 0.0
    %2070 = vmatpush1.msra.mxu0 0.0
    %2071 = vmatprep.subr.mxu0 0.0
    %2072 = vmatpush1.msra.mxu0 0.0
    %2073 = vmatprep.subr.mxu0 0.0
    %2074 = vmatpush1.msra.mxu0 0.0
    %2075 = vmatprep.subr.mxu0 0.0
    %2076 = vmatpush1.msra.mxu0 0.0
    %2077 = vmatprep.subr.mxu0 0.0
    %2078 = vmatpush1.msra.mxu0 0.0
    %2079 = vmatprep.subr.mxu0 0.0
    %2080 = vmatpush1.msra.mxu0 0.0
    %2081 = vmatprep.subr.mxu0 0.0
    %2082 = vmatpush1.msra.mxu0 0.0
    %2083 = vmatprep.subr.mxu0 0.0
    %2084 = vmatpush1.msra.mxu0 0.0
    %2085 = vmatprep.subr.mxu0 0.0
    %2086 = vmatpush1.msra.mxu0 0.0
    %2087 = vmatprep.subr.mxu0 0.0
    %2088 = vmatpush1.msra.mxu0 0.0
    %2089 = vmatprep.subr.mxu0 0.0
    %2090 = vmatpush1.msra.mxu0 0.0
    %2091 = vmatprep.subr.mxu0 0.0
    %2092 = vmatpush1.msra.mxu0 0.0
    %2093 = vmatprep.subr.mxu0 0.0
    %2094 = vmatpush1.msra.mxu0 0.0
    %2095 = vmatprep.subr.mxu0 0.0
    %2096 = vmatpush1.msra.mxu0 0.0
    %2097 = vmatprep.subr.mxu0 0.0
    %2098 = vmatpush1.msra.mxu0 0.0
    %2099 = vmatprep.subr.mxu0 0.0
    %2100 = vmatpush1.msra.mxu0 0.0
    %2101 = vmatprep.subr.mxu0 0.0
    %2102 = vmatpush1.msra.mxu0 0.0
    %2103 = vmatprep.subr.mxu0 0.0
    %2104 = vmatpush1.msra.mxu0 0.0
    %2105 = vmatprep.subr.mxu0 0.0
    %2106 = vmatpush1.msra.mxu0 0.0
    %2107 = vmatprep.subr.mxu0 0.0
    %2108 = vmatpush1.msra.mxu0 0.0
    %2109 = vmatprep.subr.mxu0 0.0
    %2110 = vmatpush1.msra.mxu0 0.0
    %2111 = vmatprep.subr.mxu0 0.0
    %2112 = vmatpush1.msra.mxu0 0.0
    %2113 = vmatprep.subr.mxu0 0.0
    %2114 = vmatpush1.msra.mxu0 0.0
    %2115 = vmatprep.subr.mxu0 0.0
    %2116 = vmatpush1.msra.mxu0 0.0
    %2117 = vmatprep.subr.mxu0 0.0
    %2118 = vmatpush1.msra.mxu0 0.0
    %2119 = vmatprep.subr.mxu0 0.0
    %2120 = vmatpush1.msra.mxu0 0.0
    %2121 = vmatprep.subr.mxu0 0.0
    %2122 = vmatpush1.msra.mxu0 0.0
    %2123 = vmatprep.subr.mxu0 0.0
    %2124 = vmatpush1.msra.mxu0 0.0
    %2125 = vmatprep.subr.mxu0 0.0
    %2126 = vmatpush1.msra.mxu0 0.0
    %2127 = vmatprep.subr.mxu0 0.0
    %2128 = vmatpush1.msra.mxu0 0.0
    %2129 = vmatprep.mubr.f32.mxu0 0.0
    %v2130 = vand.u32 %v38, 4294901760
    %v2131 = vsub.f32 %v38, %v2130
    %v2132 = vand.u32 %v2131, 4294901760
    %v2133 = vsub.f32 %v2131, %v2132
    %v2134 = vand.u32 %v2133, 4294901760
    %2135 = vmatmul.mubr.f32.gmra.mrb[0].mxu0 %v2134
    %v2136 = vpop.f32.mrb[0].mxu0
    %v2137 = vadd.f32 0.0, %v2136
    %v2138 = vpop.f32.mrb[0].mxu0
    %2139 = vmatprep.mubr.f32.mxu0 0.0
    %v2140 = vand.u32 %v41, 4294901760
    %v2141 = vsub.f32 %v41, %v2140
    %v2142 = vand.u32 %v2141, 4294901760
    %v2143 = vsub.f32 %v2141, %v2142
    %v2144 = vand.u32 %v2143, 4294901760
    %2145 = vmatmul.mubr.f32.gmra.mrb[0].mxu0 %v2144
    %v2146 = vpop.f32.mrb[0].mxu0
    %v2147 = vadd.f32 0.0, %v2146
    %v2148 = vpop.f32.mrb[0].mxu0
    %2149 = vdwg.mxu0
    %2150 = vmatprep.subr.mxu0 0.0
    %v2151 = vand.u32 %v2061, 4294901760
    %v2152 = vsub.f32 %v2061, %v2151
    %v2153 = vand.u32 %v2152, 4294901760
    %v2154 = vsub.f32 %v2152, %v2153
    %v2155 = vand.u32 %v2154, 4294901760
    %2156 = vmatpush1.msra.mxu0 %v2155
    %2157 = vmatprep.subr.mxu0 0.0
    %v2158 = vand.u32 %v2062, 4294901760
    %v2159 = vsub.f32 %v2062, %v2158
    %v2160 = vand.u32 %v2159, 4294901760
    %v2161 = vsub.f32 %v2159, %v2160
    %v2162 = vand.u32 %v2161, 4294901760
    %2163 = vmatpush1.msra.mxu0 %v2162
    %2164 = vmatprep.subr.mxu0 0.0
    %2165 = vmatpush1.msra.mxu0 0.0
    %2166 = vmatprep.subr.mxu0 0.0
    %2167 = vmatpush1.msra.mxu0 0.0
    %2168 = vmatprep.subr.mxu0 0.0
    %2169 = vmatpush1.msra.mxu0 0.0
    %2170 = vmatprep.subr.mxu0 0.0
    %2171 = vmatpush1.msra.mxu0 0.0
    %2172 = vmatprep.subr.mxu0 0.0
    %2173 = vmatpush1.msra.mxu0 0.0
    %2174 = vmatprep.subr.mxu0 0.0
    %2175 = vmatpush1.msra.mxu0 0.0
    %2176 = vmatprep.subr.mxu0 0.0
    %2177 = vmatpush1.msra.mxu0 0.0
    %2178 = vmatprep.subr.mxu0 0.0
    %2179 = vmatpush1.msra.mxu0 0.0
    %2180 = vmatprep.subr.mxu0 0.0
    %2181 = vmatpush1.msra.mxu0 0.0
    %2182 = vmatprep.subr.mxu0 0.0
    %2183 = vmatpush1.msra.mxu0 0.0
    %2184 = vmatprep.subr.mxu0 0.0
    %2185 = vmatpush1.msra.mxu0 0.0
    %2186 = vmatprep.subr.mxu0 0.0
    %2187 = vmatpush1.msra.mxu0 0.0
    %2188 = vmatprep.subr.mxu0 0.0
    %2189 = vmatpush1.msra.mxu0 0.0
    %2190 = vmatprep.subr.mxu0 0.0
    %2191 = vmatpush1.msra.mxu0 0.0
    %2192 = vmatprep.subr.mxu0 0.0
    %2193 = vmatpush1.msra.mxu0 0.0
    %2194 = vmatprep.subr.mxu0 0.0
    %2195 = vmatpush1.msra.mxu0 0.0
    %2196 = vmatprep.subr.mxu0 0.0
    %2197 = vmatpush1.msra.mxu0 0.0
    %2198 = vmatprep.subr.mxu0 0.0
    %2199 = vmatpush1.msra.mxu0 0.0
    %2200 = vmatprep.subr.mxu0 0.0
    %2201 = vmatpush1.msra.mxu0 0.0
    %2202 = vmatprep.subr.mxu0 0.0
    %2203 = vmatpush1.msra.mxu0 0.0
    %2204 = vmatprep.subr.mxu0 0.0
    %2205 = vmatpush1.msra.mxu0 0.0
    %2206 = vmatprep.subr.mxu0 0.0
    %2207 = vmatpush1.msra.mxu0 0.0
    %2208 = vmatprep.subr.mxu0 0.0
    %2209 = vmatpush1.msra.mxu0 0.0
    %2210 = vmatprep.subr.mxu0 0.0
    %2211 = vmatpush1.msra.mxu0 0.0
    %2212 = vmatprep.subr.mxu0 0.0
    %2213 = vmatpush1.msra.mxu0 0.0
    %2214 = vmatprep.subr.mxu0 0.0
    %2215 = vmatpush1.msra.mxu0 0.0
    %2216 = vmatprep.subr.mxu0 0.0
    %2217 = vmatpush1.msra.mxu0 0.0
    %2218 = vmatprep.subr.mxu0 0.0
    %2219 = vmatpush1.msra.mxu0 0.0
    %2220 = vmatprep.subr.mxu0 0.0
    %2221 = vmatpush1.msra.mxu0 0.0
    %2222 = vmatprep.subr.mxu0 0.0
    %2223 = vmatpush1.msra.mxu0 0.0
    %2224 = vmatprep.mubr.f32.mxu0 0.0
    %v2225 = vand.u32 %v38, 4294901760
    %2226 = vmatmul.mubr.f32.gmra.mrb[0].mxu0 %v2225
    %v2227 = vpop.f32.mrb[0].mxu0
    %v2228 = vadd.f32 %v2137, %v2227
    %v2229 = vpop.f32.mrb[0].mxu0
    %2230 = vmatprep.mubr.f32.mxu0 0.0
    %v2231 = vand.u32 %v41, 4294901760
    %2232 = vmatmul.mubr.f32.gmra.mrb[0].mxu0 %v2231
    %v2233 = vpop.f32.mrb[0].mxu0
    %v2234 = vadd.f32 %v2147, %v2233
    %v2235 = vpop.f32.mrb[0].mxu0
    %2236 = vdwg.mxu0
    %2237 = vmatprep.subr.mxu0 0.0
    %v2238 = vand.u32 %v2061, 4294901760
    %v2239 = vsub.f32 %v2061, %v2238
    %2240 = vmatpush1.msra.mxu0 %v2239
    %2241 = vmatprep.subr.mxu0 0.0
    %v2242 = vand.u32 %v2062, 4294901760
    %v2243 = vsub.f32 %v2062, %v2242
    %2244 = vmatpush1.msra.mxu0 %v2243
    %2245 = vmatprep.subr.mxu0 0.0
    %2246 = vmatpush1.msra.mxu0 0.0
    %2247 = vmatprep.subr.mxu0 0.0
    %2248 = vmatpush1.msra.mxu0 0.0
    %2249 = vmatprep.subr.mxu0 0.0
    %2250 = vmatpush1.msra.mxu0 0.0
    %2251 = vmatprep.subr.mxu0 0.0
    %2252 = vmatpush1.msra.mxu0 0.0
    %2253 = vmatprep.subr.mxu0 0.0
    %2254 = vmatpush1.msra.mxu0 0.0
    %2255 = vmatprep.subr.mxu0 0.0
    %2256 = vmatpush1.msra.mxu0 0.0
    %2257 = vmatprep.subr.mxu0 0.0
    %2258 = vmatpush1.msra.mxu0 0.0
    %2259 = vmatprep.subr.mxu0 0.0
    %2260 = vmatpush1.msra.mxu0 0.0
    %2261 = vmatprep.subr.mxu0 0.0
    %2262 = vmatpush1.msra.mxu0 0.0
    %2263 = vmatprep.subr.mxu0 0.0
    %2264 = vmatpush1.msra.mxu0 0.0
    %2265 = vmatprep.subr.mxu0 0.0
    %2266 = vmatpush1.msra.mxu0 0.0
    %2267 = vmatprep.subr.mxu0 0.0
    %2268 = vmatpush1.msra.mxu0 0.0
    %2269 = vmatprep.subr.mxu0 0.0
    %2270 = vmatpush1.msra.mxu0 0.0
    %2271 = vmatprep.subr.mxu0 0.0
    %2272 = vmatpush1.msra.mxu0 0.0
    %2273 = vmatprep.subr.mxu0 0.0
    %2274 = vmatpush1.msra.mxu0 0.0
    %2275 = vmatprep.subr.mxu0 0.0
    %2276 = vmatpush1.msra.mxu0 0.0
    %2277 = vmatprep.subr.mxu0 0.0
    %2278 = vmatpush1.msra.mxu0 0.0
    %2279 = vmatprep.subr.mxu0 0.0
    %2280 = vmatpush1.msra.mxu0 0.0
    %2281 = vmatprep.subr.mxu0 0.0
    %2282 = vmatpush1.msra.mxu0 0.0
    %2283 = vmatprep.subr.mxu0 0.0
    %2284 = vmatpush1.msra.mxu0 0.0
    %2285 = vmatprep.subr.mxu0 0.0
    %2286 = vmatpush1.msra.mxu0 0.0
    %2287 = vmatprep.subr.mxu0 0.0
    %2288 = vmatpush1.msra.mxu0 0.0
    %2289 = vmatprep.subr.mxu0 0.0
    %2290 = vmatpush1.msra.mxu0 0.0
    %2291 = vmatprep.subr.mxu0 0.0
    %2292 = vmatpush1.msra.mxu0 0.0
    %2293 = vmatprep.subr.mxu0 0.0
    %2294 = vmatpush1.msra.mxu0 0.0
    %2295 = vmatprep.subr.mxu0 0.0
    %2296 = vmatpush1.msra.mxu0 0.0
    %2297 = vmatprep.subr.mxu0 0.0
    %2298 = vmatpush1.msra.mxu0 0.0
    %2299 = vmatprep.subr.mxu0 0.0
    %2300 = vmatpush1.msra.mxu0 0.0
    %2301 = vmatprep.subr.mxu0 0.0
    %2302 = vmatpush1.msra.mxu0 0.0
    %2303 = vmatprep.subr.mxu0 0.0
    %2304 = vmatpush1.msra.mxu0 0.0
    %2305 = vmatprep.mubr.f32.mxu0 0.0
    %v2306 = vand.u32 %v38, 4294901760
    %v2307 = vsub.f32 %v38, %v2306
    %2308 = vmatmul.mubr.f32.gmra.mrb[0].mxu0 %v2307
    %v2309 = vpop.f32.mrb[0].mxu0
    %v2310 = vadd.f32 %v2228, %v2309
    %v2311 = vpop.f32.mrb[0].mxu0
    %2312 = vmatprep.mubr.f32.mxu0 0.0
    %v2313 = vand.u32 %v41, 4294901760
    %v2314 = vsub.f32 %v41, %v2313
    %2315 = vmatmul.mubr.f32.gmra.mrb[0].mxu0 %v2314
    %v2316 = vpop.f32.mrb[0].mxu0
    %v2317 = vadd.f32 %v2234, %v2316
    %v2318 = vpop.f32.mrb[0].mxu0
    %2319 = vdwg.mxu0
    %2320 = vmatprep.subr.mxu0 0.0
    %v2321 = vand.u32 %v2061, 4294901760
    %2322 = vmatpush1.msra.mxu0 %v2321
    %2323 = vmatprep.subr.mxu0 0.0
    %v2324 = vand.u32 %v2062, 4294901760
    %2325 = vmatpush1.msra.mxu0 %v2324
    %2326 = vmatprep.subr.mxu0 0.0
    %2327 = vmatpush1.msra.mxu0 0.0
    %2328 = vmatprep.subr.mxu0 0.0
    %2329 = vmatpush1.msra.mxu0 0.0
    %2330 = vmatprep.subr.mxu0 0.0
    %2331 = vmatpush1.msra.mxu0 0.0
    %2332 = vmatprep.subr.mxu0 0.0
    %2333 = vmatpush1.msra.mxu0 0.0
    %2334 = vmatprep.subr.mxu0 0.0
    %2335 = vmatpush1.msra.mxu0 0.0
    %2336 = vmatprep.subr.mxu0 0.0
    %2337 = vmatpush1.msra.mxu0 0.0
    %2338 = vmatprep.subr.mxu0 0.0
    %2339 = vmatpush1.msra.mxu0 0.0
    %2340 = vmatprep.subr.mxu0 0.0
    %2341 = vmatpush1.msra.mxu0 0.0
    %2342 = vmatprep.subr.mxu0 0.0
    %2343 = vmatpush1.msra.mxu0 0.0
    %2344 = vmatprep.subr.mxu0 0.0
    %2345 = vmatpush1.msra.mxu0 0.0
    %2346 = vmatprep.subr.mxu0 0.0
    %2347 = vmatpush1.msra.mxu0 0.0
    %2348 = vmatprep.subr.mxu0 0.0
    %2349 = vmatpush1.msra.mxu0 0.0
    %2350 = vmatprep.subr.mxu0 0.0
    %2351 = vmatpush1.msra.mxu0 0.0
    %2352 = vmatprep.subr.mxu0 0.0
    %2353 = vmatpush1.msra.mxu0 0.0
    %2354 = vmatprep.subr.mxu0 0.0
    %2355 = vmatpush1.msra.mxu0 0.0
    %2356 = vmatprep.subr.mxu0 0.0
    %2357 = vmatpush1.msra.mxu0 0.0
    %2358 = vmatprep.subr.mxu0 0.0
    %2359 = vmatpush1.msra.mxu0 0.0
    %2360 = vmatprep.subr.mxu0 0.0
    %2361 = vmatpush1.msra.mxu0 0.0
    %2362 = vmatprep.subr.mxu0 0.0
    %2363 = vmatpush1.msra.mxu0 0.0
    %2364 = vmatprep.subr.mxu0 0.0
    %2365 = vmatpush1.msra.mxu0 0.0
    %2366 = vmatprep.subr.mxu0 0.0
    %2367 = vmatpush1.msra.mxu0 0.0
    %2368 = vmatprep.subr.mxu0 0.0
    %2369 = vmatpush1.msra.mxu0 0.0
    %2370 = vmatprep.subr.mxu0 0.0
    %2371 = vmatpush1.msra.mxu0 0.0
    %2372 = vmatprep.subr.mxu0 0.0
    %2373 = vmatpush1.msra.mxu0 0.0
    %2374 = vmatprep.subr.mxu0 0.0
    %2375 = vmatpush1.msra.mxu0 0.0
    %2376 = vmatprep.subr.mxu0 0.0
    %2377 = vmatpush1.msra.mxu0 0.0
    %2378 = vmatprep.subr.mxu0 0.0
    %2379 = vmatpush1.msra.mxu0 0.0
    %2380 = vmatprep.subr.mxu0 0.0
    %2381 = vmatpush1.msra.mxu0 0.0
    %2382 = vmatprep.subr.mxu0 0.0
    %2383 = vmatpush1.msra.mxu0 0.0
    %2384 = vmatprep.subr.mxu0 0.0
    %2385 = vmatpush1.msra.mxu0 0.0
    %2386 = vmatprep.mubr.f32.mxu0 0.0
    %v2387 = vand.u32 %v38, 4294901760
    %v2388 = vsub.f32 %v38, %v2387
    %v2389 = vand.u32 %v2388, 4294901760
    %2390 = vmatmul.mubr.f32.gmra.mrb[0].mxu0 %v2389
    %v2391 = vpop.f32.mrb[0].mxu0
    %v2392 = vadd.f32 %v2310, %v2391
    %v2393 = vpop.f32.mrb[0].mxu0
    %2394 = vmatprep.mubr.f32.mxu0 0.0
    %v2395 = vand.u32 %v41, 4294901760
    %v2396 = vsub.f32 %v41, %v2395
    %v2397 = vand.u32 %v2396, 4294901760
    %2398 = vmatmul.mubr.f32.gmra.mrb[0].mxu0 %v2397
    %v2399 = vpop.f32.mrb[0].mxu0
    %v2400 = vadd.f32 %v2317, %v2399
    %v2401 = vpop.f32.mrb[0].mxu0
    %2402 = vdwg.mxu0
    %2403 = vmatprep.subr.mxu0 0.0
    %v2404 = vand.u32 %v2061, 4294901760
    %v2405 = vsub.f32 %v2061, %v2404
    %v2406 = vand.u32 %v2405, 4294901760
    %2407 = vmatpush1.msra.mxu0 %v2406
    %2408 = vmatprep.subr.mxu0 0.0
    %v2409 = vand.u32 %v2062, 4294901760
    %v2410 = vsub.f32 %v2062, %v2409
    %v2411 = vand.u32 %v2410, 4294901760
    %2412 = vmatpush1.msra.mxu0 %v2411
    %2413 = vmatprep.subr.mxu0 0.0
    %2414 = vmatpush1.msra.mxu0 0.0
    %2415 = vmatprep.subr.mxu0 0.0
    %2416 = vmatpush1.msra.mxu0 0.0
    %2417 = vmatprep.subr.mxu0 0.0
    %2418 = vmatpush1.msra.mxu0 0.0
    %2419 = vmatprep.subr.mxu0 0.0
    %2420 = vmatpush1.msra.mxu0 0.0
    %2421 = vmatprep.subr.mxu0 0.0
    %2422 = vmatpush1.msra.mxu0 0.0
    %2423 = vmatprep.subr.mxu0 0.0
    %2424 = vmatpush1.msra.mxu0 0.0
    %2425 = vmatprep.subr.mxu0 0.0
    %2426 = vmatpush1.msra.mxu0 0.0
    %2427 = vmatprep.subr.mxu0 0.0
    %2428 = vmatpush1.msra.mxu0 0.0
    %2429 = vmatprep.subr.mxu0 0.0
    %2430 = vmatpush1.msra.mxu0 0.0
    %2431 = vmatprep.subr.mxu0 0.0
    %2432 = vmatpush1.msra.mxu0 0.0
    %2433 = vmatprep.subr.mxu0 0.0
    %2434 = vmatpush1.msra.mxu0 0.0
    %2435 = vmatprep.subr.mxu0 0.0
    %2436 = vmatpush1.msra.mxu0 0.0
    %2437 = vmatprep.subr.mxu0 0.0
    %2438 = vmatpush1.msra.mxu0 0.0
    %2439 = vmatprep.subr.mxu0 0.0
    %2440 = vmatpush1.msra.mxu0 0.0
    %2441 = vmatprep.subr.mxu0 0.0
    %2442 = vmatpush1.msra.mxu0 0.0
    %2443 = vmatprep.subr.mxu0 0.0
    %2444 = vmatpush1.msra.mxu0 0.0
    %2445 = vmatprep.subr.mxu0 0.0
    %2446 = vmatpush1.msra.mxu0 0.0
    %2447 = vmatprep.subr.mxu0 0.0
    %2448 = vmatpush1.msra.mxu0 0.0
    %2449 = vmatprep.subr.mxu0 0.0
    %2450 = vmatpush1.msra.mxu0 0.0
    %2451 = vmatprep.subr.mxu0 0.0
    %2452 = vmatpush1.msra.mxu0 0.0
    %2453 = vmatprep.subr.mxu0 0.0
    %2454 = vmatpush1.msra.mxu0 0.0
    %2455 = vmatprep.subr.mxu0 0.0
    %2456 = vmatpush1.msra.mxu0 0.0
    %2457 = vmatprep.subr.mxu0 0.0
    %2458 = vmatpush1.msra.mxu0 0.0
    %2459 = vmatprep.subr.mxu0 0.0
    %2460 = vmatpush1.msra.mxu0 0.0
    %2461 = vmatprep.subr.mxu0 0.0
    %2462 = vmatpush1.msra.mxu0 0.0
    %2463 = vmatprep.subr.mxu0 0.0
    %2464 = vmatpush1.msra.mxu0 0.0
    %2465 = vmatprep.subr.mxu0 0.0
    %2466 = vmatpush1.msra.mxu0 0.0
    %2467 = vmatprep.subr.mxu0 0.0
    %2468 = vmatpush1.msra.mxu0 0.0
    %2469 = vmatprep.subr.mxu0 0.0
    %2470 = vmatpush1.msra.mxu0 0.0
    %2471 = vmatprep.subr.mxu0 0.0
    %2472 = vmatpush1.msra.mxu0 0.0
    %2473 = vmatprep.mubr.f32.mxu0 0.0
    %v2474 = vand.u32 %v38, 4294901760
    %2475 = vmatmul.mubr.f32.gmra.mrb[0].mxu0 %v2474
    %v2476 = vpop.f32.mrb[0].mxu0
    %v2477 = vadd.f32 %v2392, %v2476
    %v2478 = vpop.f32.mrb[0].mxu0
    %2479 = vmatprep.mubr.f32.mxu0 0.0
    %v2480 = vand.u32 %v41, 4294901760
    %2481 = vmatmul.mubr.f32.gmra.mrb[0].mxu0 %v2480
    %v2482 = vpop.f32.mrb[0].mxu0
    %v2483 = vadd.f32 %v2400, %v2482
    %v2484 = vpop.f32.mrb[0].mxu0
    %2485 = vdwg.mxu0
    %2486 = vmatprep.subr.mxu0 0.0
    %v2487 = vand.u32 %v2061, 4294901760
    %2488 = vmatpush1.msra.mxu0 %v2487
    %2489 = vmatprep.subr.mxu0 0.0
    %v2490 = vand.u32 %v2062, 4294901760
    %2491 = vmatpush1.msra.mxu0 %v2490
    %2492 = vmatprep.subr.mxu0 0.0
    %2493 = vmatpush1.msra.mxu0 0.0
    %2494 = vmatprep.subr.mxu0 0.0
    %2495 = vmatpush1.msra.mxu0 0.0
    %2496 = vmatprep.subr.mxu0 0.0
    %2497 = vmatpush1.msra.mxu0 0.0
    %2498 = vmatprep.subr.mxu0 0.0
    %2499 = vmatpush1.msra.mxu0 0.0
    %2500 = vmatprep.subr.mxu0 0.0
    %2501 = vmatpush1.msra.mxu0 0.0
    %2502 = vmatprep.subr.mxu0 0.0
    %2503 = vmatpush1.msra.mxu0 0.0
    %2504 = vmatprep.subr.mxu0 0.0
    %2505 = vmatpush1.msra.mxu0 0.0
    %2506 = vmatprep.subr.mxu0 0.0
    %2507 = vmatpush1.msra.mxu0 0.0
    %2508 = vmatprep.subr.mxu0 0.0
    %2509 = vmatpush1.msra.mxu0 0.0
    %2510 = vmatprep.subr.mxu0 0.0
    %2511 = vmatpush1.msra.mxu0 0.0
    %2512 = vmatprep.subr.mxu0 0.0
    %2513 = vmatpush1.msra.mxu0 0.0
    %2514 = vmatprep.subr.mxu0 0.0
    %2515 = vmatpush1.msra.mxu0 0.0
    %2516 = vmatprep.subr.mxu0 0.0
    %2517 = vmatpush1.msra.mxu0 0.0
    %2518 = vmatprep.subr.mxu0 0.0
    %2519 = vmatpush1.msra.mxu0 0.0
    %2520 = vmatprep.subr.mxu0 0.0
    %2521 = vmatpush1.msra.mxu0 0.0
    %2522 = vmatprep.subr.mxu0 0.0
    %2523 = vmatpush1.msra.mxu0 0.0
    %2524 = vmatprep.subr.mxu0 0.0
    %2525 = vmatpush1.msra.mxu0 0.0
    %2526 = vmatprep.subr.mxu0 0.0
    %2527 = vmatpush1.msra.mxu0 0.0
    %2528 = vmatprep.subr.mxu0 0.0
    %2529 = vmatpush1.msra.mxu0 0.0
    %2530 = vmatprep.subr.mxu0 0.0
    %2531 = vmatpush1.msra.mxu0 0.0
    %2532 = vmatprep.subr.mxu0 0.0
    %2533 = vmatpush1.msra.mxu0 0.0
    %2534 = vmatprep.subr.mxu0 0.0
    %2535 = vmatpush1.msra.mxu0 0.0
    %2536 = vmatprep.subr.mxu0 0.0
    %2537 = vmatpush1.msra.mxu0 0.0
    %2538 = vmatprep.subr.mxu0 0.0
    %2539 = vmatpush1.msra.mxu0 0.0
    %2540 = vmatprep.subr.mxu0 0.0
    %2541 = vmatpush1.msra.mxu0 0.0
    %2542 = vmatprep.subr.mxu0 0.0
    %2543 = vmatpush1.msra.mxu0 0.0
    %2544 = vmatprep.subr.mxu0 0.0
    %2545 = vmatpush1.msra.mxu0 0.0
    %2546 = vmatprep.subr.mxu0 0.0
    %2547 = vmatpush1.msra.mxu0 0.0
    %2548 = vmatprep.subr.mxu0 0.0
    %2549 = vmatpush1.msra.mxu0 0.0
    %2550 = vmatprep.subr.mxu0 0.0
    %2551 = vmatpush1.msra.mxu0 0.0
    %2552 = vmatprep.mubr.f32.mxu0 0.0
    %v2553 = vand.u32 %v38, 4294901760
    %2554 = vmatmul.mubr.f32.gmra.mrb[0].mxu0 %v2553
    %v2555 = vpop.f32.mrb[0].mxu0
    %v2556 = vadd.f32 %v2477, %v2555
    %v2557 = vpop.f32.mrb[0].mxu0
    %2558 = vmatprep.mubr.f32.mxu0 0.0
    %v2559 = vand.u32 %v41, 4294901760
    %2560 = vmatmul.mubr.f32.gmra.mrb[0].mxu0 %v2559
    %v2561 = vpop.f32.mrb[0].mxu0
    %v2562 = vadd.f32 %v2483, %v2561
    %v2563 = vpop.f32.mrb[0].mxu0
    %2564 = vdwg.mxu0
    %s2565 = scalar_lea.vmem %s0, 80
    %v2566 = vld [vmem:[%s2565] sm:$0xff]
    %v2567 = vld [vmem:[%s2565 + $0x8] sm:$0xff]
    %2568 = vmatprep.subr.mxu0 0.0
    %v2569 = vand.u32 %v2566, 4294901760
    %2570 = vmatpush1.msra.mxu0 %v2569
    %2571 = vmatprep.subr.mxu0 0.0
    %v2572 = vand.u32 %v2567, 4294901760
    %2573 = vmatpush1.msra.mxu0 %v2572
    %2574 = vmatprep.subr.mxu0 0.0
    %2575 = vmatpush1.msra.mxu0 0.0
    %2576 = vmatprep.subr.mxu0 0.0
    %2577 = vmatpush1.msra.mxu0 0.0
    %2578 = vmatprep.subr.mxu0 0.0
    %2579 = vmatpush1.msra.mxu0 0.0
    %2580 = vmatprep.subr.mxu0 0.0
    %2581 = vmatpush1.msra.mxu0 0.0
    %2582 = vmatprep.subr.mxu0 0.0
    %2583 = vmatpush1.msra.mxu0 0.0
    %2584 = vmatprep.subr.mxu0 0.0
    %2585 = vmatpush1.msra.mxu0 0.0
    %2586 = vmatprep.subr.mxu0 0.0
    %2587 = vmatpush1.msra.mxu0 0.0
    %2588 = vmatprep.subr.mxu0 0.0
    %2589 = vmatpush1.msra.mxu0 0.0
    %2590 = vmatprep.subr.mxu0 0.0
    %2591 = vmatpush1.msra.mxu0 0.0
    %2592 = vmatprep.subr.mxu0 0.0
    %2593 = vmatpush1.msra.mxu0 0.0
    %2594 = vmatprep.subr.mxu0 0.0
    %2595 = vmatpush1.msra.mxu0 0.0
    %2596 = vmatprep.subr.mxu0 0.0
    %2597 = vmatpush1.msra.mxu0 0.0
    %2598 = vmatprep.subr.mxu0 0.0
    %2599 = vmatpush1.msra.mxu0 0.0
    %2600 = vmatprep.subr.mxu0 0.0
    %2601 = vmatpush1.msra.mxu0 0.0
    %2602 = vmatprep.subr.mxu0 0.0
    %2603 = vmatpush1.msra.mxu0 0.0
    %2604 = vmatprep.subr.mxu0 0.0
    %2605 = vmatpush1.msra.mxu0 0.0
    %2606 = vmatprep.subr.mxu0 0.0
    %2607 = vmatpush1.msra.mxu0 0.0
    %2608 = vmatprep.subr.mxu0 0.0
    %2609 = vmatpush1.msra.mxu0 0.0
    %2610 = vmatprep.subr.mxu0 0.0
    %2611 = vmatpush1.msra.mxu0 0.0
    %2612 = vmatprep.subr.mxu0 0.0
    %2613 = vmatpush1.msra.mxu0 0.0
    %2614 = vmatprep.subr.mxu0 0.0
    %2615 = vmatpush1.msra.mxu0 0.0
    %2616 = vmatprep.subr.mxu0 0.0
    %2617 = vmatpush1.msra.mxu0 0.0
    %2618 = vmatprep.subr.mxu0 0.0
    %2619 = vmatpush1.msra.mxu0 0.0
    %2620 = vmatprep.subr.mxu0 0.0
    %2621 = vmatpush1.msra.mxu0 0.0
    %2622 = vmatprep.subr.mxu0 0.0
    %2623 = vmatpush1.msra.mxu0 0.0
    %2624 = vmatprep.subr.mxu0 0.0
    %2625 = vmatpush1.msra.mxu0 0.0
    %2626 = vmatprep.subr.mxu0 0.0
    %2627 = vmatpush1.msra.mxu0 0.0
    %2628 = vmatprep.subr.mxu0 0.0
    %2629 = vmatpush1.msra.mxu0 0.0
    %2630 = vmatprep.subr.mxu0 0.0
    %2631 = vmatpush1.msra.mxu0 0.0
    %2632 = vmatprep.subr.mxu0 0.0
    %2633 = vmatpush1.msra.mxu0 0.0
    %2634 = vmatprep.mubr.f32.mxu0 0.0
    %v2635 = vand.u32 %v38, 4294901760
    %v2636 = vsub.f32 %v38, %v2635
    %v2637 = vand.u32 %v2636, 4294901760
    %v2638 = vsub.f32 %v2636, %v2637
    %v2639 = vand.u32 %v2638, 4294901760
    %2640 = vmatmul.mubr.f32.gmra.mrb[0].mxu0 %v2639
    %v2641 = vpop.f32.mrb[0].mxu0
    %v2642 = vadd.f32 0.0, %v2641
    %v2643 = vpop.f32.mrb[0].mxu0
    %2644 = vmatprep.mubr.f32.mxu0 0.0
    %v2645 = vand.u32 %v41, 4294901760
    %v2646 = vsub.f32 %v41, %v2645
    %v2647 = vand.u32 %v2646, 4294901760
    %v2648 = vsub.f32 %v2646, %v2647
    %v2649 = vand.u32 %v2648, 4294901760
    %2650 = vmatmul.mubr.f32.gmra.mrb[0].mxu0 %v2649
    %v2651 = vpop.f32.mrb[0].mxu0
    %v2652 = vadd.f32 0.0, %v2651
    %v2653 = vpop.f32.mrb[0].mxu0
    %2654 = vdwg.mxu0
    %2655 = vmatprep.subr.mxu0 0.0
    %v2656 = vand.u32 %v2566, 4294901760
    %v2657 = vsub.f32 %v2566, %v2656
    %v2658 = vand.u32 %v2657, 4294901760
    %v2659 = vsub.f32 %v2657, %v2658
    %v2660 = vand.u32 %v2659, 4294901760
    %2661 = vmatpush1.msra.mxu0 %v2660
    %2662 = vmatprep.subr.mxu0 0.0
    %v2663 = vand.u32 %v2567, 4294901760
    %v2664 = vsub.f32 %v2567, %v2663
    %v2665 = vand.u32 %v2664, 4294901760
    %v2666 = vsub.f32 %v2664, %v2665
    %v2667 = vand.u32 %v2666, 4294901760
    %2668 = vmatpush1.msra.mxu0 %v2667
    %2669 = vmatprep.subr.mxu0 0.0
    %2670 = vmatpush1.msra.mxu0 0.0
    %2671 = vmatprep.subr.mxu0 0.0
    %2672 = vmatpush1.msra.mxu0 0.0
    %2673 = vmatprep.subr.mxu0 0.0
    %2674 = vmatpush1.msra.mxu0 0.0
    %2675 = vmatprep.subr.mxu0 0.0
    %2676 = vmatpush1.msra.mxu0 0.0
    %2677 = vmatprep.subr.mxu0 0.0
    %2678 = vmatpush1.msra.mxu0 0.0
    %2679 = vmatprep.subr.mxu0 0.0
    %2680 = vmatpush1.msra.mxu0 0.0
    %2681 = vmatprep.subr.mxu0 0.0
    %2682 = vmatpush1.msra.mxu0 0.0
    %2683 = vmatprep.subr.mxu0 0.0
    %2684 = vmatpush1.msra.mxu0 0.0
    %2685 = vmatprep.subr.mxu0 0.0
    %2686 = vmatpush1.msra.mxu0 0.0
    %2687 = vmatprep.subr.mxu0 0.0
    %2688 = vmatpush1.msra.mxu0 0.0
    %2689 = vmatprep.subr.mxu0 0.0
    %2690 = vmatpush1.msra.mxu0 0.0
    %2691 = vmatprep.subr.mxu0 0.0
    %2692 = vmatpush1.msra.mxu0 0.0
    %2693 = vmatprep.subr.mxu0 0.0
    %2694 = vmatpush1.msra.mxu0 0.0
    %2695 = vmatprep.subr.mxu0 0.0
    %2696 = vmatpush1.msra.mxu0 0.0
    %2697 = vmatprep.subr.mxu0 0.0
    %2698 = vmatpush1.msra.mxu0 0.0
    %2699 = vmatprep.subr.mxu0 0.0
    %2700 = vmatpush1.msra.mxu0 0.0
    %2701 = vmatprep.subr.mxu0 0.0
    %2702 = vmatpush1.msra.mxu0 0.0
    %2703 = vmatprep.subr.mxu0 0.0
    %2704 = vmatpush1.msra.mxu0 0.0
    %2705 = vmatprep.subr.mxu0 0.0
    %2706 = vmatpush1.msra.mxu0 0.0
    %2707 = vmatprep.subr.mxu0 0.0
    %2708 = vmatpush1.msra.mxu0 0.0
    %2709 = vmatprep.subr.mxu0 0.0
    %2710 = vmatpush1.msra.mxu0 0.0
    %2711 = vmatprep.subr.mxu0 0.0
    %2712 = vmatpush1.msra.mxu0 0.0
    %2713 = vmatprep.subr.mxu0 0.0
    %2714 = vmatpush1.msra.mxu0 0.0
    %2715 = vmatprep.subr.mxu0 0.0
    %2716 = vmatpush1.msra.mxu0 0.0
    %2717 = vmatprep.subr.mxu0 0.0
    %2718 = vmatpush1.msra.mxu0 0.0
    %2719 = vmatprep.subr.mxu0 0.0
    %2720 = vmatpush1.msra.mxu0 0.0
    %2721 = vmatprep.subr.mxu0 0.0
    %2722 = vmatpush1.msra.mxu0 0.0
    %2723 = vmatprep.subr.mxu0 0.0
    %2724 = vmatpush1.msra.mxu0 0.0
    %2725 = vmatprep.subr.mxu0 0.0
    %2726 = vmatpush1.msra.mxu0 0.0
    %2727 = vmatprep.subr.mxu0 0.0
    %2728 = vmatpush1.msra.mxu0 0.0
    %2729 = vmatprep.mubr.f32.mxu0 0.0
    %v2730 = vand.u32 %v38, 4294901760
    %2731 = vmatmul.mubr.f32.gmra.mrb[0].mxu0 %v2730
    %v2732 = vpop.f32.mrb[0].mxu0
    %v2733 = vadd.f32 %v2642, %v2732
    %v2734 = vpop.f32.mrb[0].mxu0
    %2735 = vmatprep.mubr.f32.mxu0 0.0
    %v2736 = vand.u32 %v41, 4294901760
    %2737 = vmatmul.mubr.f32.gmra.mrb[0].mxu0 %v2736
    %v2738 = vpop.f32.mrb[0].mxu0
    %v2739 = vadd.f32 %v2652, %v2738
    %v2740 = vpop.f32.mrb[0].mxu0
    %2741 = vdwg.mxu0
    %2742 = vmatprep.subr.mxu0 0.0
    %v2743 = vand.u32 %v2566, 4294901760
    %v2744 = vsub.f32 %v2566, %v2743
    %2745 = vmatpush1.msra.mxu0 %v2744
    %2746 = vmatprep.subr.mxu0 0.0
    %v2747 = vand.u32 %v2567, 4294901760
    %v2748 = vsub.f32 %v2567, %v2747
    %2749 = vmatpush1.msra.mxu0 %v2748
    %2750 = vmatprep.subr.mxu0 0.0
    %2751 = vmatpush1.msra.mxu0 0.0
    %2752 = vmatprep.subr.mxu0 0.0
    %2753 = vmatpush1.msra.mxu0 0.0
    %2754 = vmatprep.subr.mxu0 0.0
    %2755 = vmatpush1.msra.mxu0 0.0
    %2756 = vmatprep.subr.mxu0 0.0
    %2757 = vmatpush1.msra.mxu0 0.0
    %2758 = vmatprep.subr.mxu0 0.0
    %2759 = vmatpush1.msra.mxu0 0.0
    %2760 = vmatprep.subr.mxu0 0.0
    %2761 = vmatpush1.msra.mxu0 0.0
    %2762 = vmatprep.subr.mxu0 0.0
    %2763 = vmatpush1.msra.mxu0 0.0
    %2764 = vmatprep.subr.mxu0 0.0
    %2765 = vmatpush1.msra.mxu0 0.0
    %2766 = vmatprep.subr.mxu0 0.0
    %2767 = vmatpush1.msra.mxu0 0.0
    %2768 = vmatprep.subr.mxu0 0.0
    %2769 = vmatpush1.msra.mxu0 0.0
    %2770 = vmatprep.subr.mxu0 0.0
    %2771 = vmatpush1.msra.mxu0 0.0
    %2772 = vmatprep.subr.mxu0 0.0
    %2773 = vmatpush1.msra.mxu0 0.0
    %2774 = vmatprep.subr.mxu0 0.0
    %2775 = vmatpush1.msra.mxu0 0.0
    %2776 = vmatprep.subr.mxu0 0.0
    %2777 = vmatpush1.msra.mxu0 0.0
    %2778 = vmatprep.subr.mxu0 0.0
    %2779 = vmatpush1.msra.mxu0 0.0
    %2780 = vmatprep.subr.mxu0 0.0
    %2781 = vmatpush1.msra.mxu0 0.0
    %2782 = vmatprep.subr.mxu0 0.0
    %2783 = vmatpush1.msra.mxu0 0.0
    %2784 = vmatprep.subr.mxu0 0.0
    %2785 = vmatpush1.msra.mxu0 0.0
    %2786 = vmatprep.subr.mxu0 0.0
    %2787 = vmatpush1.msra.mxu0 0.0
    %2788 = vmatprep.subr.mxu0 0.0
    %2789 = vmatpush1.msra.mxu0 0.0
    %2790 = vmatprep.subr.mxu0 0.0
    %2791 = vmatpush1.msra.mxu0 0.0
    %2792 = vmatprep.subr.mxu0 0.0
    %2793 = vmatpush1.msra.mxu0 0.0
    %2794 = vmatprep.subr.mxu0 0.0
    %2795 = vmatpush1.msra.mxu0 0.0
    %2796 = vmatprep.subr.mxu0 0.0
    %2797 = vmatpush1.msra.mxu0 0.0
    %2798 = vmatprep.subr.mxu0 0.0
    %2799 = vmatpush1.msra.mxu0 0.0
    %2800 = vmatprep.subr.mxu0 0.0
    %2801 = vmatpush1.msra.mxu0 0.0
    %2802 = vmatprep.subr.mxu0 0.0
    %2803 = vmatpush1.msra.mxu0 0.0
    %2804 = vmatprep.subr.mxu0 0.0
    %2805 = vmatpush1.msra.mxu0 0.0
    %2806 = vmatprep.subr.mxu0 0.0
    %2807 = vmatpush1.msra.mxu0 0.0
    %2808 = vmatprep.subr.mxu0 0.0
    %2809 = vmatpush1.msra.mxu0 0.0
    %2810 = vmatprep.mubr.f32.mxu0 0.0
    %v2811 = vand.u32 %v38, 4294901760
    %v2812 = vsub.f32 %v38, %v2811
    %2813 = vmatmul.mubr.f32.gmra.mrb[0].mxu0 %v2812
    %v2814 = vpop.f32.mrb[0].mxu0
    %v2815 = vadd.f32 %v2733, %v2814
    %v2816 = vpop.f32.mrb[0].mxu0
    %2817 = vmatprep.mubr.f32.mxu0 0.0
    %v2818 = vand.u32 %v41, 4294901760
    %v2819 = vsub.f32 %v41, %v2818
    %2820 = vmatmul.mubr.f32.gmra.mrb[0].mxu0 %v2819
    %v2821 = vpop.f32.mrb[0].mxu0
    %v2822 = vadd.f32 %v2739, %v2821
    %v2823 = vpop.f32.mrb[0].mxu0
    %2824 = vdwg.mxu0
    %2825 = vmatprep.subr.mxu0 0.0
    %v2826 = vand.u32 %v2566, 4294901760
    %2827 = vmatpush1.msra.mxu0 %v2826
    %2828 = vmatprep.subr.mxu0 0.0
    %v2829 = vand.u32 %v2567, 4294901760
    %2830 = vmatpush1.msra.mxu0 %v2829
    %2831 = vmatprep.subr.mxu0 0.0
    %2832 = vmatpush1.msra.mxu0 0.0
    %2833 = vmatprep.subr.mxu0 0.0
    %2834 = vmatpush1.msra.mxu0 0.0
    %2835 = vmatprep.subr.mxu0 0.0
    %2836 = vmatpush1.msra.mxu0 0.0
    %2837 = vmatprep.subr.mxu0 0.0
    %2838 = vmatpush1.msra.mxu0 0.0
    %2839 = vmatprep.subr.mxu0 0.0
    %2840 = vmatpush1.msra.mxu0 0.0
    %2841 = vmatprep.subr.mxu0 0.0
    %2842 = vmatpush1.msra.mxu0 0.0
    %2843 = vmatprep.subr.mxu0 0.0
    %2844 = vmatpush1.msra.mxu0 0.0
    %2845 = vmatprep.subr.mxu0 0.0
    %2846 = vmatpush1.msra.mxu0 0.0
    %2847 = vmatprep.subr.mxu0 0.0
    %2848 = vmatpush1.msra.mxu0 0.0
    %2849 = vmatprep.subr.mxu0 0.0
    %2850 = vmatpush1.msra.mxu0 0.0
    %2851 = vmatprep.subr.mxu0 0.0
    %2852 = vmatpush1.msra.mxu0 0.0
    %2853 = vmatprep.subr.mxu0 0.0
    %2854 = vmatpush1.msra.mxu0 0.0
    %2855 = vmatprep.subr.mxu0 0.0
    %2856 = vmatpush1.msra.mxu0 0.0
    %2857 = vmatprep.subr.mxu0 0.0
    %2858 = vmatpush1.msra.mxu0 0.0
    %2859 = vmatprep.subr.mxu0 0.0
    %2860 = vmatpush1.msra.mxu0 0.0
    %2861 = vmatprep.subr.mxu0 0.0
    %2862 = vmatpush1.msra.mxu0 0.0
    %2863 = vmatprep.subr.mxu0 0.0
    %2864 = vmatpush1.msra.mxu0 0.0
    %2865 = vmatprep.subr.mxu0 0.0
    %2866 = vmatpush1.msra.mxu0 0.0
    %2867 = vmatprep.subr.mxu0 0.0
    %2868 = vmatpush1.msra.mxu0 0.0
    %2869 = vmatprep.subr.mxu0 0.0
    %2870 = vmatpush1.msra.mxu0 0.0
    %2871 = vmatprep.subr.mxu0 0.0
    %2872 = vmatpush1.msra.mxu0 0.0
    %2873 = vmatprep.subr.mxu0 0.0
    %2874 = vmatpush1.msra.mxu0 0.0
    %2875 = vmatprep.subr.mxu0 0.0
    %2876 = vmatpush1.msra.mxu0 0.0
    %2877 = vmatprep.subr.mxu0 0.0
    %2878 = vmatpush1.msra.mxu0 0.0
    %2879 = vmatprep.subr.mxu0 0.0
    %2880 = vmatpush1.msra.mxu0 0.0
    %2881 = vmatprep.subr.mxu0 0.0
    %2882 = vmatpush1.msra.mxu0 0.0
    %2883 = vmatprep.subr.mxu0 0.0
    %2884 = vmatpush1.msra.mxu0 0.0
    %2885 = vmatprep.subr.mxu0 0.0
    %2886 = vmatpush1.msra.mxu0 0.0
    %2887 = vmatprep.subr.mxu0 0.0
    %2888 = vmatpush1.msra.mxu0 0.0
    %2889 = vmatprep.subr.mxu0 0.0
    %2890 = vmatpush1.msra.mxu0 0.0
    %2891 = vmatprep.mubr.f32.mxu0 0.0
    %v2892 = vand.u32 %v38, 4294901760
    %v2893 = vsub.f32 %v38, %v2892
    %v2894 = vand.u32 %v2893, 4294901760
    %2895 = vmatmul.mubr.f32.gmra.mrb[0].mxu0 %v2894
    %v2896 = vpop.f32.mrb[0].mxu0
    %v2897 = vadd.f32 %v2815, %v2896
    %v2898 = vpop.f32.mrb[0].mxu0
    %2899 = vmatprep.mubr.f32.mxu0 0.0
    %v2900 = vand.u32 %v41, 4294901760
    %v2901 = vsub.f32 %v41, %v2900
    %v2902 = vand.u32 %v2901, 4294901760
    %2903 = vmatmul.mubr.f32.gmra.mrb[0].mxu0 %v2902
    %v2904 = vpop.f32.mrb[0].mxu0
    %v2905 = vadd.f32 %v2822, %v2904
    %v2906 = vpop.f32.mrb[0].mxu0
    %2907 = vdwg.mxu0
    %2908 = vmatprep.subr.mxu0 0.0
    %v2909 = vand.u32 %v2566, 4294901760
    %v2910 = vsub.f32 %v2566, %v2909
    %v2911 = vand.u32 %v2910, 4294901760
    %2912 = vmatpush1.msra.mxu0 %v2911
    %2913 = vmatprep.subr.mxu0 0.0
    %v2914 = vand.u32 %v2567, 4294901760
    %v2915 = vsub.f32 %v2567, %v2914
    %v2916 = vand.u32 %v2915, 4294901760
    %2917 = vmatpush1.msra.mxu0 %v2916
    %2918 = vmatprep.subr.mxu0 0.0
    %2919 = vmatpush1.msra.mxu0 0.0
    %2920 = vmatprep.subr.mxu0 0.0
    %2921 = vmatpush1.msra.mxu0 0.0
    %2922 = vmatprep.subr.mxu0 0.0
    %2923 = vmatpush1.msra.mxu0 0.0
    %2924 = vmatprep.subr.mxu0 0.0
    %2925 = vmatpush1.msra.mxu0 0.0
    %2926 = vmatprep.subr.mxu0 0.0
    %2927 = vmatpush1.msra.mxu0 0.0
    %2928 = vmatprep.subr.mxu0 0.0
    %2929 = vmatpush1.msra.mxu0 0.0
    %2930 = vmatprep.subr.mxu0 0.0
    %2931 = vmatpush1.msra.mxu0 0.0
    %2932 = vmatprep.subr.mxu0 0.0
    %2933 = vmatpush1.msra.mxu0 0.0
    %2934 = vmatprep.subr.mxu0 0.0
    %2935 = vmatpush1.msra.mxu0 0.0
    %2936 = vmatprep.subr.mxu0 0.0
    %2937 = vmatpush1.msra.mxu0 0.0
    %2938 = vmatprep.subr.mxu0 0.0
    %2939 = vmatpush1.msra.mxu0 0.0
    %2940 = vmatprep.subr.mxu0 0.0
    %2941 = vmatpush1.msra.mxu0 0.0
    %2942 = vmatprep.subr.mxu0 0.0
    %2943 = vmatpush1.msra.mxu0 0.0
    %2944 = vmatprep.subr.mxu0 0.0
    %2945 = vmatpush1.msra.mxu0 0.0
    %2946 = vmatprep.subr.mxu0 0.0
    %2947 = vmatpush1.msra.mxu0 0.0
    %2948 = vmatprep.subr.mxu0 0.0
    %2949 = vmatpush1.msra.mxu0 0.0
    %2950 = vmatprep.subr.mxu0 0.0
    %2951 = vmatpush1.msra.mxu0 0.0
    %2952 = vmatprep.subr.mxu0 0.0
    %2953 = vmatpush1.msra.mxu0 0.0
    %2954 = vmatprep.subr.mxu0 0.0
    %2955 = vmatpush1.msra.mxu0 0.0
    %2956 = vmatprep.subr.mxu0 0.0
    %2957 = vmatpush1.msra.mxu0 0.0
    %2958 = vmatprep.subr.mxu0 0.0
    %2959 = vmatpush1.msra.mxu0 0.0
    %2960 = vmatprep.subr.mxu0 0.0
    %2961 = vmatpush1.msra.mxu0 0.0
    %2962 = vmatprep.subr.mxu0 0.0
    %2963 = vmatpush1.msra.mxu0 0.0
    %2964 = vmatprep.subr.mxu0 0.0
    %2965 = vmatpush1.msra.mxu0 0.0
    %2966 = vmatprep.subr.mxu0 0.0
    %2967 = vmatpush1.msra.mxu0 0.0
    %2968 = vmatprep.subr.mxu0 0.0
    %2969 = vmatpush1.msra.mxu0 0.0
    %2970 = vmatprep.subr.mxu0 0.0
    %2971 = vmatpush1.msra.mxu0 0.0
    %2972 = vmatprep.subr.mxu0 0.0
    %2973 = vmatpush1.msra.mxu0 0.0
    %2974 = vmatprep.subr.mxu0 0.0
    %2975 = vmatpush1.msra.mxu0 0.0
    %2976 = vmatprep.subr.mxu0 0.0
    %2977 = vmatpush1.msra.mxu0 0.0
    %2978 = vmatprep.mubr.f32.mxu0 0.0
    %v2979 = vand.u32 %v38, 4294901760
    %2980 = vmatmul.mubr.f32.gmra.mrb[0].mxu0 %v2979
    %v2981 = vpop.f32.mrb[0].mxu0
    %v2982 = vadd.f32 %v2897, %v2981
    %v2983 = vpop.f32.mrb[0].mxu0
    %2984 = vmatprep.mubr.f32.mxu0 0.0
    %v2985 = vand.u32 %v41, 4294901760
    %2986 = vmatmul.mubr.f32.gmra.mrb[0].mxu0 %v2985
    %v2987 = vpop.f32.mrb[0].mxu0
    %v2988 = vadd.f32 %v2905, %v2987
    %v2989 = vpop.f32.mrb[0].mxu0
    %2990 = vdwg.mxu0
    %2991 = vmatprep.subr.mxu0 0.0
    %v2992 = vand.u32 %v2566, 4294901760
    %2993 = vmatpush1.msra.mxu0 %v2992
    %2994 = vmatprep.subr.mxu0 0.0
    %v2995 = vand.u32 %v2567, 4294901760
    %2996 = vmatpush1.msra.mxu0 %v2995
    %2997 = vmatprep.subr.mxu0 0.0
    %2998 = vmatpush1.msra.mxu0 0.0
    %2999 = vmatprep.subr.mxu0 0.0
    %3000 = vmatpush1.msra.mxu0 0.0
    %3001 = vmatprep.subr.mxu0 0.0
    %3002 = vmatpush1.msra.mxu0 0.0
    %3003 = vmatprep.subr.mxu0 0.0
    %3004 = vmatpush1.msra.mxu0 0.0
    %3005 = vmatprep.subr.mxu0 0.0
    %3006 = vmatpush1.msra.mxu0 0.0
    %3007 = vmatprep.subr.mxu0 0.0
    %3008 = vmatpush1.msra.mxu0 0.0
    %3009 = vmatprep.subr.mxu0 0.0
    %3010 = vmatpush1.msra.mxu0 0.0
    %3011 = vmatprep.subr.mxu0 0.0
    %3012 = vmatpush1.msra.mxu0 0.0
    %3013 = vmatprep.subr.mxu0 0.0
    %3014 = vmatpush1.msra.mxu0 0.0
    %3015 = vmatprep.subr.mxu0 0.0
    %3016 = vmatpush1.msra.mxu0 0.0
    %3017 = vmatprep.subr.mxu0 0.0
    %3018 = vmatpush1.msra.mxu0 0.0
    %3019 = vmatprep.subr.mxu0 0.0
    %3020 = vmatpush1.msra.mxu0 0.0
    %3021 = vmatprep.subr.mxu0 0.0
    %3022 = vmatpush1.msra.mxu0 0.0
    %3023 = vmatprep.subr.mxu0 0.0
    %3024 = vmatpush1.msra.mxu0 0.0
    %3025 = vmatprep.subr.mxu0 0.0
    %3026 = vmatpush1.msra.mxu0 0.0
    %3027 = vmatprep.subr.mxu0 0.0
    %3028 = vmatpush1.msra.mxu0 0.0
    %3029 = vmatprep.subr.mxu0 0.0
    %3030 = vmatpush1.msra.mxu0 0.0
    %3031 = vmatprep.subr.mxu0 0.0
    %3032 = vmatpush1.msra.mxu0 0.0
    %3033 = vmatprep.subr.mxu0 0.0
    %3034 = vmatpush1.msra.mxu0 0.0
    %3035 = vmatprep.subr.mxu0 0.0
    %3036 = vmatpush1.msra.mxu0 0.0
    %3037 = vmatprep.subr.mxu0 0.0
    %3038 = vmatpush1.msra.mxu0 0.0
    %3039 = vmatprep.subr.mxu0 0.0
    %3040 = vmatpush1.msra.mxu0 0.0
    %3041 = vmatprep.subr.mxu0 0.0
    %3042 = vmatpush1.msra.mxu0 0.0
    %3043 = vmatprep.subr.mxu0 0.0
    %3044 = vmatpush1.msra.mxu0 0.0
    %3045 = vmatprep.subr.mxu0 0.0
    %3046 = vmatpush1.msra.mxu0 0.0
    %3047 = vmatprep.subr.mxu0 0.0
    %3048 = vmatpush1.msra.mxu0 0.0
    %3049 = vmatprep.subr.mxu0 0.0
    %3050 = vmatpush1.msra.mxu0 0.0
    %3051 = vmatprep.subr.mxu0 0.0
    %3052 = vmatpush1.msra.mxu0 0.0
    %3053 = vmatprep.subr.mxu0 0.0
    %3054 = vmatpush1.msra.mxu0 0.0
    %3055 = vmatprep.subr.mxu0 0.0
    %3056 = vmatpush1.msra.mxu0 0.0
    %3057 = vmatprep.mubr.f32.mxu0 0.0
    %v3058 = vand.u32 %v38, 4294901760
    %3059 = vmatmul.mubr.f32.gmra.mrb[0].mxu0 %v3058
    %v3060 = vpop.f32.mrb[0].mxu0
    %v3061 = vadd.f32 %v2982, %v3060
    %v3062 = vpop.f32.mrb[0].mxu0
    %3063 = vmatprep.mubr.f32.mxu0 0.0
    %v3064 = vand.u32 %v41, 4294901760
    %3065 = vmatmul.mubr.f32.gmra.mrb[0].mxu0 %v3064
    %v3066 = vpop.f32.mrb[0].mxu0
    %v3067 = vadd.f32 %v2988, %v3066
    %v3068 = vpop.f32.mrb[0].mxu0
    %3069 = vdwg.mxu0
    %s3070 = scalar_lea.vmem %s0, 96
    %v3071 = vld [vmem:[%s3070] sm:$0xff]
    %v3072 = vld [vmem:[%s3070 + $0x8] sm:$0xff]
    %3073 = vmatprep.subr.mxu0 0.0
    %v3074 = vand.u32 %v3071, 4294901760
    %3075 = vmatpush1.msra.mxu0 %v3074
    %3076 = vmatprep.subr.mxu0 0.0
    %v3077 = vand.u32 %v3072, 4294901760
    %3078 = vmatpush1.msra.mxu0 %v3077
    %3079 = vmatprep.subr.mxu0 0.0
    %3080 = vmatpush1.msra.mxu0 0.0
    %3081 = vmatprep.subr.mxu0 0.0
    %3082 = vmatpush1.msra.mxu0 0.0
    %3083 = vmatprep.subr.mxu0 0.0
    %3084 = vmatpush1.msra.mxu0 0.0
    %3085 = vmatprep.subr.mxu0 0.0
    %3086 = vmatpush1.msra.mxu0 0.0
    %3087 = vmatprep.subr.mxu0 0.0
    %3088 = vmatpush1.msra.mxu0 0.0
    %3089 = vmatprep.subr.mxu0 0.0
    %3090 = vmatpush1.msra.mxu0 0.0
    %3091 = vmatprep.subr.mxu0 0.0
    %3092 = vmatpush1.msra.mxu0 0.0
    %3093 = vmatprep.subr.mxu0 0.0
    %3094 = vmatpush1.msra.mxu0 0.0
    %3095 = vmatprep.subr.mxu0 0.0
    %3096 = vmatpush1.msra.mxu0 0.0
    %3097 = vmatprep.subr.mxu0 0.0
    %3098 = vmatpush1.msra.mxu0 0.0
    %3099 = vmatprep.subr.mxu0 0.0
    %3100 = vmatpush1.msra.mxu0 0.0
    %3101 = vmatprep.subr.mxu0 0.0
    %3102 = vmatpush1.msra.mxu0 0.0
    %3103 = vmatprep.subr.mxu0 0.0
    %3104 = vmatpush1.msra.mxu0 0.0
    %3105 = vmatprep.subr.mxu0 0.0
    %3106 = vmatpush1.msra.mxu0 0.0
    %3107 = vmatprep.subr.mxu0 0.0
    %3108 = vmatpush1.msra.mxu0 0.0
    %3109 = vmatprep.subr.mxu0 0.0
    %3110 = vmatpush1.msra.mxu0 0.0
    %3111 = vmatprep.subr.mxu0 0.0
    %3112 = vmatpush1.msra.mxu0 0.0
    %3113 = vmatprep.subr.mxu0 0.0
    %3114 = vmatpush1.msra.mxu0 0.0
    %3115 = vmatprep.subr.mxu0 0.0
    %3116 = vmatpush1.msra.mxu0 0.0
    %3117 = vmatprep.subr.mxu0 0.0
    %3118 = vmatpush1.msra.mxu0 0.0
    %3119 = vmatprep.subr.mxu0 0.0
    %3120 = vmatpush1.msra.mxu0 0.0
    %3121 = vmatprep.subr.mxu0 0.0
    %3122 = vmatpush1.msra.mxu0 0.0
    %3123 = vmatprep.subr.mxu0 0.0
    %3124 = vmatpush1.msra.mxu0 0.0
    %3125 = vmatprep.subr.mxu0 0.0
    %3126 = vmatpush1.msra.mxu0 0.0
    %3127 = vmatprep.subr.mxu0 0.0
    %3128 = vmatpush1.msra.mxu0 0.0
    %3129 = vmatprep.subr.mxu0 0.0
    %3130 = vmatpush1.msra.mxu0 0.0
    %3131 = vmatprep.subr.mxu0 0.0
    %3132 = vmatpush1.msra.mxu0 0.0
    %3133 = vmatprep.subr.mxu0 0.0
    %3134 = vmatpush1.msra.mxu0 0.0
    %3135 = vmatprep.subr.mxu0 0.0
    %3136 = vmatpush1.msra.mxu0 0.0
    %3137 = vmatprep.subr.mxu0 0.0
    %3138 = vmatpush1.msra.mxu0 0.0
    %3139 = vmatprep.mubr.f32.mxu0 0.0
    %v3140 = vand.u32 %v38, 4294901760
    %v3141 = vsub.f32 %v38, %v3140
    %v3142 = vand.u32 %v3141, 4294901760
    %v3143 = vsub.f32 %v3141, %v3142
    %v3144 = vand.u32 %v3143, 4294901760
    %3145 = vmatmul.mubr.f32.gmra.mrb[0].mxu0 %v3144
    %v3146 = vpop.f32.mrb[0].mxu0
    %v3147 = vadd.f32 0.0, %v3146
    %v3148 = vpop.f32.mrb[0].mxu0
    %3149 = vmatprep.mubr.f32.mxu0 0.0
    %v3150 = vand.u32 %v41, 4294901760
    %v3151 = vsub.f32 %v41, %v3150
    %v3152 = vand.u32 %v3151, 4294901760
    %v3153 = vsub.f32 %v3151, %v3152
    %v3154 = vand.u32 %v3153, 4294901760
    %3155 = vmatmul.mubr.f32.gmra.mrb[0].mxu0 %v3154
    %v3156 = vpop.f32.mrb[0].mxu0
    %v3157 = vadd.f32 0.0, %v3156
    %v3158 = vpop.f32.mrb[0].mxu0
    %3159 = vdwg.mxu0
    %3160 = vmatprep.subr.mxu0 0.0
    %v3161 = vand.u32 %v3071, 4294901760
    %v3162 = vsub.f32 %v3071, %v3161
    %v3163 = vand.u32 %v3162, 4294901760
    %v3164 = vsub.f32 %v3162, %v3163
    %v3165 = vand.u32 %v3164, 4294901760
    %3166 = vmatpush1.msra.mxu0 %v3165
    %3167 = vmatprep.subr.mxu0 0.0
    %v3168 = vand.u32 %v3072, 4294901760
    %v3169 = vsub.f32 %v3072, %v3168
    %v3170 = vand.u32 %v3169, 4294901760
    %v3171 = vsub.f32 %v3169, %v3170
    %v3172 = vand.u32 %v3171, 4294901760
    %3173 = vmatpush1.msra.mxu0 %v3172
    %3174 = vmatprep.subr.mxu0 0.0
    %3175 = vmatpush1.msra.mxu0 0.0
    %3176 = vmatprep.subr.mxu0 0.0
    %3177 = vmatpush1.msra.mxu0 0.0
    %3178 = vmatprep.subr.mxu0 0.0
    %3179 = vmatpush1.msra.mxu0 0.0
    %3180 = vmatprep.subr.mxu0 0.0
    %3181 = vmatpush1.msra.mxu0 0.0
    %3182 = vmatprep.subr.mxu0 0.0
    %3183 = vmatpush1.msra.mxu0 0.0
    %3184 = vmatprep.subr.mxu0 0.0
    %3185 = vmatpush1.msra.mxu0 0.0
    %3186 = vmatprep.subr.mxu0 0.0
    %3187 = vmatpush1.msra.mxu0 0.0
    %3188 = vmatprep.subr.mxu0 0.0
    %3189 = vmatpush1.msra.mxu0 0.0
    %3190 = vmatprep.subr.mxu0 0.0
    %3191 = vmatpush1.msra.mxu0 0.0
    %3192 = vmatprep.subr.mxu0 0.0
    %3193 = vmatpush1.msra.mxu0 0.0
    %3194 = vmatprep.subr.mxu0 0.0
    %3195 = vmatpush1.msra.mxu0 0.0
    %3196 = vmatprep.subr.mxu0 0.0
    %3197 = vmatpush1.msra.mxu0 0.0
    %3198 = vmatprep.subr.mxu0 0.0
    %3199 = vmatpush1.msra.mxu0 0.0
    %3200 = vmatprep.subr.mxu0 0.0
    %3201 = vmatpush1.msra.mxu0 0.0
    %3202 = vmatprep.subr.mxu0 0.0
    %3203 = vmatpush1.msra.mxu0 0.0
    %3204 = vmatprep.subr.mxu0 0.0
    %3205 = vmatpush1.msra.mxu0 0.0
    %3206 = vmatprep.subr.mxu0 0.0
    %3207 = vmatpush1.msra.mxu0 0.0
    %3208 = vmatprep.subr.mxu0 0.0
    %3209 = vmatpush1.msra.mxu0 0.0
    %3210 = vmatprep.subr.mxu0 0.0
    %3211 = vmatpush1.msra.mxu0 0.0
    %3212 = vmatprep.subr.mxu0 0.0
    %3213 = vmatpush1.msra.mxu0 0.0
    %3214 = vmatprep.subr.mxu0 0.0
    %3215 = vmatpush1.msra.mxu0 0.0
    %3216 = vmatprep.subr.mxu0 0.0
    %3217 = vmatpush1.msra.mxu0 0.0
    %3218 = vmatprep.subr.mxu0 0.0
    %3219 = vmatpush1.msra.mxu0 0.0
    %3220 = vmatprep.subr.mxu0 0.0
    %3221 = vmatpush1.msra.mxu0 0.0
    %3222 = vmatprep.subr.mxu0 0.0
    %3223 = vmatpush1.msra.mxu0 0.0
    %3224 = vmatprep.subr.mxu0 0.0
    %3225 = vmatpush1.msra.mxu0 0.0
    %3226 = vmatprep.subr.mxu0 0.0
    %3227 = vmatpush1.msra.mxu0 0.0
    %3228 = vmatprep.subr.mxu0 0.0
    %3229 = vmatpush1.msra.mxu0 0.0
    %3230 = vmatprep.subr.mxu0 0.0
    %3231 = vmatpush1.msra.mxu0 0.0
    %3232 = vmatprep.subr.mxu0 0.0
    %3233 = vmatpush1.msra.mxu0 0.0
    %3234 = vmatprep.mubr.f32.mxu0 0.0
    %v3235 = vand.u32 %v38, 4294901760
    %3236 = vmatmul.mubr.f32.gmra.mrb[0].mxu0 %v3235
    %v3237 = vpop.f32.mrb[0].mxu0
    %v3238 = vadd.f32 %v3147, %v3237
    %v3239 = vpop.f32.mrb[0].mxu0
    %3240 = vmatprep.mubr.f32.mxu0 0.0
    %v3241 = vand.u32 %v41, 4294901760
    %3242 = vmatmul.mubr.f32.gmra.mrb[0].mxu0 %v3241
    %v3243 = vpop.f32.mrb[0].mxu0
    %v3244 = vadd.f32 %v3157, %v3243
    %v3245 = vpop.f32.mrb[0].mxu0
    %3246 = vdwg.mxu0
    %3247 = vmatprep.subr.mxu0 0.0
    %v3248 = vand.u32 %v3071, 4294901760
    %v3249 = vsub.f32 %v3071, %v3248
    %3250 = vmatpush1.msra.mxu0 %v3249
    %3251 = vmatprep.subr.mxu0 0.0
    %v3252 = vand.u32 %v3072, 4294901760
    %v3253 = vsub.f32 %v3072, %v3252
    %3254 = vmatpush1.msra.mxu0 %v3253
    %3255 = vmatprep.subr.mxu0 0.0
    %3256 = vmatpush1.msra.mxu0 0.0
    %3257 = vmatprep.subr.mxu0 0.0
    %3258 = vmatpush1.msra.mxu0 0.0
    %3259 = vmatprep.subr.mxu0 0.0
    %3260 = vmatpush1.msra.mxu0 0.0
    %3261 = vmatprep.subr.mxu0 0.0
    %3262 = vmatpush1.msra.mxu0 0.0
    %3263 = vmatprep.subr.mxu0 0.0
    %3264 = vmatpush1.msra.mxu0 0.0
    %3265 = vmatprep.subr.mxu0 0.0
    %3266 = vmatpush1.msra.mxu0 0.0
    %3267 = vmatprep.subr.mxu0 0.0
    %3268 = vmatpush1.msra.mxu0 0.0
    %3269 = vmatprep.subr.mxu0 0.0
    %3270 = vmatpush1.msra.mxu0 0.0
    %3271 = vmatprep.subr.mxu0 0.0
    %3272 = vmatpush1.msra.mxu0 0.0
    %3273 = vmatprep.subr.mxu0 0.0
    %3274 = vmatpush1.msra.mxu0 0.0
    %3275 = vmatprep.subr.mxu0 0.0
    %3276 = vmatpush1.msra.mxu0 0.0
    %3277 = vmatprep.subr.mxu0 0.0
    %3278 = vmatpush1.msra.mxu0 0.0
    %3279 = vmatprep.subr.mxu0 0.0
    %3280 = vmatpush1.msra.mxu0 0.0
    %3281 = vmatprep.subr.mxu0 0.0
    %3282 = vmatpush1.msra.mxu0 0.0
    %3283 = vmatprep.subr.mxu0 0.0
    %3284 = vmatpush1.msra.mxu0 0.0
    %3285 = vmatprep.subr.mxu0 0.0
    %3286 = vmatpush1.msra.mxu0 0.0
    %3287 = vmatprep.subr.mxu0 0.0
    %3288 = vmatpush1.msra.mxu0 0.0
    %3289 = vmatprep.subr.mxu0 0.0
    %3290 = vmatpush1.msra.mxu0 0.0
    %3291 = vmatprep.subr.mxu0 0.0
    %3292 = vmatpush1.msra.mxu0 0.0
    %3293 = vmatprep.subr.mxu0 0.0
    %3294 = vmatpush1.msra.mxu0 0.0
    %3295 = vmatprep.subr.mxu0 0.0
    %3296 = vmatpush1.msra.mxu0 0.0
    %3297 = vmatprep.subr.mxu0 0.0
    %3298 = vmatpush1.msra.mxu0 0.0
    %3299 = vmatprep.subr.mxu0 0.0
    %3300 = vmatpush1.msra.mxu0 0.0
    %3301 = vmatprep.subr.mxu0 0.0
    %3302 = vmatpush1.msra.mxu0 0.0
    %3303 = vmatprep.subr.mxu0 0.0
    %3304 = vmatpush1.msra.mxu0 0.0
    %3305 = vmatprep.subr.mxu0 0.0
    %3306 = vmatpush1.msra.mxu0 0.0
    %3307 = vmatprep.subr.mxu0 0.0
    %3308 = vmatpush1.msra.mxu0 0.0
    %3309 = vmatprep.subr.mxu0 0.0
    %3310 = vmatpush1.msra.mxu0 0.0
    %3311 = vmatprep.subr.mxu0 0.0
    %3312 = vmatpush1.msra.mxu0 0.0
    %3313 = vmatprep.subr.mxu0 0.0
    %3314 = vmatpush1.msra.mxu0 0.0
    %3315 = vmatprep.mubr.f32.mxu0 0.0
    %v3316 = vand.u32 %v38, 4294901760
    %v3317 = vsub.f32 %v38, %v3316
    %3318 = vmatmul.mubr.f32.gmra.mrb[0].mxu0 %v3317
    %v3319 = vpop.f32.mrb[0].mxu0
    %v3320 = vadd.f32 %v3238, %v3319
    %v3321 = vpop.f32.mrb[0].mxu0
    %3322 = vmatprep.mubr.f32.mxu0 0.0
    %v3323 = vand.u32 %v41, 4294901760
    %v3324 = vsub.f32 %v41, %v3323
    %3325 = vmatmul.mubr.f32.gmra.mrb[0].mxu0 %v3324
    %v3326 = vpop.f32.mrb[0].mxu0
    %v3327 = vadd.f32 %v3244, %v3326
    %v3328 = vpop.f32.mrb[0].mxu0
    %3329 = vdwg.mxu0
    %3330 = vmatprep.subr.mxu0 0.0
    %v3331 = vand.u32 %v3071, 4294901760
    %3332 = vmatpush1.msra.mxu0 %v3331
    %3333 = vmatprep.subr.mxu0 0.0
    %v3334 = vand.u32 %v3072, 4294901760
    %3335 = vmatpush1.msra.mxu0 %v3334
    %3336 = vmatprep.subr.mxu0 0.0
    %3337 = vmatpush1.msra.mxu0 0.0
    %3338 = vmatprep.subr.mxu0 0.0
    %3339 = vmatpush1.msra.mxu0 0.0
    %3340 = vmatprep.subr.mxu0 0.0
    %3341 = vmatpush1.msra.mxu0 0.0
    %3342 = vmatprep.subr.mxu0 0.0
    %3343 = vmatpush1.msra.mxu0 0.0
    %3344 = vmatprep.subr.mxu0 0.0
    %3345 = vmatpush1.msra.mxu0 0.0
    %3346 = vmatprep.subr.mxu0 0.0
    %3347 = vmatpush1.msra.mxu0 0.0
    %3348 = vmatprep.subr.mxu0 0.0
    %3349 = vmatpush1.msra.mxu0 0.0
    %3350 = vmatprep.subr.mxu0 0.0
    %3351 = vmatpush1.msra.mxu0 0.0
    %3352 = vmatprep.subr.mxu0 0.0
    %3353 = vmatpush1.msra.mxu0 0.0
    %3354 = vmatprep.subr.mxu0 0.0
    %3355 = vmatpush1.msra.mxu0 0.0
    %3356 = vmatprep.subr.mxu0 0.0
    %3357 = vmatpush1.msra.mxu0 0.0
    %3358 = vmatprep.subr.mxu0 0.0
    %3359 = vmatpush1.msra.mxu0 0.0
    %3360 = vmatprep.subr.mxu0 0.0
    %3361 = vmatpush1.msra.mxu0 0.0
    %3362 = vmatprep.subr.mxu0 0.0
    %3363 = vmatpush1.msra.mxu0 0.0
    %3364 = vmatprep.subr.mxu0 0.0
    %3365 = vmatpush1.msra.mxu0 0.0
    %3366 = vmatprep.subr.mxu0 0.0
    %3367 = vmatpush1.msra.mxu0 0.0
    %3368 = vmatprep.subr.mxu0 0.0
    %3369 = vmatpush1.msra.mxu0 0.0
    %3370 = vmatprep.subr.mxu0 0.0
    %3371 = vmatpush1.msra.mxu0 0.0
    %3372 = vmatprep.subr.mxu0 0.0
    %3373 = vmatpush1.msra.mxu0 0.0
    %3374 = vmatprep.subr.mxu0 0.0
    %3375 = vmatpush1.msra.mxu0 0.0
    %3376 = vmatprep.subr.mxu0 0.0
    %3377 = vmatpush1.msra.mxu0 0.0
    %3378 = vmatprep.subr.mxu0 0.0
    %3379 = vmatpush1.msra.mxu0 0.0
    %3380 = vmatprep.subr.mxu0 0.0
    %3381 = vmatpush1.msra.mxu0 0.0
    %3382 = vmatprep.subr.mxu0 0.0
    %3383 = vmatpush1.msra.mxu0 0.0
    %3384 = vmatprep.subr.mxu0 0.0
    %3385 = vmatpush1.msra.mxu0 0.0
    %3386 = vmatprep.subr.mxu0 0.0
    %3387 = vmatpush1.msra.mxu0 0.0
    %3388 = vmatprep.subr.mxu0 0.0
    %3389 = vmatpush1.msra.mxu0 0.0
    %3390 = vmatprep.subr.mxu0 0.0
    %3391 = vmatpush1.msra.mxu0 0.0
    %3392 = vmatprep.subr.mxu0 0.0
    %3393 = vmatpush1.msra.mxu0 0.0
    %3394 = vmatprep.subr.mxu0 0.0
    %3395 = vmatpush1.msra.mxu0 0.0
    %3396 = vmatprep.mubr.f32.mxu0 0.0
    %v3397 = vand.u32 %v38, 4294901760
    %v3398 = vsub.f32 %v38, %v3397
    %v3399 = vand.u32 %v3398, 4294901760
    %3400 = vmatmul.mubr.f32.gmra.mrb[0].mxu0 %v3399
    %v3401 = vpop.f32.mrb[0].mxu0
    %v3402 = vadd.f32 %v3320, %v3401
    %v3403 = vpop.f32.mrb[0].mxu0
    %3404 = vmatprep.mubr.f32.mxu0 0.0
    %v3405 = vand.u32 %v41, 4294901760
    %v3406 = vsub.f32 %v41, %v3405
    %v3407 = vand.u32 %v3406, 4294901760
    %3408 = vmatmul.mubr.f32.gmra.mrb[0].mxu0 %v3407
    %v3409 = vpop.f32.mrb[0].mxu0
    %v3410 = vadd.f32 %v3327, %v3409
    %v3411 = vpop.f32.mrb[0].mxu0
    %3412 = vdwg.mxu0
    %3413 = vmatprep.subr.mxu0 0.0
    %v3414 = vand.u32 %v3071, 4294901760
    %v3415 = vsub.f32 %v3071, %v3414
    %v3416 = vand.u32 %v3415, 4294901760
    %3417 = vmatpush1.msra.mxu0 %v3416
    %3418 = vmatprep.subr.mxu0 0.0
    %v3419 = vand.u32 %v3072, 4294901760
    %v3420 = vsub.f32 %v3072, %v3419
    %v3421 = vand.u32 %v3420, 4294901760
    %3422 = vmatpush1.msra.mxu0 %v3421
    %3423 = vmatprep.subr.mxu0 0.0
    %3424 = vmatpush1.msra.mxu0 0.0
    %3425 = vmatprep.subr.mxu0 0.0
    %3426 = vmatpush1.msra.mxu0 0.0
    %3427 = vmatprep.subr.mxu0 0.0
    %3428 = vmatpush1.msra.mxu0 0.0
    %3429 = vmatprep.subr.mxu0 0.0
    %3430 = vmatpush1.msra.mxu0 0.0
    %3431 = vmatprep.subr.mxu0 0.0
    %3432 = vmatpush1.msra.mxu0 0.0
    %3433 = vmatprep.subr.mxu0 0.0
    %3434 = vmatpush1.msra.mxu0 0.0
    %3435 = vmatprep.subr.mxu0 0.0
    %3436 = vmatpush1.msra.mxu0 0.0
    %3437 = vmatprep.subr.mxu0 0.0
    %3438 = vmatpush1.msra.mxu0 0.0
    %3439 = vmatprep.subr.mxu0 0.0
    %3440 = vmatpush1.msra.mxu0 0.0
    %3441 = vmatprep.subr.mxu0 0.0
    %3442 = vmatpush1.msra.mxu0 0.0
    %3443 = vmatprep.subr.mxu0 0.0
    %3444 = vmatpush1.msra.mxu0 0.0
    %3445 = vmatprep.subr.mxu0 0.0
    %3446 = vmatpush1.msra.mxu0 0.0
    %3447 = vmatprep.subr.mxu0 0.0
    %3448 = vmatpush1.msra.mxu0 0.0
    %3449 = vmatprep.subr.mxu0 0.0
    %3450 = vmatpush1.msra.mxu0 0.0
    %3451 = vmatprep.subr.mxu0 0.0
    %3452 = vmatpush1.msra.mxu0 0.0
    %3453 = vmatprep.subr.mxu0 0.0
    %3454 = vmatpush1.msra.mxu0 0.0
    %3455 = vmatprep.subr.mxu0 0.0
    %3456 = vmatpush1.msra.mxu0 0.0
    %3457 = vmatprep.subr.mxu0 0.0
    %3458 = vmatpush1.msra.mxu0 0.0
    %3459 = vmatprep.subr.mxu0 0.0
    %3460 = vmatpush1.msra.mxu0 0.0
    %3461 = vmatprep.subr.mxu0 0.0
    %3462 = vmatpush1.msra.mxu0 0.0
    %3463 = vmatprep.subr.mxu0 0.0
    %3464 = vmatpush1.msra.mxu0 0.0
    %3465 = vmatprep.subr.mxu0 0.0
    %3466 = vmatpush1.msra.mxu0 0.0
    %3467 = vmatprep.subr.mxu0 0.0
    %3468 = vmatpush1.msra.mxu0 0.0
    %3469 = vmatprep.subr.mxu0 0.0
    %3470 = vmatpush1.msra.mxu0 0.0
    %3471 = vmatprep.subr.mxu0 0.0
    %3472 = vmatpush1.msra.mxu0 0.0
    %3473 = vmatprep.subr.mxu0 0.0
    %3474 = vmatpush1.msra.mxu0 0.0
    %3475 = vmatprep.subr.mxu0 0.0
    %3476 = vmatpush1.msra.mxu0 0.0
    %3477 = vmatprep.subr.mxu0 0.0
    %3478 = vmatpush1.msra.mxu0 0.0
    %3479 = vmatprep.subr.mxu0 0.0
    %3480 = vmatpush1.msra.mxu0 0.0
    %3481 = vmatprep.subr.mxu0 0.0
    %3482 = vmatpush1.msra.mxu0 0.0
    %3483 = vmatprep.mubr.f32.mxu0 0.0
    %v3484 = vand.u32 %v38, 4294901760
    %3485 = vmatmul.mubr.f32.gmra.mrb[0].mxu0 %v3484
    %v3486 = vpop.f32.mrb[0].mxu0
    %v3487 = vadd.f32 %v3402, %v3486
    %v3488 = vpop.f32.mrb[0].mxu0
    %3489 = vmatprep.mubr.f32.mxu0 0.0
    %v3490 = vand.u32 %v41, 4294901760
    %3491 = vmatmul.mubr.f32.gmra.mrb[0].mxu0 %v3490
    %v3492 = vpop.f32.mrb[0].mxu0
    %v3493 = vadd.f32 %v3410, %v3492
    %v3494 = vpop.f32.mrb[0].mxu0
    %3495 = vdwg.mxu0
    %3496 = vmatprep.subr.mxu0 0.0
    %v3497 = vand.u32 %v3071, 4294901760
    %3498 = vmatpush1.msra.mxu0 %v3497
    %3499 = vmatprep.subr.mxu0 0.0
    %v3500 = vand.u32 %v3072, 4294901760
    %3501 = vmatpush1.msra.mxu0 %v3500
    %3502 = vmatprep.subr.mxu0 0.0
    %3503 = vmatpush1.msra.mxu0 0.0
    %3504 = vmatprep.subr.mxu0 0.0
    %3505 = vmatpush1.msra.mxu0 0.0
    %3506 = vmatprep.subr.mxu0 0.0
    %3507 = vmatpush1.msra.mxu0 0.0
    %3508 = vmatprep.subr.mxu0 0.0
    %3509 = vmatpush1.msra.mxu0 0.0
    %3510 = vmatprep.subr.mxu0 0.0
    %3511 = vmatpush1.msra.mxu0 0.0
    %3512 = vmatprep.subr.mxu0 0.0
    %3513 = vmatpush1.msra.mxu0 0.0
    %3514 = vmatprep.subr.mxu0 0.0
    %3515 = vmatpush1.msra.mxu0 0.0
    %3516 = vmatprep.subr.mxu0 0.0
    %3517 = vmatpush1.msra.mxu0 0.0
    %3518 = vmatprep.subr.mxu0 0.0
    %3519 = vmatpush1.msra.mxu0 0.0
    %3520 = vmatprep.subr.mxu0 0.0
    %3521 = vmatpush1.msra.mxu0 0.0
    %3522 = vmatprep.subr.mxu0 0.0
    %3523 = vmatpush1.msra.mxu0 0.0
    %3524 = vmatprep.subr.mxu0 0.0
    %3525 = vmatpush1.msra.mxu0 0.0
    %3526 = vmatprep.subr.mxu0 0.0
    %3527 = vmatpush1.msra.mxu0 0.0
    %3528 = vmatprep.subr.mxu0 0.0
    %3529 = vmatpush1.msra.mxu0 0.0
    %3530 = vmatprep.subr.mxu0 0.0
    %3531 = vmatpush1.msra.mxu0 0.0
    %3532 = vmatprep.subr.mxu0 0.0
    %3533 = vmatpush1.msra.mxu0 0.0
    %3534 = vmatprep.subr.mxu0 0.0
    %3535 = vmatpush1.msra.mxu0 0.0
    %3536 = vmatprep.subr.mxu0 0.0
    %3537 = vmatpush1.msra.mxu0 0.0
    %3538 = vmatprep.subr.mxu0 0.0
    %3539 = vmatpush1.msra.mxu0 0.0
    %3540 = vmatprep.subr.mxu0 0.0
    %3541 = vmatpush1.msra.mxu0 0.0
    %3542 = vmatprep.subr.mxu0 0.0
    %3543 = vmatpush1.msra.mxu0 0.0
    %3544 = vmatprep.subr.mxu0 0.0
    %3545 = vmatpush1.msra.mxu0 0.0
    %3546 = vmatprep.subr.mxu0 0.0
    %3547 = vmatpush1.msra.mxu0 0.0
    %3548 = vmatprep.subr.mxu0 0.0
    %3549 = vmatpush1.msra.mxu0 0.0
    %3550 = vmatprep.subr.mxu0 0.0
    %3551 = vmatpush1.msra.mxu0 0.0
    %3552 = vmatprep.subr.mxu0 0.0
    %3553 = vmatpush1.msra.mxu0 0.0
    %3554 = vmatprep.subr.mxu0 0.0
    %3555 = vmatpush1.msra.mxu0 0.0
    %3556 = vmatprep.subr.mxu0 0.0
    %3557 = vmatpush1.msra.mxu0 0.0
    %3558 = vmatprep.subr.mxu0 0.0
    %3559 = vmatpush1.msra.mxu0 0.0
    %3560 = vmatprep.subr.mxu0 0.0
    %3561 = vmatpush1.msra.mxu0 0.0
    %3562 = vmatprep.mubr.f32.mxu0 0.0
    %v3563 = vand.u32 %v38, 4294901760
    %3564 = vmatmul.mubr.f32.gmra.mrb[0].mxu0 %v3563
    %v3565 = vpop.f32.mrb[0].mxu0
    %v3566 = vadd.f32 %v3487, %v3565
    %v3567 = vpop.f32.mrb[0].mxu0
    %3568 = vmatprep.mubr.f32.mxu0 0.0
    %v3569 = vand.u32 %v41, 4294901760
    %3570 = vmatmul.mubr.f32.gmra.mrb[0].mxu0 %v3569
    %v3571 = vpop.f32.mrb[0].mxu0
    %v3572 = vadd.f32 %v3493, %v3571
    %v3573 = vpop.f32.mrb[0].mxu0
    %3574 = vdwg.mxu0
    %s3575 = scalar_lea.vmem %s0, 112
    %v3576 = vld [vmem:[%s3575] sm:$0xff]
    %v3577 = vld [vmem:[%s3575 + $0x8] sm:$0xff]
    %3578 = vmatprep.subr.mxu0 0.0
    %v3579 = vand.u32 %v3576, 4294901760
    %3580 = vmatpush1.msra.mxu0 %v3579
    %3581 = vmatprep.subr.mxu0 0.0
    %v3582 = vand.u32 %v3577, 4294901760
    %3583 = vmatpush1.msra.mxu0 %v3582
    %3584 = vmatprep.subr.mxu0 0.0
    %3585 = vmatpush1.msra.mxu0 0.0
    %3586 = vmatprep.subr.mxu0 0.0
    %3587 = vmatpush1.msra.mxu0 0.0
    %3588 = vmatprep.subr.mxu0 0.0
    %3589 = vmatpush1.msra.mxu0 0.0
    %3590 = vmatprep.subr.mxu0 0.0
    %3591 = vmatpush1.msra.mxu0 0.0
    %3592 = vmatprep.subr.mxu0 0.0
    %3593 = vmatpush1.msra.mxu0 0.0
    %3594 = vmatprep.subr.mxu0 0.0
    %3595 = vmatpush1.msra.mxu0 0.0
    %3596 = vmatprep.subr.mxu0 0.0
    %3597 = vmatpush1.msra.mxu0 0.0
    %3598 = vmatprep.subr.mxu0 0.0
    %3599 = vmatpush1.msra.mxu0 0.0
    %3600 = vmatprep.subr.mxu0 0.0
    %3601 = vmatpush1.msra.mxu0 0.0
    %3602 = vmatprep.subr.mxu0 0.0
    %3603 = vmatpush1.msra.mxu0 0.0
    %3604 = vmatprep.subr.mxu0 0.0
    %3605 = vmatpush1.msra.mxu0 0.0
    %3606 = vmatprep.subr.mxu0 0.0
    %3607 = vmatpush1.msra.mxu0 0.0
    %3608 = vmatprep.subr.mxu0 0.0
    %3609 = vmatpush1.msra.mxu0 0.0
    %3610 = vmatprep.subr.mxu0 0.0
    %3611 = vmatpush1.msra.mxu0 0.0
    %3612 = vmatprep.subr.mxu0 0.0
    %3613 = vmatpush1.msra.mxu0 0.0
    %3614 = vmatprep.subr.mxu0 0.0
    %3615 = vmatpush1.msra.mxu0 0.0
    %3616 = vmatprep.subr.mxu0 0.0
    %3617 = vmatpush1.msra.mxu0 0.0
    %3618 = vmatprep.subr.mxu0 0.0
    %3619 = vmatpush1.msra.mxu0 0.0
    %3620 = vmatprep.subr.mxu0 0.0
    %3621 = vmatpush1.msra.mxu0 0.0
    %3622 = vmatprep.subr.mxu0 0.0
    %3623 = vmatpush1.msra.mxu0 0.0
    %3624 = vmatprep.subr.mxu0 0.0
    %3625 = vmatpush1.msra.mxu0 0.0
    %3626 = vmatprep.subr.mxu0 0.0
    %3627 = vmatpush1.msra.mxu0 0.0
    %3628 = vmatprep.subr.mxu0 0.0
    %3629 = vmatpush1.msra.mxu0 0.0
    %3630 = vmatprep.subr.mxu0 0.0
    %3631 = vmatpush1.msra.mxu0 0.0
    %3632 = vmatprep.subr.mxu0 0.0
    %3633 = vmatpush1.msra.mxu0 0.0
    %3634 = vmatprep.subr.mxu0 0.0
    %3635 = vmatpush1.msra.mxu0 0.0
    %3636 = vmatprep.subr.mxu0 0.0
    %3637 = vmatpush1.msra.mxu0 0.0
    %3638 = vmatprep.subr.mxu0 0.0
    %3639 = vmatpush1.msra.mxu0 0.0
    %3640 = vmatprep.subr.mxu0 0.0
    %3641 = vmatpush1.msra.mxu0 0.0
    %3642 = vmatprep.subr.mxu0 0.0
    %3643 = vmatpush1.msra.mxu0 0.0
    %3644 = vmatprep.mubr.f32.mxu0 0.0
    %v3645 = vand.u32 %v38, 4294901760
    %v3646 = vsub.f32 %v38, %v3645
    %v3647 = vand.u32 %v3646, 4294901760
    %v3648 = vsub.f32 %v3646, %v3647
    %v3649 = vand.u32 %v3648, 4294901760
    %3650 = vmatmul.mubr.f32.gmra.mrb[0].mxu0 %v3649
    %v3651 = vpop.f32.mrb[0].mxu0
    %v3652 = vadd.f32 0.0, %v3651
    %v3653 = vpop.f32.mrb[0].mxu0
    %3654 = vmatprep.mubr.f32.mxu0 0.0
    %v3655 = vand.u32 %v41, 4294901760
    %v3656 = vsub.f32 %v41, %v3655
    %v3657 = vand.u32 %v3656, 4294901760
    %v3658 = vsub.f32 %v3656, %v3657
    %v3659 = vand.u32 %v3658, 4294901760
    %3660 = vmatmul.mubr.f32.gmra.mrb[0].mxu0 %v3659
    %v3661 = vpop.f32.mrb[0].mxu0
    %v3662 = vadd.f32 0.0, %v3661
    %v3663 = vpop.f32.mrb[0].mxu0
    %3664 = vdwg.mxu0
    %3665 = vmatprep.subr.mxu0 0.0
    %v3666 = vand.u32 %v3576, 4294901760
    %v3667 = vsub.f32 %v3576, %v3666
    %v3668 = vand.u32 %v3667, 4294901760
    %v3669 = vsub.f32 %v3667, %v3668
    %v3670 = vand.u32 %v3669, 4294901760
    %3671 = vmatpush1.msra.mxu0 %v3670
    %3672 = vmatprep.subr.mxu0 0.0
    %v3673 = vand.u32 %v3577, 4294901760
    %v3674 = vsub.f32 %v3577, %v3673
    %v3675 = vand.u32 %v3674, 4294901760
    %v3676 = vsub.f32 %v3674, %v3675
    %v3677 = vand.u32 %v3676, 4294901760
    %3678 = vmatpush1.msra.mxu0 %v3677
    %3679 = vmatprep.subr.mxu0 0.0
    %3680 = vmatpush1.msra.mxu0 0.0
    %3681 = vmatprep.subr.mxu0 0.0
    %3682 = vmatpush1.msra.mxu0 0.0
    %3683 = vmatprep.subr.mxu0 0.0
    %3684 = vmatpush1.msra.mxu0 0.0
    %3685 = vmatprep.subr.mxu0 0.0
    %3686 = vmatpush1.msra.mxu0 0.0
    %3687 = vmatprep.subr.mxu0 0.0
    %3688 = vmatpush1.msra.mxu0 0.0
    %3689 = vmatprep.subr.mxu0 0.0
    %3690 = vmatpush1.msra.mxu0 0.0
    %3691 = vmatprep.subr.mxu0 0.0
    %3692 = vmatpush1.msra.mxu0 0.0
    %3693 = vmatprep.subr.mxu0 0.0
    %3694 = vmatpush1.msra.mxu0 0.0
    %3695 = vmatprep.subr.mxu0 0.0
    %3696 = vmatpush1.msra.mxu0 0.0
    %3697 = vmatprep.subr.mxu0 0.0
    %3698 = vmatpush1.msra.mxu0 0.0
    %3699 = vmatprep.subr.mxu0 0.0
    %3700 = vmatpush1.msra.mxu0 0.0
    %3701 = vmatprep.subr.mxu0 0.0
    %3702 = vmatpush1.msra.mxu0 0.0
    %3703 = vmatprep.subr.mxu0 0.0
    %3704 = vmatpush1.msra.mxu0 0.0
    %3705 = vmatprep.subr.mxu0 0.0
    %3706 = vmatpush1.msra.mxu0 0.0
    %3707 = vmatprep.subr.mxu0 0.0
    %3708 = vmatpush1.msra.mxu0 0.0
    %3709 = vmatprep.subr.mxu0 0.0
    %3710 = vmatpush1.msra.mxu0 0.0
    %3711 = vmatprep.subr.mxu0 0.0
    %3712 = vmatpush1.msra.mxu0 0.0
    %3713 = vmatprep.subr.mxu0 0.0
    %3714 = vmatpush1.msra.mxu0 0.0
    %3715 = vmatprep.subr.mxu0 0.0
    %3716 = vmatpush1.msra.mxu0 0.0
    %3717 = vmatprep.subr.mxu0 0.0
    %3718 = vmatpush1.msra.mxu0 0.0
    %3719 = vmatprep.subr.mxu0 0.0
    %3720 = vmatpush1.msra.mxu0 0.0
    %3721 = vmatprep.subr.mxu0 0.0
    %3722 = vmatpush1.msra.mxu0 0.0
    %3723 = vmatprep.subr.mxu0 0.0
    %3724 = vmatpush1.msra.mxu0 0.0
    %3725 = vmatprep.subr.mxu0 0.0
    %3726 = vmatpush1.msra.mxu0 0.0
    %3727 = vmatprep.subr.mxu0 0.0
    %3728 = vmatpush1.msra.mxu0 0.0
    %3729 = vmatprep.subr.mxu0 0.0
    %3730 = vmatpush1.msra.mxu0 0.0
    %3731 = vmatprep.subr.mxu0 0.0
    %3732 = vmatpush1.msra.mxu0 0.0
    %3733 = vmatprep.subr.mxu0 0.0
    %3734 = vmatpush1.msra.mxu0 0.0
    %3735 = vmatprep.subr.mxu0 0.0
    %3736 = vmatpush1.msra.mxu0 0.0
    %3737 = vmatprep.subr.mxu0 0.0
    %3738 = vmatpush1.msra.mxu0 0.0
    %3739 = vmatprep.mubr.f32.mxu0 0.0
    %v3740 = vand.u32 %v38, 4294901760
    %3741 = vmatmul.mubr.f32.gmra.mrb[0].mxu0 %v3740
    %v3742 = vpop.f32.mrb[0].mxu0
    %v3743 = vadd.f32 %v3652, %v3742
    %v3744 = vpop.f32.mrb[0].mxu0
    %3745 = vmatprep.mubr.f32.mxu0 0.0
    %v3746 = vand.u32 %v41, 4294901760
    %3747 = vmatmul.mubr.f32.gmra.mrb[0].mxu0 %v3746
    %v3748 = vpop.f32.mrb[0].mxu0
    %v3749 = vadd.f32 %v3662, %v3748
    %v3750 = vpop.f32.mrb[0].mxu0
    %3751 = vdwg.mxu0
    %3752 = vmatprep.subr.mxu0 0.0
    %v3753 = vand.u32 %v3576, 4294901760
    %v3754 = vsub.f32 %v3576, %v3753
    %3755 = vmatpush1.msra.mxu0 %v3754
    %3756 = vmatprep.subr.mxu0 0.0
    %v3757 = vand.u32 %v3577, 4294901760
    %v3758 = vsub.f32 %v3577, %v3757
    %3759 = vmatpush1.msra.mxu0 %v3758
    %3760 = vmatprep.subr.mxu0 0.0
    %3761 = vmatpush1.msra.mxu0 0.0
    %3762 = vmatprep.subr.mxu0 0.0
    %3763 = vmatpush1.msra.mxu0 0.0
    %3764 = vmatprep.subr.mxu0 0.0
    %3765 = vmatpush1.msra.mxu0 0.0
    %3766 = vmatprep.subr.mxu0 0.0
    %3767 = vmatpush1.msra.mxu0 0.0
    %3768 = vmatprep.subr.mxu0 0.0
    %3769 = vmatpush1.msra.mxu0 0.0
    %3770 = vmatprep.subr.mxu0 0.0
    %3771 = vmatpush1.msra.mxu0 0.0
    %3772 = vmatprep.subr.mxu0 0.0
    %3773 = vmatpush1.msra.mxu0 0.0
    %3774 = vmatprep.subr.mxu0 0.0
    %3775 = vmatpush1.msra.mxu0 0.0
    %3776 = vmatprep.subr.mxu0 0.0
    %3777 = vmatpush1.msra.mxu0 0.0
    %3778 = vmatprep.subr.mxu0 0.0
    %3779 = vmatpush1.msra.mxu0 0.0
    %3780 = vmatprep.subr.mxu0 0.0
    %3781 = vmatpush1.msra.mxu0 0.0
    %3782 = vmatprep.subr.mxu0 0.0
    %3783 = vmatpush1.msra.mxu0 0.0
    %3784 = vmatprep.subr.mxu0 0.0
    %3785 = vmatpush1.msra.mxu0 0.0
    %3786 = vmatprep.subr.mxu0 0.0
    %3787 = vmatpush1.msra.mxu0 0.0
    %3788 = vmatprep.subr.mxu0 0.0
    %3789 = vmatpush1.msra.mxu0 0.0
    %3790 = vmatprep.subr.mxu0 0.0
    %3791 = vmatpush1.msra.mxu0 0.0
    %3792 = vmatprep.subr.mxu0 0.0
    %3793 = vmatpush1.msra.mxu0 0.0
    %3794 = vmatprep.subr.mxu0 0.0
    %3795 = vmatpush1.msra.mxu0 0.0
    %3796 = vmatprep.subr.mxu0 0.0
    %3797 = vmatpush1.msra.mxu0 0.0
    %3798 = vmatprep.subr.mxu0 0.0
    %3799 = vmatpush1.msra.mxu0 0.0
    %3800 = vmatprep.subr.mxu0 0.0
    %3801 = vmatpush1.msra.mxu0 0.0
    %3802 = vmatprep.subr.mxu0 0.0
    %3803 = vmatpush1.msra.mxu0 0.0
    %3804 = vmatprep.subr.mxu0 0.0
    %3805 = vmatpush1.msra.mxu0 0.0
    %3806 = vmatprep.subr.mxu0 0.0
    %3807 = vmatpush1.msra.mxu0 0.0
    %3808 = vmatprep.subr.mxu0 0.0
    %3809 = vmatpush1.msra.mxu0 0.0
    %3810 = vmatprep.subr.mxu0 0.0
    %3811 = vmatpush1.msra.mxu0 0.0
    %3812 = vmatprep.subr.mxu0 0.0
    %3813 = vmatpush1.msra.mxu0 0.0
    %3814 = vmatprep.subr.mxu0 0.0
    %3815 = vmatpush1.msra.mxu0 0.0
    %3816 = vmatprep.subr.mxu0 0.0
    %3817 = vmatpush1.msra.mxu0 0.0
    %3818 = vmatprep.subr.mxu0 0.0
    %3819 = vmatpush1.msra.mxu0 0.0
    %3820 = vmatprep.mubr.f32.mxu0 0.0
    %v3821 = vand.u32 %v38, 4294901760
    %v3822 = vsub.f32 %v38, %v3821
    %3823 = vmatmul.mubr.f32.gmra.mrb[0].mxu0 %v3822
    %v3824 = vpop.f32.mrb[0].mxu0
    %v3825 = vadd.f32 %v3743, %v3824
    %v3826 = vpop.f32.mrb[0].mxu0
    %3827 = vmatprep.mubr.f32.mxu0 0.0
    %v3828 = vand.u32 %v41, 4294901760
    %v3829 = vsub.f32 %v41, %v3828
    %3830 = vmatmul.mubr.f32.gmra.mrb[0].mxu0 %v3829
    %v3831 = vpop.f32.mrb[0].mxu0
    %v3832 = vadd.f32 %v3749, %v3831
    %v3833 = vpop.f32.mrb[0].mxu0
    %3834 = vdwg.mxu0
    %3835 = vmatprep.subr.mxu0 0.0
    %v3836 = vand.u32 %v3576, 4294901760
    %3837 = vmatpush1.msra.mxu0 %v3836
    %3838 = vmatprep.subr.mxu0 0.0
    %v3839 = vand.u32 %v3577, 4294901760
    %3840 = vmatpush1.msra.mxu0 %v3839
    %3841 = vmatprep.subr.mxu0 0.0
    %3842 = vmatpush1.msra.mxu0 0.0
    %3843 = vmatprep.subr.mxu0 0.0
    %3844 = vmatpush1.msra.mxu0 0.0
    %3845 = vmatprep.subr.mxu0 0.0
    %3846 = vmatpush1.msra.mxu0 0.0
    %3847 = vmatprep.subr.mxu0 0.0
    %3848 = vmatpush1.msra.mxu0 0.0
    %3849 = vmatprep.subr.mxu0 0.0
    %3850 = vmatpush1.msra.mxu0 0.0
    %3851 = vmatprep.subr.mxu0 0.0
    %3852 = vmatpush1.msra.mxu0 0.0
    %3853 = vmatprep.subr.mxu0 0.0
    %3854 = vmatpush1.msra.mxu0 0.0
    %3855 = vmatprep.subr.mxu0 0.0
    %3856 = vmatpush1.msra.mxu0 0.0
    %3857 = vmatprep.subr.mxu0 0.0
    %3858 = vmatpush1.msra.mxu0 0.0
    %3859 = vmatprep.subr.mxu0 0.0
    %3860 = vmatpush1.msra.mxu0 0.0
    %3861 = vmatprep.subr.mxu0 0.0
    %3862 = vmatpush1.msra.mxu0 0.0
    %3863 = vmatprep.subr.mxu0 0.0
    %3864 = vmatpush1.msra.mxu0 0.0
    %3865 = vmatprep.subr.mxu0 0.0
    %3866 = vmatpush1.msra.mxu0 0.0
    %3867 = vmatprep.subr.mxu0 0.0
    %3868 = vmatpush1.msra.mxu0 0.0
    %3869 = vmatprep.subr.mxu0 0.0
    %3870 = vmatpush1.msra.mxu0 0.0
    %3871 = vmatprep.subr.mxu0 0.0
    %3872 = vmatpush1.msra.mxu0 0.0
    %3873 = vmatprep.subr.mxu0 0.0
    %3874 = vmatpush1.msra.mxu0 0.0
    %3875 = vmatprep.subr.mxu0 0.0
    %3876 = vmatpush1.msra.mxu0 0.0
    %3877 = vmatprep.subr.mxu0 0.0
    %3878 = vmatpush1.msra.mxu0 0.0
    %3879 = vmatprep.subr.mxu0 0.0
    %3880 = vmatpush1.msra.mxu0 0.0
    %3881 = vmatprep.subr.mxu0 0.0
    %3882 = vmatpush1.msra.mxu0 0.0
    %3883 = vmatprep.subr.mxu0 0.0
    %3884 = vmatpush1.msra.mxu0 0.0
    %3885 = vmatprep.subr.mxu0 0.0
    %3886 = vmatpush1.msra.mxu0 0.0
    %3887 = vmatprep.subr.mxu0 0.0
    %3888 = vmatpush1.msra.mxu0 0.0
    %3889 = vmatprep.subr.mxu0 0.0
    %3890 = vmatpush1.msra.mxu0 0.0
    %3891 = vmatprep.subr.mxu0 0.0
    %3892 = vmatpush1.msra.mxu0 0.0
    %3893 = vmatprep.subr.mxu0 0.0
    %3894 = vmatpush1.msra.mxu0 0.0
    %3895 = vmatprep.subr.mxu0 0.0
    %3896 = vmatpush1.msra.mxu0 0.0
    %3897 = vmatprep.subr.mxu0 0.0
    %3898 = vmatpush1.msra.mxu0 0.0
    %3899 = vmatprep.subr.mxu0 0.0
    %3900 = vmatpush1.msra.mxu0 0.0
    %3901 = vmatprep.mubr.f32.mxu0 0.0
    %v3902 = vand.u32 %v38, 4294901760
    %v3903 = vsub.f32 %v38, %v3902
    %v3904 = vand.u32 %v3903, 4294901760
    %3905 = vmatmul.mubr.f32.gmra.mrb[0].mxu0 %v3904
    %v3906 = vpop.f32.mrb[0].mxu0
    %v3907 = vadd.f32 %v3825, %v3906
    %v3908 = vpop.f32.mrb[0].mxu0
    %3909 = vmatprep.mubr.f32.mxu0 0.0
    %v3910 = vand.u32 %v41, 4294901760
    %v3911 = vsub.f32 %v41, %v3910
    %v3912 = vand.u32 %v3911, 4294901760
    %3913 = vmatmul.mubr.f32.gmra.mrb[0].mxu0 %v3912
    %v3914 = vpop.f32.mrb[0].mxu0
    %v3915 = vadd.f32 %v3832, %v3914
    %v3916 = vpop.f32.mrb[0].mxu0
    %3917 = vdwg.mxu0
    %3918 = vmatprep.subr.mxu0 0.0
    %v3919 = vand.u32 %v3576, 4294901760
    %v3920 = vsub.f32 %v3576, %v3919
    %v3921 = vand.u32 %v3920, 4294901760
    %3922 = vmatpush1.msra.mxu0 %v3921
    %3923 = vmatprep.subr.mxu0 0.0
    %v3924 = vand.u32 %v3577, 4294901760
    %v3925 = vsub.f32 %v3577, %v3924
    %v3926 = vand.u32 %v3925, 4294901760
    %3927 = vmatpush1.msra.mxu0 %v3926
    %3928 = vmatprep.subr.mxu0 0.0
    %3929 = vmatpush1.msra.mxu0 0.0
    %3930 = vmatprep.subr.mxu0 0.0
    %3931 = vmatpush1.msra.mxu0 0.0
    %3932 = vmatprep.subr.mxu0 0.0
    %3933 = vmatpush1.msra.mxu0 0.0
    %3934 = vmatprep.subr.mxu0 0.0
    %3935 = vmatpush1.msra.mxu0 0.0
    %3936 = vmatprep.subr.mxu0 0.0
    %3937 = vmatpush1.msra.mxu0 0.0
    %3938 = vmatprep.subr.mxu0 0.0
    %3939 = vmatpush1.msra.mxu0 0.0
    %3940 = vmatprep.subr.mxu0 0.0
    %3941 = vmatpush1.msra.mxu0 0.0
    %3942 = vmatprep.subr.mxu0 0.0
    %3943 = vmatpush1.msra.mxu0 0.0
    %3944 = vmatprep.subr.mxu0 0.0
    %3945 = vmatpush1.msra.mxu0 0.0
    %3946 = vmatprep.subr.mxu0 0.0
    %3947 = vmatpush1.msra.mxu0 0.0
    %3948 = vmatprep.subr.mxu0 0.0
    %3949 = vmatpush1.msra.mxu0 0.0
    %3950 = vmatprep.subr.mxu0 0.0
    %3951 = vmatpush1.msra.mxu0 0.0
    %3952 = vmatprep.subr.mxu0 0.0
    %3953 = vmatpush1.msra.mxu0 0.0
    %3954 = vmatprep.subr.mxu0 0.0
    %3955 = vmatpush1.msra.mxu0 0.0
    %3956 = vmatprep.subr.mxu0 0.0
    %3957 = vmatpush1.msra.mxu0 0.0
    %3958 = vmatprep.subr.mxu0 0.0
    %3959 = vmatpush1.msra.mxu0 0.0
    %3960 = vmatprep.subr.mxu0 0.0
    %3961 = vmatpush1.msra.mxu0 0.0
    %3962 = vmatprep.subr.mxu0 0.0
    %3963 = vmatpush1.msra.mxu0 0.0
    %3964 = vmatprep.subr.mxu0 0.0
    %3965 = vmatpush1.msra.mxu0 0.0
    %3966 = vmatprep.subr.mxu0 0.0
    %3967 = vmatpush1.msra.mxu0 0.0
    %3968 = vmatprep.subr.mxu0 0.0
    %3969 = vmatpush1.msra.mxu0 0.0
    %3970 = vmatprep.subr.mxu0 0.0
    %3971 = vmatpush1.msra.mxu0 0.0
    %3972 = vmatprep.subr.mxu0 0.0
    %3973 = vmatpush1.msra.mxu0 0.0
    %3974 = vmatprep.subr.mxu0 0.0
    %3975 = vmatpush1.msra.mxu0 0.0
    %3976 = vmatprep.subr.mxu0 0.0
    %3977 = vmatpush1.msra.mxu0 0.0
    %3978 = vmatprep.subr.mxu0 0.0
    %3979 = vmatpush1.msra.mxu0 0.0
    %3980 = vmatprep.subr.mxu0 0.0
    %3981 = vmatpush1.msra.mxu0 0.0
    %3982 = vmatprep.subr.mxu0 0.0
    %3983 = vmatpush1.msra.mxu0 0.0
    %3984 = vmatprep.subr.mxu0 0.0
    %3985 = vmatpush1.msra.mxu0 0.0
    %3986 = vmatprep.subr.mxu0 0.0
    %3987 = vmatpush1.msra.mxu0 0.0
    %3988 = vmatprep.mubr.f32.mxu0 0.0
    %v3989 = vand.u32 %v38, 4294901760
    %3990 = vmatmul.mubr.f32.gmra.mrb[0].mxu0 %v3989
    %v3991 = vpop.f32.mrb[0].mxu0
    %v3992 = vadd.f32 %v3907, %v3991
    %v3993 = vpop.f32.mrb[0].mxu0
    %3994 = vmatprep.mubr.f32.mxu0 0.0
    %v3995 = vand.u32 %v41, 4294901760
    %3996 = vmatmul.mubr.f32.gmra.mrb[0].mxu0 %v3995
    %v3997 = vpop.f32.mrb[0].mxu0
    %v3998 = vadd.f32 %v3915, %v3997
    %v3999 = vpop.f32.mrb[0].mxu0
    %4000 = vdwg.mxu0
    %4001 = vmatprep.subr.mxu0 0.0
    %v4002 = vand.u32 %v3576, 4294901760
    %4003 = vmatpush1.msra.mxu0 %v4002
    %4004 = vmatprep.subr.mxu0 0.0
    %v4005 = vand.u32 %v3577, 4294901760
    %4006 = vmatpush1.msra.mxu0 %v4005
    %4007 = vmatprep.subr.mxu0 0.0
    %4008 = vmatpush1.msra.mxu0 0.0
    %4009 = vmatprep.subr.mxu0 0.0
    %4010 = vmatpush1.msra.mxu0 0.0
    %4011 = vmatprep.subr.mxu0 0.0
    %4012 = vmatpush1.msra.mxu0 0.0
    %4013 = vmatprep.subr.mxu0 0.0
    %4014 = vmatpush1.msra.mxu0 0.0
    %4015 = vmatprep.subr.mxu0 0.0
    %4016 = vmatpush1.msra.mxu0 0.0
    %4017 = vmatprep.subr.mxu0 0.0
    %4018 = vmatpush1.msra.mxu0 0.0
    %4019 = vmatprep.subr.mxu0 0.0
    %4020 = vmatpush1.msra.mxu0 0.0
    %4021 = vmatprep.subr.mxu0 0.0
    %4022 = vmatpush1.msra.mxu0 0.0
    %4023 = vmatprep.subr.mxu0 0.0
    %4024 = vmatpush1.msra.mxu0 0.0
    %4025 = vmatprep.subr.mxu0 0.0
    %4026 = vmatpush1.msra.mxu0 0.0
    %4027 = vmatprep.subr.mxu0 0.0
    %4028 = vmatpush1.msra.mxu0 0.0
    %4029 = vmatprep.subr.mxu0 0.0
    %4030 = vmatpush1.msra.mxu0 0.0
    %4031 = vmatprep.subr.mxu0 0.0
    %4032 = vmatpush1.msra.mxu0 0.0
    %4033 = vmatprep.subr.mxu0 0.0
    %4034 = vmatpush1.msra.mxu0 0.0
    %4035 = vmatprep.subr.mxu0 0.0
    %4036 = vmatpush1.msra.mxu0 0.0
    %4037 = vmatprep.subr.mxu0 0.0
    %4038 = vmatpush1.msra.mxu0 0.0
    %4039 = vmatprep.subr.mxu0 0.0
    %4040 = vmatpush1.msra.mxu0 0.0
    %4041 = vmatprep.subr.mxu0 0.0
    %4042 = vmatpush1.msra.mxu0 0.0
    %4043 = vmatprep.subr.mxu0 0.0
    %4044 = vmatpush1.msra.mxu0 0.0
    %4045 = vmatprep.subr.mxu0 0.0
    %4046 = vmatpush1.msra.mxu0 0.0
    %4047 = vmatprep.subr.mxu0 0.0
    %4048 = vmatpush1.msra.mxu0 0.0
    %4049 = vmatprep.subr.mxu0 0.0
    %4050 = vmatpush1.msra.mxu0 0.0
    %4051 = vmatprep.subr.mxu0 0.0
    %4052 = vmatpush1.msra.mxu0 0.0
    %4053 = vmatprep.subr.mxu0 0.0
    %4054 = vmatpush1.msra.mxu0 0.0
    %4055 = vmatprep.subr.mxu0 0.0
    %4056 = vmatpush1.msra.mxu0 0.0
    %4057 = vmatprep.subr.mxu0 0.0
    %4058 = vmatpush1.msra.mxu0 0.0
    %4059 = vmatprep.subr.mxu0 0.0
    %4060 = vmatpush1.msra.mxu0 0.0
    %4061 = vmatprep.subr.mxu0 0.0
    %4062 = vmatpush1.msra.mxu0 0.0
    %4063 = vmatprep.subr.mxu0 0.0
    %4064 = vmatpush1.msra.mxu0 0.0
    %4065 = vmatprep.subr.mxu0 0.0
    %4066 = vmatpush1.msra.mxu0 0.0
    %4067 = vmatprep.mubr.f32.mxu0 0.0
    %v4068 = vand.u32 %v38, 4294901760
    %4069 = vmatmul.mubr.f32.gmra.mrb[0].mxu0 %v4068
    %v4070 = vpop.f32.mrb[0].mxu0
    %v4071 = vadd.f32 %v3992, %v4070
    %v4072 = vpop.f32.mrb[0].mxu0
    %4073 = vmatprep.mubr.f32.mxu0 0.0
    %v4074 = vand.u32 %v41, 4294901760
    %4075 = vmatmul.mubr.f32.gmra.mrb[0].mxu0 %v4074
    %v4076 = vpop.f32.mrb[0].mxu0
    %v4077 = vadd.f32 %v3998, %v4076
    %v4078 = vpop.f32.mrb[0].mxu0
    %4079 = vdwg.mxu0
    %v4080 = vld [vmem:[%s2] sm:$0xff]
    %v4081 = vld [vmem:[%s2 + $0x8] sm:$0xff]
    %v4082 = vld [vmem:[%s2 + $0x10] sm:$0xff]
    %v4083 = vld [vmem:[%s2 + $0x18] sm:$0xff]
    %v4084 = vld [vmem:[%s2 + $0x20] sm:$0xff]
    %v4085 = vld [vmem:[%s2 + $0x28] sm:$0xff]
    %v4086 = vld [vmem:[%s2 + $0x30] sm:$0xff]
    %v4087 = vld [vmem:[%s2 + $0x38] sm:$0xff]
    %v4088 = vld [vmem:[%s3] sm:$0x3]
    %v4090 = vlaneseq
    %v4091 = vshrl.u32 %v4090, 7
    %v4092 = vsub.s32 0, %v4091
    %v4093 = vrot.slane %v4088, %v4092
    %v4094 = vlaneseq
    %v4095 = vshrl.u32 %v4094, 7
    %v4096 = vsub.s32 1, %v4095
    %v4097 = vrot.slane %v4088, %v4096
    %vm4100 = vcmask 261120
    %v4102 = vsel %vm4100, %v536, 0
    %v4105 = vsel %vm4100, %v542, 0
    %v4108 = vsel %vm4100, %v1041, 0
    %v4111 = vsel %vm4100, %v1047, 0
    %v4114 = vsel %vm4100, %v1546, 0
    %v4117 = vsel %vm4100, %v1552, 0
    %v4120 = vsel %vm4100, %v2051, 0
    %v4123 = vsel %vm4100, %v2057, 0
    %v4126 = vsel %vm4100, %v2556, 0
    %v4129 = vsel %vm4100, %v2562, 0
    %v4132 = vsel %vm4100, %v3061, 0
    %v4135 = vsel %vm4100, %v3067, 0
    %v4138 = vsel %vm4100, %v3566, 0
    %v4141 = vsel %vm4100, %v3572, 0
    %v4144 = vsel %vm4100, %v4071, 0
    %v4147 = vsel %vm4100, %v4077, 0
    %v4149 = vand.u32 %v4081, 4294901760
    %4150 = vmatprep.subr.mxu0 %v4149
    %v4151 = vand.u32 %v4080, 4294901760
    %4152 = vmatpush1.msra.mxu0 %v4151
    %v4153 = vand.u32 %v4083, 4294901760
    %4154 = vmatprep.subr.mxu0 %v4153
    %v4155 = vand.u32 %v4082, 4294901760
    %4156 = vmatpush1.msra.mxu0 %v4155
    %v4157 = vand.u32 %v4085, 4294901760
    %4158 = vmatprep.subr.mxu0 %v4157
    %v4159 = vand.u32 %v4084, 4294901760
    %4160 = vmatpush1.msra.mxu0 %v4159
    %v4161 = vand.u32 %v4087, 4294901760
    %4162 = vmatprep.subr.mxu0 %v4161
    %v4163 = vand.u32 %v4086, 4294901760
    %4164 = vmatpush1.msra.mxu0 %v4163
    %4165 = vmatprep.subr.mxu0 0.0
    %4166 = vmatpush1.msra.mxu0 0.0
    %4167 = vmatprep.subr.mxu0 0.0
    %4168 = vmatpush1.msra.mxu0 0.0
    %4169 = vmatprep.subr.mxu0 0.0
    %4170 = vmatpush1.msra.mxu0 0.0
    %4171 = vmatprep.subr.mxu0 0.0
    %4172 = vmatpush1.msra.mxu0 0.0
    %4173 = vmatprep.subr.mxu0 0.0
    %4174 = vmatpush1.msra.mxu0 0.0
    %4175 = vmatprep.subr.mxu0 0.0
    %4176 = vmatpush1.msra.mxu0 0.0
    %4177 = vmatprep.subr.mxu0 0.0
    %4178 = vmatpush1.msra.mxu0 0.0
    %4179 = vmatprep.subr.mxu0 0.0
    %4180 = vmatpush1.msra.mxu0 0.0
    %4181 = vmatprep.subr.mxu0 0.0
    %4182 = vmatpush1.msra.mxu0 0.0
    %4183 = vmatprep.subr.mxu0 0.0
    %4184 = vmatpush1.msra.mxu0 0.0
    %4185 = vmatprep.subr.mxu0 0.0
    %4186 = vmatpush1.msra.mxu0 0.0
    %4187 = vmatprep.subr.mxu0 0.0
    %4188 = vmatpush1.msra.mxu0 0.0
    %4189 = vmatprep.subr.mxu0 0.0
    %4190 = vmatpush1.msra.mxu0 0.0
    %4191 = vmatprep.subr.mxu0 0.0
    %4192 = vmatpush1.msra.mxu0 0.0
    %4193 = vmatprep.subr.mxu0 0.0
    %4194 = vmatpush1.msra.mxu0 0.0
    %4195 = vmatprep.subr.mxu0 0.0
    %4196 = vmatpush1.msra.mxu0 0.0
    %4197 = vmatprep.subr.mxu0 0.0
    %4198 = vmatpush1.msra.mxu0 0.0
    %4199 = vmatprep.subr.mxu0 0.0
    %4200 = vmatpush1.msra.mxu0 0.0
    %4201 = vmatprep.subr.mxu0 0.0
    %4202 = vmatpush1.msra.mxu0 0.0
    %4203 = vmatprep.subr.mxu0 0.0
    %4204 = vmatpush1.msra.mxu0 0.0
    %4205 = vmatprep.subr.mxu0 0.0
    %4206 = vmatpush1.msra.mxu0 0.0
    %4207 = vmatprep.subr.mxu0 0.0
    %4208 = vmatpush1.msra.mxu0 0.0
    %4209 = vmatprep.subr.mxu0 0.0
    %4210 = vmatpush1.msra.mxu0 0.0
    %4211 = vmatprep.subr.mxu0 0.0
    %4212 = vmatpush1.msra.mxu0 0.0
    %4213 = vmatprep.subr.mxu0 0.0
    %4214 = vmatpush1.msra.mxu0 0.0
    %4215 = vmatprep.subr.mxu0 0.0
    %4216 = vmatpush1.msra.mxu0 0.0
    %4217 = vmatprep.subr.mxu0 0.0
    %4218 = vmatpush1.msra.mxu0 0.0
    %4219 = vmatprep.subr.mxu0 0.0
    %4220 = vmatpush1.msra.mxu0 0.0
    %4221 = vmatprep.mubr.f32.mxu0 0.0
    %v4222 = vand.u32 %v4102, 4294901760
    %v4223 = vsub.f32 %v4102, %v4222
    %v4224 = vand.u32 %v4223, 4294901760
    %v4225 = vsub.f32 %v4223, %v4224
    %v4226 = vand.u32 %v4225, 4294901760
    %4227 = vmatmul.mubr.f32.gmra.mrb[0].mxu0 %v4226
    %v4228 = vpop.f32.mrb[0].mxu0
    %v4229 = vadd.f32 %v4093, %v4228
    %v4230 = vpop.f32.mrb[0].mxu0
    %v4231 = vadd.f32 %v4097, %v4230
    %4232 = vmatprep.mubr.f32.mxu0 0.0
    %v4233 = vand.u32 %v4105, 4294901760
    %v4234 = vsub.f32 %v4105, %v4233
    %v4235 = vand.u32 %v4234, 4294901760
    %v4236 = vsub.f32 %v4234, %v4235
    %v4237 = vand.u32 %v4236, 4294901760
    %4238 = vmatmul.mubr.f32.gmra.mrb[0].mxu0 %v4237
    %v4239 = vpop.f32.mrb[0].mxu0
    %v4240 = vadd.f32 %v4093, %v4239
    %v4241 = vpop.f32.mrb[0].mxu0
    %v4242 = vadd.f32 %v4097, %v4241
    %4243 = vmatprep.mubr.f32.mxu0 0.0
    %v4244 = vand.u32 %v4108, 4294901760
    %v4245 = vsub.f32 %v4108, %v4244
    %v4246 = vand.u32 %v4245, 4294901760
    %v4247 = vsub.f32 %v4245, %v4246
    %v4248 = vand.u32 %v4247, 4294901760
    %4249 = vmatmul.mubr.f32.gmra.mrb[0].mxu0 %v4248
    %v4250 = vpop.f32.mrb[0].mxu0
    %v4251 = vadd.f32 %v4093, %v4250
    %v4252 = vpop.f32.mrb[0].mxu0
    %v4253 = vadd.f32 %v4097, %v4252
    %4254 = vmatprep.mubr.f32.mxu0 0.0
    %v4255 = vand.u32 %v4111, 4294901760
    %v4256 = vsub.f32 %v4111, %v4255
    %v4257 = vand.u32 %v4256, 4294901760
    %v4258 = vsub.f32 %v4256, %v4257
    %v4259 = vand.u32 %v4258, 4294901760
    %4260 = vmatmul.mubr.f32.gmra.mrb[0].mxu0 %v4259
    %v4261 = vpop.f32.mrb[0].mxu0
    %v4262 = vadd.f32 %v4093, %v4261
    %v4263 = vpop.f32.mrb[0].mxu0
    %v4264 = vadd.f32 %v4097, %v4263
    %4265 = vmatprep.mubr.f32.mxu0 0.0
    %v4266 = vand.u32 %v4114, 4294901760
    %v4267 = vsub.f32 %v4114, %v4266
    %v4268 = vand.u32 %v4267, 4294901760
    %v4269 = vsub.f32 %v4267, %v4268
    %v4270 = vand.u32 %v4269, 4294901760
    %4271 = vmatmul.mubr.f32.gmra.mrb[0].mxu0 %v4270
    %v4272 = vpop.f32.mrb[0].mxu0
    %v4273 = vadd.f32 %v4093, %v4272
    %v4274 = vpop.f32.mrb[0].mxu0
    %v4275 = vadd.f32 %v4097, %v4274
    %4276 = vmatprep.mubr.f32.mxu0 0.0
    %v4277 = vand.u32 %v4117, 4294901760
    %v4278 = vsub.f32 %v4117, %v4277
    %v4279 = vand.u32 %v4278, 4294901760
    %v4280 = vsub.f32 %v4278, %v4279
    %v4281 = vand.u32 %v4280, 4294901760
    %4282 = vmatmul.mubr.f32.gmra.mrb[0].mxu0 %v4281
    %v4283 = vpop.f32.mrb[0].mxu0
    %v4284 = vadd.f32 %v4093, %v4283
    %v4285 = vpop.f32.mrb[0].mxu0
    %v4286 = vadd.f32 %v4097, %v4285
    %4287 = vmatprep.mubr.f32.mxu0 0.0
    %v4288 = vand.u32 %v4120, 4294901760
    %v4289 = vsub.f32 %v4120, %v4288
    %v4290 = vand.u32 %v4289, 4294901760
    %v4291 = vsub.f32 %v4289, %v4290
    %v4292 = vand.u32 %v4291, 4294901760
    %4293 = vmatmul.mubr.f32.gmra.mrb[0].mxu0 %v4292
    %v4294 = vpop.f32.mrb[0].mxu0
    %v4295 = vadd.f32 %v4093, %v4294
    %v4296 = vpop.f32.mrb[0].mxu0
    %v4297 = vadd.f32 %v4097, %v4296
    %4298 = vmatprep.mubr.f32.mxu0 0.0
    %v4299 = vand.u32 %v4123, 4294901760
    %v4300 = vsub.f32 %v4123, %v4299
    %v4301 = vand.u32 %v4300, 4294901760
    %v4302 = vsub.f32 %v4300, %v4301
    %v4303 = vand.u32 %v4302, 4294901760
    %4304 = vmatmul.mubr.f32.gmra.mrb[0].mxu0 %v4303
    %v4305 = vpop.f32.mrb[0].mxu0
    %v4306 = vadd.f32 %v4093, %v4305
    %v4307 = vpop.f32.mrb[0].mxu0
    %v4308 = vadd.f32 %v4097, %v4307
    %4309 = vmatprep.mubr.f32.mxu0 0.0
    %v4310 = vand.u32 %v4126, 4294901760
    %v4311 = vsub.f32 %v4126, %v4310
    %v4312 = vand.u32 %v4311, 4294901760
    %v4313 = vsub.f32 %v4311, %v4312
    %v4314 = vand.u32 %v4313, 4294901760
    %4315 = vmatmul.mubr.f32.gmra.mrb[0].mxu0 %v4314
    %v4316 = vpop.f32.mrb[0].mxu0
    %v4317 = vadd.f32 %v4093, %v4316
    %v4318 = vpop.f32.mrb[0].mxu0
    %v4319 = vadd.f32 %v4097, %v4318
    %4320 = vmatprep.mubr.f32.mxu0 0.0
    %v4321 = vand.u32 %v4129, 4294901760
    %v4322 = vsub.f32 %v4129, %v4321
    %v4323 = vand.u32 %v4322, 4294901760
    %v4324 = vsub.f32 %v4322, %v4323
    %v4325 = vand.u32 %v4324, 4294901760
    %4326 = vmatmul.mubr.f32.gmra.mrb[0].mxu0 %v4325
    %v4327 = vpop.f32.mrb[0].mxu0
    %v4328 = vadd.f32 %v4093, %v4327
    %v4329 = vpop.f32.mrb[0].mxu0
    %v4330 = vadd.f32 %v4097, %v4329
    %4331 = vmatprep.mubr.f32.mxu0 0.0
    %v4332 = vand.u32 %v4132, 4294901760
    %v4333 = vsub.f32 %v4132, %v4332
    %v4334 = vand.u32 %v4333, 4294901760
    %v4335 = vsub.f32 %v4333, %v4334
    %v4336 = vand.u32 %v4335, 4294901760
    %4337 = vmatmul.mubr.f32.gmra.mrb[0].mxu0 %v4336
    %v4338 = vpop.f32.mrb[0].mxu0
    %v4339 = vadd.f32 %v4093, %v4338
    %v4340 = vpop.f32.mrb[0].mxu0
    %v4341 = vadd.f32 %v4097, %v4340
    %4342 = vmatprep.mubr.f32.mxu0 0.0
    %v4343 = vand.u32 %v4135, 4294901760
    %v4344 = vsub.f32 %v4135, %v4343
    %v4345 = vand.u32 %v4344, 4294901760
    %v4346 = vsub.f32 %v4344, %v4345
    %v4347 = vand.u32 %v4346, 4294901760
    %4348 = vmatmul.mubr.f32.gmra.mrb[0].mxu0 %v4347
    %v4349 = vpop.f32.mrb[0].mxu0
    %v4350 = vadd.f32 %v4093, %v4349
    %v4351 = vpop.f32.mrb[0].mxu0
    %v4352 = vadd.f32 %v4097, %v4351
    %4353 = vmatprep.mubr.f32.mxu0 0.0
    %v4354 = vand.u32 %v4138, 4294901760
    %v4355 = vsub.f32 %v4138, %v4354
    %v4356 = vand.u32 %v4355, 4294901760
    %v4357 = vsub.f32 %v4355, %v4356
    %v4358 = vand.u32 %v4357, 4294901760
    %4359 = vmatmul.mubr.f32.gmra.mrb[0].mxu0 %v4358
    %v4360 = vpop.f32.mrb[0].mxu0
    %v4361 = vadd.f32 %v4093, %v4360
    %v4362 = vpop.f32.mrb[0].mxu0
    %v4363 = vadd.f32 %v4097, %v4362
    %4364 = vmatprep.mubr.f32.mxu0 0.0
    %v4365 = vand.u32 %v4141, 4294901760
    %v4366 = vsub.f32 %v4141, %v4365
    %v4367 = vand.u32 %v4366, 4294901760
    %v4368 = vsub.f32 %v4366, %v4367
    %v4369 = vand.u32 %v4368, 4294901760
    %4370 = vmatmul.mubr.f32.gmra.mrb[0].mxu0 %v4369
    %v4371 = vpop.f32.mrb[0].mxu0
    %v4372 = vadd.f32 %v4093, %v4371
    %v4373 = vpop.f32.mrb[0].mxu0
    %v4374 = vadd.f32 %v4097, %v4373
    %4375 = vmatprep.mubr.f32.mxu0 0.0
    %v4376 = vand.u32 %v4144, 4294901760
    %v4377 = vsub.f32 %v4144, %v4376
    %v4378 = vand.u32 %v4377, 4294901760
    %v4379 = vsub.f32 %v4377, %v4378
    %v4380 = vand.u32 %v4379, 4294901760
    %4381 = vmatmul.mubr.f32.gmra.mrb[0].mxu0 %v4380
    %v4382 = vpop.f32.mrb[0].mxu0
    %v4383 = vadd.f32 %v4093, %v4382
    %v4384 = vpop.f32.mrb[0].mxu0
    %v4385 = vadd.f32 %v4097, %v4384
    %4386 = vmatprep.mubr.f32.mxu0 0.0
    %v4387 = vand.u32 %v4147, 4294901760
    %v4388 = vsub.f32 %v4147, %v4387
    %v4389 = vand.u32 %v4388, 4294901760
    %v4390 = vsub.f32 %v4388, %v4389
    %v4391 = vand.u32 %v4390, 4294901760
    %4392 = vmatmul.mubr.f32.gmra.mrb[0].mxu0 %v4391
    %v4393 = vpop.f32.mrb[0].mxu0
    %v4394 = vadd.f32 %v4093, %v4393
    %v4395 = vpop.f32.mrb[0].mxu0
    %v4396 = vadd.f32 %v4097, %v4395
    %4397 = vdwg.mxu0
    %v4398 = vand.u32 %v4081, 4294901760
    %v4399 = vsub.f32 %v4081, %v4398
    %v4400 = vand.u32 %v4399, 4294901760
    %v4401 = vsub.f32 %v4399, %v4400
    %v4402 = vand.u32 %v4401, 4294901760
    %4403 = vmatprep.subr.mxu0 %v4402
    %v4404 = vand.u32 %v4080, 4294901760
    %v4405 = vsub.f32 %v4080, %v4404
    %v4406 = vand.u32 %v4405, 4294901760
    %v4407 = vsub.f32 %v4405, %v4406
    %v4408 = vand.u32 %v4407, 4294901760
    %4409 = vmatpush1.msra.mxu0 %v4408
    %v4410 = vand.u32 %v4083, 4294901760
    %v4411 = vsub.f32 %v4083, %v4410
    %v4412 = vand.u32 %v4411, 4294901760
    %v4413 = vsub.f32 %v4411, %v4412
    %v4414 = vand.u32 %v4413, 4294901760
    %4415 = vmatprep.subr.mxu0 %v4414
    %v4416 = vand.u32 %v4082, 4294901760
    %v4417 = vsub.f32 %v4082, %v4416
    %v4418 = vand.u32 %v4417, 4294901760
    %v4419 = vsub.f32 %v4417, %v4418
    %v4420 = vand.u32 %v4419, 4294901760
    %4421 = vmatpush1.msra.mxu0 %v4420
    %v4422 = vand.u32 %v4085, 4294901760
    %v4423 = vsub.f32 %v4085, %v4422
    %v4424 = vand.u32 %v4423, 4294901760
    %v4425 = vsub.f32 %v4423, %v4424
    %v4426 = vand.u32 %v4425, 4294901760
    %4427 = vmatprep.subr.mxu0 %v4426
    %v4428 = vand.u32 %v4084, 4294901760
    %v4429 = vsub.f32 %v4084, %v4428
    %v4430 = vand.u32 %v4429, 4294901760
    %v4431 = vsub.f32 %v4429, %v4430
    %v4432 = vand.u32 %v4431, 4294901760
    %4433 = vmatpush1.msra.mxu0 %v4432
    %v4434 = vand.u32 %v4087, 4294901760
    %v4435 = vsub.f32 %v4087, %v4434
    %v4436 = vand.u32 %v4435, 4294901760
    %v4437 = vsub.f32 %v4435, %v4436
    %v4438 = vand.u32 %v4437, 4294901760
    %4439 = vmatprep.subr.mxu0 %v4438
    %v4440 = vand.u32 %v4086, 4294901760
    %v4441 = vsub.f32 %v4086, %v4440
    %v4442 = vand.u32 %v4441, 4294901760
    %v4443 = vsub.f32 %v4441, %v4442
    %v4444 = vand.u32 %v4443, 4294901760
    %4445 = vmatpush1.msra.mxu0 %v4444
    %4446 = vmatprep.subr.mxu0 0.0
    %4447 = vmatpush1.msra.mxu0 0.0
    %4448 = vmatprep.subr.mxu0 0.0
    %4449 = vmatpush1.msra.mxu0 0.0
    %4450 = vmatprep.subr.mxu0 0.0
    %4451 = vmatpush1.msra.mxu0 0.0
    %4452 = vmatprep.subr.mxu0 0.0
    %4453 = vmatpush1.msra.mxu0 0.0
    %4454 = vmatprep.subr.mxu0 0.0
    %4455 = vmatpush1.msra.mxu0 0.0
    %4456 = vmatprep.subr.mxu0 0.0
    %4457 = vmatpush1.msra.mxu0 0.0
    %4458 = vmatprep.subr.mxu0 0.0
    %4459 = vmatpush1.msra.mxu0 0.0
    %4460 = vmatprep.subr.mxu0 0.0
    %4461 = vmatpush1.msra.mxu0 0.0
    %4462 = vmatprep.subr.mxu0 0.0
    %4463 = vmatpush1.msra.mxu0 0.0
    %4464 = vmatprep.subr.mxu0 0.0
    %4465 = vmatpush1.msra.mxu0 0.0
    %4466 = vmatprep.subr.mxu0 0.0
    %4467 = vmatpush1.msra.mxu0 0.0
    %4468 = vmatprep.subr.mxu0 0.0
    %4469 = vmatpush1.msra.mxu0 0.0
    %4470 = vmatprep.subr.mxu0 0.0
    %4471 = vmatpush1.msra.mxu0 0.0
    %4472 = vmatprep.subr.mxu0 0.0
    %4473 = vmatpush1.msra.mxu0 0.0
    %4474 = vmatprep.subr.mxu0 0.0
    %4475 = vmatpush1.msra.mxu0 0.0
    %4476 = vmatprep.subr.mxu0 0.0
    %4477 = vmatpush1.msra.mxu0 0.0
    %4478 = vmatprep.subr.mxu0 0.0
    %4479 = vmatpush1.msra.mxu0 0.0
    %4480 = vmatprep.subr.mxu0 0.0
    %4481 = vmatpush1.msra.mxu0 0.0
    %4482 = vmatprep.subr.mxu0 0.0
    %4483 = vmatpush1.msra.mxu0 0.0
    %4484 = vmatprep.subr.mxu0 0.0
    %4485 = vmatpush1.msra.mxu0 0.0
    %4486 = vmatprep.subr.mxu0 0.0
    %4487 = vmatpush1.msra.mxu0 0.0
    %4488 = vmatprep.subr.mxu0 0.0
    %4489 = vmatpush1.msra.mxu0 0.0
    %4490 = vmatprep.subr.mxu0 0.0
    %4491 = vmatpush1.msra.mxu0 0.0
    %4492 = vmatprep.subr.mxu0 0.0
    %4493 = vmatpush1.msra.mxu0 0.0
    %4494 = vmatprep.subr.mxu0 0.0
    %4495 = vmatpush1.msra.mxu0 0.0
    %4496 = vmatprep.subr.mxu0 0.0
    %4497 = vmatpush1.msra.mxu0 0.0
    %4498 = vmatprep.subr.mxu0 0.0
    %4499 = vmatpush1.msra.mxu0 0.0
    %4500 = vmatprep.subr.mxu0 0.0
    %4501 = vmatpush1.msra.mxu0 0.0
    %4502 = vmatprep.mubr.f32.mxu0 0.0
    %v4503 = vand.u32 %v4102, 4294901760
    %4504 = vmatmul.mubr.f32.gmra.mrb[0].mxu0 %v4503
    %v4505 = vpop.f32.mrb[0].mxu0
    %v4506 = vadd.f32 %v4229, %v4505
    %v4507 = vpop.f32.mrb[0].mxu0
    %v4508 = vadd.f32 %v4231, %v4507
    %4509 = vmatprep.mubr.f32.mxu0 0.0
    %v4510 = vand.u32 %v4105, 4294901760
    %4511 = vmatmul.mubr.f32.gmra.mrb[0].mxu0 %v4510
    %v4512 = vpop.f32.mrb[0].mxu0
    %v4513 = vadd.f32 %v4240, %v4512
    %v4514 = vpop.f32.mrb[0].mxu0
    %v4515 = vadd.f32 %v4242, %v4514
    %4516 = vmatprep.mubr.f32.mxu0 0.0
    %v4517 = vand.u32 %v4108, 4294901760
    %4518 = vmatmul.mubr.f32.gmra.mrb[0].mxu0 %v4517
    %v4519 = vpop.f32.mrb[0].mxu0
    %v4520 = vadd.f32 %v4251, %v4519
    %v4521 = vpop.f32.mrb[0].mxu0
    %v4522 = vadd.f32 %v4253, %v4521
    %4523 = vmatprep.mubr.f32.mxu0 0.0
    %v4524 = vand.u32 %v4111, 4294901760
    %4525 = vmatmul.mubr.f32.gmra.mrb[0].mxu0 %v4524
    %v4526 = vpop.f32.mrb[0].mxu0
    %v4527 = vadd.f32 %v4262, %v4526
    %v4528 = vpop.f32.mrb[0].mxu0
    %v4529 = vadd.f32 %v4264, %v4528
    %4530 = vmatprep.mubr.f32.mxu0 0.0
    %v4531 = vand.u32 %v4114, 4294901760
    %4532 = vmatmul.mubr.f32.gmra.mrb[0].mxu0 %v4531
    %v4533 = vpop.f32.mrb[0].mxu0
    %v4534 = vadd.f32 %v4273, %v4533
    %v4535 = vpop.f32.mrb[0].mxu0
    %v4536 = vadd.f32 %v4275, %v4535
    %4537 = vmatprep.mubr.f32.mxu0 0.0
    %v4538 = vand.u32 %v4117, 4294901760
    %4539 = vmatmul.mubr.f32.gmra.mrb[0].mxu0 %v4538
    %v4540 = vpop.f32.mrb[0].mxu0
    %v4541 = vadd.f32 %v4284, %v4540
    %v4542 = vpop.f32.mrb[0].mxu0
    %v4543 = vadd.f32 %v4286, %v4542
    %4544 = vmatprep.mubr.f32.mxu0 0.0
    %v4545 = vand.u32 %v4120, 4294901760
    %4546 = vmatmul.mubr.f32.gmra.mrb[0].mxu0 %v4545
    %v4547 = vpop.f32.mrb[0].mxu0
    %v4548 = vadd.f32 %v4295, %v4547
    %v4549 = vpop.f32.mrb[0].mxu0
    %v4550 = vadd.f32 %v4297, %v4549
    %4551 = vmatprep.mubr.f32.mxu0 0.0
    %v4552 = vand.u32 %v4123, 4294901760
    %4553 = vmatmul.mubr.f32.gmra.mrb[0].mxu0 %v4552
    %v4554 = vpop.f32.mrb[0].mxu0
    %v4555 = vadd.f32 %v4306, %v4554
    %v4556 = vpop.f32.mrb[0].mxu0
    %v4557 = vadd.f32 %v4308, %v4556
    %4558 = vmatprep.mubr.f32.mxu0 0.0
    %v4559 = vand.u32 %v4126, 4294901760
    %4560 = vmatmul.mubr.f32.gmra.mrb[0].mxu0 %v4559
    %v4561 = vpop.f32.mrb[0].mxu0
    %v4562 = vadd.f32 %v4317, %v4561
    %v4563 = vpop.f32.mrb[0].mxu0
    %v4564 = vadd.f32 %v4319, %v4563
    %4565 = vmatprep.mubr.f32.mxu0 0.0
    %v4566 = vand.u32 %v4129, 4294901760
    %4567 = vmatmul.mubr.f32.gmra.mrb[0].mxu0 %v4566
    %v4568 = vpop.f32.mrb[0].mxu0
    %v4569 = vadd.f32 %v4328, %v4568
    %v4570 = vpop.f32.mrb[0].mxu0
    %v4571 = vadd.f32 %v4330, %v4570
    %4572 = vmatprep.mubr.f32.mxu0 0.0
    %v4573 = vand.u32 %v4132, 4294901760
    %4574 = vmatmul.mubr.f32.gmra.mrb[0].mxu0 %v4573
    %v4575 = vpop.f32.mrb[0].mxu0
    %v4576 = vadd.f32 %v4339, %v4575
    %v4577 = vpop.f32.mrb[0].mxu0
    %v4578 = vadd.f32 %v4341, %v4577
    %4579 = vmatprep.mubr.f32.mxu0 0.0
    %v4580 = vand.u32 %v4135, 4294901760
    %4581 = vmatmul.mubr.f32.gmra.mrb[0].mxu0 %v4580
    %v4582 = vpop.f32.mrb[0].mxu0
    %v4583 = vadd.f32 %v4350, %v4582
    %v4584 = vpop.f32.mrb[0].mxu0
    %v4585 = vadd.f32 %v4352, %v4584
    %4586 = vmatprep.mubr.f32.mxu0 0.0
    %v4587 = vand.u32 %v4138, 4294901760
    %4588 = vmatmul.mubr.f32.gmra.mrb[0].mxu0 %v4587
    %v4589 = vpop.f32.mrb[0].mxu0
    %v4590 = vadd.f32 %v4361, %v4589
    %v4591 = vpop.f32.mrb[0].mxu0
    %v4592 = vadd.f32 %v4363, %v4591
    %4593 = vmatprep.mubr.f32.mxu0 0.0
    %v4594 = vand.u32 %v4141, 4294901760
    %4595 = vmatmul.mubr.f32.gmra.mrb[0].mxu0 %v4594
    %v4596 = vpop.f32.mrb[0].mxu0
    %v4597 = vadd.f32 %v4372, %v4596
    %v4598 = vpop.f32.mrb[0].mxu0
    %v4599 = vadd.f32 %v4374, %v4598
    %4600 = vmatprep.mubr.f32.mxu0 0.0
    %v4601 = vand.u32 %v4144, 4294901760
    %4602 = vmatmul.mubr.f32.gmra.mrb[0].mxu0 %v4601
    %v4603 = vpop.f32.mrb[0].mxu0
    %v4604 = vadd.f32 %v4383, %v4603
    %v4605 = vpop.f32.mrb[0].mxu0
    %v4606 = vadd.f32 %v4385, %v4605
    %4607 = vmatprep.mubr.f32.mxu0 0.0
    %v4608 = vand.u32 %v4147, 4294901760
    %4609 = vmatmul.mubr.f32.gmra.mrb[0].mxu0 %v4608
    %v4610 = vpop.f32.mrb[0].mxu0
    %v4611 = vadd.f32 %v4394, %v4610
    %v4612 = vpop.f32.mrb[0].mxu0
    %v4613 = vadd.f32 %v4396, %v4612
    %4614 = vdwg.mxu0
    %v4615 = vand.u32 %v4081, 4294901760
    %v4616 = vsub.f32 %v4081, %v4615
    %4617 = vmatprep.subr.mxu0 %v4616
    %v4618 = vand.u32 %v4080, 4294901760
    %v4619 = vsub.f32 %v4080, %v4618
    %4620 = vmatpush1.msra.mxu0 %v4619
    %v4621 = vand.u32 %v4083, 4294901760
    %v4622 = vsub.f32 %v4083, %v4621
    %4623 = vmatprep.subr.mxu0 %v4622
    %v4624 = vand.u32 %v4082, 4294901760
    %v4625 = vsub.f32 %v4082, %v4624
    %4626 = vmatpush1.msra.mxu0 %v4625
    %v4627 = vand.u32 %v4085, 4294901760
    %v4628 = vsub.f32 %v4085, %v4627
    %4629 = vmatprep.subr.mxu0 %v4628
    %v4630 = vand.u32 %v4084, 4294901760
    %v4631 = vsub.f32 %v4084, %v4630
    %4632 = vmatpush1.msra.mxu0 %v4631
    %v4633 = vand.u32 %v4087, 4294901760
    %v4634 = vsub.f32 %v4087, %v4633
    %4635 = vmatprep.subr.mxu0 %v4634
    %v4636 = vand.u32 %v4086, 4294901760
    %v4637 = vsub.f32 %v4086, %v4636
    %4638 = vmatpush1.msra.mxu0 %v4637
    %4639 = vmatprep.subr.mxu0 0.0
    %4640 = vmatpush1.msra.mxu0 0.0
    %4641 = vmatprep.subr.mxu0 0.0
    %4642 = vmatpush1.msra.mxu0 0.0
    %4643 = vmatprep.subr.mxu0 0.0
    %4644 = vmatpush1.msra.mxu0 0.0
    %4645 = vmatprep.subr.mxu0 0.0
    %4646 = vmatpush1.msra.mxu0 0.0
    %4647 = vmatprep.subr.mxu0 0.0
    %4648 = vmatpush1.msra.mxu0 0.0
    %4649 = vmatprep.subr.mxu0 0.0
    %4650 = vmatpush1.msra.mxu0 0.0
    %4651 = vmatprep.subr.mxu0 0.0
    %4652 = vmatpush1.msra.mxu0 0.0
    %4653 = vmatprep.subr.mxu0 0.0
    %4654 = vmatpush1.msra.mxu0 0.0
    %4655 = vmatprep.subr.mxu0 0.0
    %4656 = vmatpush1.msra.mxu0 0.0
    %4657 = vmatprep.subr.mxu0 0.0
    %4658 = vmatpush1.msra.mxu0 0.0
    %4659 = vmatprep.subr.mxu0 0.0
    %4660 = vmatpush1.msra.mxu0 0.0
    %4661 = vmatprep.subr.mxu0 0.0
    %4662 = vmatpush1.msra.mxu0 0.0
    %4663 = vmatprep.subr.mxu0 0.0
    %4664 = vmatpush1.msra.mxu0 0.0
    %4665 = vmatprep.subr.mxu0 0.0
    %4666 = vmatpush1.msra.mxu0 0.0
    %4667 = vmatprep.subr.mxu0 0.0
    %4668 = vmatpush1.msra.mxu0 0.0
    %4669 = vmatprep.subr.mxu0 0.0
    %4670 = vmatpush1.msra.mxu0 0.0
    %4671 = vmatprep.subr.mxu0 0.0
    %4672 = vmatpush1.msra.mxu0 0.0
    %4673 = vmatprep.subr.mxu0 0.0
    %4674 = vmatpush1.msra.mxu0 0.0
    %4675 = vmatprep.subr.mxu0 0.0
    %4676 = vmatpush1.msra.mxu0 0.0
    %4677 = vmatprep.subr.mxu0 0.0
    %4678 = vmatpush1.msra.mxu0 0.0
    %4679 = vmatprep.subr.mxu0 0.0
    %4680 = vmatpush1.msra.mxu0 0.0
    %4681 = vmatprep.subr.mxu0 0.0
    %4682 = vmatpush1.msra.mxu0 0.0
    %4683 = vmatprep.subr.mxu0 0.0
    %4684 = vmatpush1.msra.mxu0 0.0
    %4685 = vmatprep.subr.mxu0 0.0
    %4686 = vmatpush1.msra.mxu0 0.0
    %4687 = vmatprep.subr.mxu0 0.0
    %4688 = vmatpush1.msra.mxu0 0.0
    %4689 = vmatprep.subr.mxu0 0.0
    %4690 = vmatpush1.msra.mxu0 0.0
    %4691 = vmatprep.subr.mxu0 0.0
    %4692 = vmatpush1.msra.mxu0 0.0
    %4693 = vmatprep.subr.mxu0 0.0
    %4694 = vmatpush1.msra.mxu0 0.0
    %4695 = vmatprep.mubr.f32.mxu0 0.0
    %v4696 = vand.u32 %v4102, 4294901760
    %v4697 = vsub.f32 %v4102, %v4696
    %4698 = vmatmul.mubr.f32.gmra.mrb[0].mxu0 %v4697
    %v4699 = vpop.f32.mrb[0].mxu0
    %v4700 = vadd.f32 %v4506, %v4699
    %v4701 = vpop.f32.mrb[0].mxu0
    %v4702 = vadd.f32 %v4508, %v4701
    %4703 = vmatprep.mubr.f32.mxu0 0.0
    %v4704 = vand.u32 %v4105, 4294901760
    %v4705 = vsub.f32 %v4105, %v4704
    %4706 = vmatmul.mubr.f32.gmra.mrb[0].mxu0 %v4705
    %v4707 = vpop.f32.mrb[0].mxu0
    %v4708 = vadd.f32 %v4513, %v4707
    %v4709 = vpop.f32.mrb[0].mxu0
    %v4710 = vadd.f32 %v4515, %v4709
    %4711 = vmatprep.mubr.f32.mxu0 0.0
    %v4712 = vand.u32 %v4108, 4294901760
    %v4713 = vsub.f32 %v4108, %v4712
    %4714 = vmatmul.mubr.f32.gmra.mrb[0].mxu0 %v4713
    %v4715 = vpop.f32.mrb[0].mxu0
    %v4716 = vadd.f32 %v4520, %v4715
    %v4717 = vpop.f32.mrb[0].mxu0
    %v4718 = vadd.f32 %v4522, %v4717
    %4719 = vmatprep.mubr.f32.mxu0 0.0
    %v4720 = vand.u32 %v4111, 4294901760
    %v4721 = vsub.f32 %v4111, %v4720
    %4722 = vmatmul.mubr.f32.gmra.mrb[0].mxu0 %v4721
    %v4723 = vpop.f32.mrb[0].mxu0
    %v4724 = vadd.f32 %v4527, %v4723
    %v4725 = vpop.f32.mrb[0].mxu0
    %v4726 = vadd.f32 %v4529, %v4725
    %4727 = vmatprep.mubr.f32.mxu0 0.0
    %v4728 = vand.u32 %v4114, 4294901760
    %v4729 = vsub.f32 %v4114, %v4728
    %4730 = vmatmul.mubr.f32.gmra.mrb[0].mxu0 %v4729
    %v4731 = vpop.f32.mrb[0].mxu0
    %v4732 = vadd.f32 %v4534, %v4731
    %v4733 = vpop.f32.mrb[0].mxu0
    %v4734 = vadd.f32 %v4536, %v4733
    %4735 = vmatprep.mubr.f32.mxu0 0.0
    %v4736 = vand.u32 %v4117, 4294901760
    %v4737 = vsub.f32 %v4117, %v4736
    %4738 = vmatmul.mubr.f32.gmra.mrb[0].mxu0 %v4737
    %v4739 = vpop.f32.mrb[0].mxu0
    %v4740 = vadd.f32 %v4541, %v4739
    %v4741 = vpop.f32.mrb[0].mxu0
    %v4742 = vadd.f32 %v4543, %v4741
    %4743 = vmatprep.mubr.f32.mxu0 0.0
    %v4744 = vand.u32 %v4120, 4294901760
    %v4745 = vsub.f32 %v4120, %v4744
    %4746 = vmatmul.mubr.f32.gmra.mrb[0].mxu0 %v4745
    %v4747 = vpop.f32.mrb[0].mxu0
    %v4748 = vadd.f32 %v4548, %v4747
    %v4749 = vpop.f32.mrb[0].mxu0
    %v4750 = vadd.f32 %v4550, %v4749
    %4751 = vmatprep.mubr.f32.mxu0 0.0
    %v4752 = vand.u32 %v4123, 4294901760
    %v4753 = vsub.f32 %v4123, %v4752
    %4754 = vmatmul.mubr.f32.gmra.mrb[0].mxu0 %v4753
    %v4755 = vpop.f32.mrb[0].mxu0
    %v4756 = vadd.f32 %v4555, %v4755
    %v4757 = vpop.f32.mrb[0].mxu0
    %v4758 = vadd.f32 %v4557, %v4757
    %4759 = vmatprep.mubr.f32.mxu0 0.0
    %v4760 = vand.u32 %v4126, 4294901760
    %v4761 = vsub.f32 %v4126, %v4760
    %4762 = vmatmul.mubr.f32.gmra.mrb[0].mxu0 %v4761
    %v4763 = vpop.f32.mrb[0].mxu0
    %v4764 = vadd.f32 %v4562, %v4763
    %v4765 = vpop.f32.mrb[0].mxu0
    %v4766 = vadd.f32 %v4564, %v4765
    %4767 = vmatprep.mubr.f32.mxu0 0.0
    %v4768 = vand.u32 %v4129, 4294901760
    %v4769 = vsub.f32 %v4129, %v4768
    %4770 = vmatmul.mubr.f32.gmra.mrb[0].mxu0 %v4769
    %v4771 = vpop.f32.mrb[0].mxu0
    %v4772 = vadd.f32 %v4569, %v4771
    %v4773 = vpop.f32.mrb[0].mxu0
    %v4774 = vadd.f32 %v4571, %v4773
    %4775 = vmatprep.mubr.f32.mxu0 0.0
    %v4776 = vand.u32 %v4132, 4294901760
    %v4777 = vsub.f32 %v4132, %v4776
    %4778 = vmatmul.mubr.f32.gmra.mrb[0].mxu0 %v4777
    %v4779 = vpop.f32.mrb[0].mxu0
    %v4780 = vadd.f32 %v4576, %v4779
    %v4781 = vpop.f32.mrb[0].mxu0
    %v4782 = vadd.f32 %v4578, %v4781
    %4783 = vmatprep.mubr.f32.mxu0 0.0
    %v4784 = vand.u32 %v4135, 4294901760
    %v4785 = vsub.f32 %v4135, %v4784
    %4786 = vmatmul.mubr.f32.gmra.mrb[0].mxu0 %v4785
    %v4787 = vpop.f32.mrb[0].mxu0
    %v4788 = vadd.f32 %v4583, %v4787
    %v4789 = vpop.f32.mrb[0].mxu0
    %v4790 = vadd.f32 %v4585, %v4789
    %4791 = vmatprep.mubr.f32.mxu0 0.0
    %v4792 = vand.u32 %v4138, 4294901760
    %v4793 = vsub.f32 %v4138, %v4792
    %4794 = vmatmul.mubr.f32.gmra.mrb[0].mxu0 %v4793
    %v4795 = vpop.f32.mrb[0].mxu0
    %v4796 = vadd.f32 %v4590, %v4795
    %v4797 = vpop.f32.mrb[0].mxu0
    %v4798 = vadd.f32 %v4592, %v4797
    %4799 = vmatprep.mubr.f32.mxu0 0.0
    %v4800 = vand.u32 %v4141, 4294901760
    %v4801 = vsub.f32 %v4141, %v4800
    %4802 = vmatmul.mubr.f32.gmra.mrb[0].mxu0 %v4801
    %v4803 = vpop.f32.mrb[0].mxu0
    %v4804 = vadd.f32 %v4597, %v4803
    %v4805 = vpop.f32.mrb[0].mxu0
    %v4806 = vadd.f32 %v4599, %v4805
    %4807 = vmatprep.mubr.f32.mxu0 0.0
    %v4808 = vand.u32 %v4144, 4294901760
    %v4809 = vsub.f32 %v4144, %v4808
    %4810 = vmatmul.mubr.f32.gmra.mrb[0].mxu0 %v4809
    %v4811 = vpop.f32.mrb[0].mxu0
    %v4812 = vadd.f32 %v4604, %v4811
    %v4813 = vpop.f32.mrb[0].mxu0
    %v4814 = vadd.f32 %v4606, %v4813
    %4815 = vmatprep.mubr.f32.mxu0 0.0
    %v4816 = vand.u32 %v4147, 4294901760
    %v4817 = vsub.f32 %v4147, %v4816
    %4818 = vmatmul.mubr.f32.gmra.mrb[0].mxu0 %v4817
    %v4819 = vpop.f32.mrb[0].mxu0
    %v4820 = vadd.f32 %v4611, %v4819
    %v4821 = vpop.f32.mrb[0].mxu0
    %v4822 = vadd.f32 %v4613, %v4821
    %4823 = vdwg.mxu0
    %v4824 = vand.u32 %v4081, 4294901760
    %4825 = vmatprep.subr.mxu0 %v4824
    %v4826 = vand.u32 %v4080, 4294901760
    %4827 = vmatpush1.msra.mxu0 %v4826
    %v4828 = vand.u32 %v4083, 4294901760
    %4829 = vmatprep.subr.mxu0 %v4828
    %v4830 = vand.u32 %v4082, 4294901760
    %4831 = vmatpush1.msra.mxu0 %v4830
    %v4832 = vand.u32 %v4085, 4294901760
    %4833 = vmatprep.subr.mxu0 %v4832
    %v4834 = vand.u32 %v4084, 4294901760
    %4835 = vmatpush1.msra.mxu0 %v4834
    %v4836 = vand.u32 %v4087, 4294901760
    %4837 = vmatprep.subr.mxu0 %v4836
    %v4838 = vand.u32 %v4086, 4294901760
    %4839 = vmatpush1.msra.mxu0 %v4838
    %4840 = vmatprep.subr.mxu0 0.0
    %4841 = vmatpush1.msra.mxu0 0.0
    %4842 = vmatprep.subr.mxu0 0.0
    %4843 = vmatpush1.msra.mxu0 0.0
    %4844 = vmatprep.subr.mxu0 0.0
    %4845 = vmatpush1.msra.mxu0 0.0
    %4846 = vmatprep.subr.mxu0 0.0
    %4847 = vmatpush1.msra.mxu0 0.0
    %4848 = vmatprep.subr.mxu0 0.0
    %4849 = vmatpush1.msra.mxu0 0.0
    %4850 = vmatprep.subr.mxu0 0.0
    %4851 = vmatpush1.msra.mxu0 0.0
    %4852 = vmatprep.subr.mxu0 0.0
    %4853 = vmatpush1.msra.mxu0 0.0
    %4854 = vmatprep.subr.mxu0 0.0
    %4855 = vmatpush1.msra.mxu0 0.0
    %4856 = vmatprep.subr.mxu0 0.0
    %4857 = vmatpush1.msra.mxu0 0.0
    %4858 = vmatprep.subr.mxu0 0.0
    %4859 = vmatpush1.msra.mxu0 0.0
    %4860 = vmatprep.subr.mxu0 0.0
    %4861 = vmatpush1.msra.mxu0 0.0
    %4862 = vmatprep.subr.mxu0 0.0
    %4863 = vmatpush1.msra.mxu0 0.0
    %4864 = vmatprep.subr.mxu0 0.0
    %4865 = vmatpush1.msra.mxu0 0.0
    %4866 = vmatprep.subr.mxu0 0.0
    %4867 = vmatpush1.msra.mxu0 0.0
    %4868 = vmatprep.subr.mxu0 0.0
    %4869 = vmatpush1.msra.mxu0 0.0
    %4870 = vmatprep.subr.mxu0 0.0
    %4871 = vmatpush1.msra.mxu0 0.0
    %4872 = vmatprep.subr.mxu0 0.0
    %4873 = vmatpush1.msra.mxu0 0.0
    %4874 = vmatprep.subr.mxu0 0.0
    %4875 = vmatpush1.msra.mxu0 0.0
    %4876 = vmatprep.subr.mxu0 0.0
    %4877 = vmatpush1.msra.mxu0 0.0
    %4878 = vmatprep.subr.mxu0 0.0
    %4879 = vmatpush1.msra.mxu0 0.0
    %4880 = vmatprep.subr.mxu0 0.0
    %4881 = vmatpush1.msra.mxu0 0.0
    %4882 = vmatprep.subr.mxu0 0.0
    %4883 = vmatpush1.msra.mxu0 0.0
    %4884 = vmatprep.subr.mxu0 0.0
    %4885 = vmatpush1.msra.mxu0 0.0
    %4886 = vmatprep.subr.mxu0 0.0
    %4887 = vmatpush1.msra.mxu0 0.0
    %4888 = vmatprep.subr.mxu0 0.0
    %4889 = vmatpush1.msra.mxu0 0.0
    %4890 = vmatprep.subr.mxu0 0.0
    %4891 = vmatpush1.msra.mxu0 0.0
    %4892 = vmatprep.subr.mxu0 0.0
    %4893 = vmatpush1.msra.mxu0 0.0
    %4894 = vmatprep.subr.mxu0 0.0
    %4895 = vmatpush1.msra.mxu0 0.0
    %4896 = vmatprep.mubr.f32.mxu0 0.0
    %v4897 = vand.u32 %v4102, 4294901760
    %v4898 = vsub.f32 %v4102, %v4897
    %v4899 = vand.u32 %v4898, 4294901760
    %4900 = vmatmul.mubr.f32.gmra.mrb[0].mxu0 %v4899
    %v4901 = vpop.f32.mrb[0].mxu0
    %v4902 = vadd.f32 %v4700, %v4901
    %v4903 = vpop.f32.mrb[0].mxu0
    %v4904 = vadd.f32 %v4702, %v4903
    %4905 = vmatprep.mubr.f32.mxu0 0.0
    %v4906 = vand.u32 %v4105, 4294901760
    %v4907 = vsub.f32 %v4105, %v4906
    %v4908 = vand.u32 %v4907, 4294901760
    %4909 = vmatmul.mubr.f32.gmra.mrb[0].mxu0 %v4908
    %v4910 = vpop.f32.mrb[0].mxu0
    %v4911 = vadd.f32 %v4708, %v4910
    %v4912 = vpop.f32.mrb[0].mxu0
    %v4913 = vadd.f32 %v4710, %v4912
    %4914 = vmatprep.mubr.f32.mxu0 0.0
    %v4915 = vand.u32 %v4108, 4294901760
    %v4916 = vsub.f32 %v4108, %v4915
    %v4917 = vand.u32 %v4916, 4294901760
    %4918 = vmatmul.mubr.f32.gmra.mrb[0].mxu0 %v4917
    %v4919 = vpop.f32.mrb[0].mxu0
    %v4920 = vadd.f32 %v4716, %v4919
    %v4921 = vpop.f32.mrb[0].mxu0
    %v4922 = vadd.f32 %v4718, %v4921
    %4923 = vmatprep.mubr.f32.mxu0 0.0
    %v4924 = vand.u32 %v4111, 4294901760
    %v4925 = vsub.f32 %v4111, %v4924
    %v4926 = vand.u32 %v4925, 4294901760
    %4927 = vmatmul.mubr.f32.gmra.mrb[0].mxu0 %v4926
    %v4928 = vpop.f32.mrb[0].mxu0
    %v4929 = vadd.f32 %v4724, %v4928
    %v4930 = vpop.f32.mrb[0].mxu0
    %v4931 = vadd.f32 %v4726, %v4930
    %4932 = vmatprep.mubr.f32.mxu0 0.0
    %v4933 = vand.u32 %v4114, 4294901760
    %v4934 = vsub.f32 %v4114, %v4933
    %v4935 = vand.u32 %v4934, 4294901760
    %4936 = vmatmul.mubr.f32.gmra.mrb[0].mxu0 %v4935
    %v4937 = vpop.f32.mrb[0].mxu0
    %v4938 = vadd.f32 %v4732, %v4937
    %v4939 = vpop.f32.mrb[0].mxu0
    %v4940 = vadd.f32 %v4734, %v4939
    %4941 = vmatprep.mubr.f32.mxu0 0.0
    %v4942 = vand.u32 %v4117, 4294901760
    %v4943 = vsub.f32 %v4117, %v4942
    %v4944 = vand.u32 %v4943, 4294901760
    %4945 = vmatmul.mubr.f32.gmra.mrb[0].mxu0 %v4944
    %v4946 = vpop.f32.mrb[0].mxu0
    %v4947 = vadd.f32 %v4740, %v4946
    %v4948 = vpop.f32.mrb[0].mxu0
    %v4949 = vadd.f32 %v4742, %v4948
    %4950 = vmatprep.mubr.f32.mxu0 0.0
    %v4951 = vand.u32 %v4120, 4294901760
    %v4952 = vsub.f32 %v4120, %v4951
    %v4953 = vand.u32 %v4952, 4294901760
    %4954 = vmatmul.mubr.f32.gmra.mrb[0].mxu0 %v4953
    %v4955 = vpop.f32.mrb[0].mxu0
    %v4956 = vadd.f32 %v4748, %v4955
    %v4957 = vpop.f32.mrb[0].mxu0
    %v4958 = vadd.f32 %v4750, %v4957
    %4959 = vmatprep.mubr.f32.mxu0 0.0
    %v4960 = vand.u32 %v4123, 4294901760
    %v4961 = vsub.f32 %v4123, %v4960
    %v4962 = vand.u32 %v4961, 4294901760
    %4963 = vmatmul.mubr.f32.gmra.mrb[0].mxu0 %v4962
    %v4964 = vpop.f32.mrb[0].mxu0
    %v4965 = vadd.f32 %v4756, %v4964
    %v4966 = vpop.f32.mrb[0].mxu0
    %v4967 = vadd.f32 %v4758, %v4966
    %4968 = vmatprep.mubr.f32.mxu0 0.0
    %v4969 = vand.u32 %v4126, 4294901760
    %v4970 = vsub.f32 %v4126, %v4969
    %v4971 = vand.u32 %v4970, 4294901760
    %4972 = vmatmul.mubr.f32.gmra.mrb[0].mxu0 %v4971
    %v4973 = vpop.f32.mrb[0].mxu0
    %v4974 = vadd.f32 %v4764, %v4973
    %v4975 = vpop.f32.mrb[0].mxu0
    %v4976 = vadd.f32 %v4766, %v4975
    %4977 = vmatprep.mubr.f32.mxu0 0.0
    %v4978 = vand.u32 %v4129, 4294901760
    %v4979 = vsub.f32 %v4129, %v4978
    %v4980 = vand.u32 %v4979, 4294901760
    %4981 = vmatmul.mubr.f32.gmra.mrb[0].mxu0 %v4980
    %v4982 = vpop.f32.mrb[0].mxu0
    %v4983 = vadd.f32 %v4772, %v4982
    %v4984 = vpop.f32.mrb[0].mxu0
    %v4985 = vadd.f32 %v4774, %v4984
    %4986 = vmatprep.mubr.f32.mxu0 0.0
    %v4987 = vand.u32 %v4132, 4294901760
    %v4988 = vsub.f32 %v4132, %v4987
    %v4989 = vand.u32 %v4988, 4294901760
    %4990 = vmatmul.mubr.f32.gmra.mrb[0].mxu0 %v4989
    %v4991 = vpop.f32.mrb[0].mxu0
    %v4992 = vadd.f32 %v4780, %v4991
    %v4993 = vpop.f32.mrb[0].mxu0
    %v4994 = vadd.f32 %v4782, %v4993
    %4995 = vmatprep.mubr.f32.mxu0 0.0
    %v4996 = vand.u32 %v4135, 4294901760
    %v4997 = vsub.f32 %v4135, %v4996
    %v4998 = vand.u32 %v4997, 4294901760
    %4999 = vmatmul.mubr.f32.gmra.mrb[0].mxu0 %v4998
    %v5000 = vpop.f32.mrb[0].mxu0
    %v5001 = vadd.f32 %v4788, %v5000
    %v5002 = vpop.f32.mrb[0].mxu0
    %v5003 = vadd.f32 %v4790, %v5002
    %5004 = vmatprep.mubr.f32.mxu0 0.0
    %v5005 = vand.u32 %v4138, 4294901760
    %v5006 = vsub.f32 %v4138, %v5005
    %v5007 = vand.u32 %v5006, 4294901760
    %5008 = vmatmul.mubr.f32.gmra.mrb[0].mxu0 %v5007
    %v5009 = vpop.f32.mrb[0].mxu0
    %v5010 = vadd.f32 %v4796, %v5009
    %v5011 = vpop.f32.mrb[0].mxu0
    %v5012 = vadd.f32 %v4798, %v5011
    %5013 = vmatprep.mubr.f32.mxu0 0.0
    %v5014 = vand.u32 %v4141, 4294901760
    %v5015 = vsub.f32 %v4141, %v5014
    %v5016 = vand.u32 %v5015, 4294901760
    %5017 = vmatmul.mubr.f32.gmra.mrb[0].mxu0 %v5016
    %v5018 = vpop.f32.mrb[0].mxu0
    %v5019 = vadd.f32 %v4804, %v5018
    %v5020 = vpop.f32.mrb[0].mxu0
    %v5021 = vadd.f32 %v4806, %v5020
    %5022 = vmatprep.mubr.f32.mxu0 0.0
    %v5023 = vand.u32 %v4144, 4294901760
    %v5024 = vsub.f32 %v4144, %v5023
    %v5025 = vand.u32 %v5024, 4294901760
    %5026 = vmatmul.mubr.f32.gmra.mrb[0].mxu0 %v5025
    %v5027 = vpop.f32.mrb[0].mxu0
    %v5028 = vadd.f32 %v4812, %v5027
    %v5029 = vpop.f32.mrb[0].mxu0
    %v5030 = vadd.f32 %v4814, %v5029
    %5031 = vmatprep.mubr.f32.mxu0 0.0
    %v5032 = vand.u32 %v4147, 4294901760
    %v5033 = vsub.f32 %v4147, %v5032
    %v5034 = vand.u32 %v5033, 4294901760
    %5035 = vmatmul.mubr.f32.gmra.mrb[0].mxu0 %v5034
    %v5036 = vpop.f32.mrb[0].mxu0
    %v5037 = vadd.f32 %v4820, %v5036
    %v5038 = vpop.f32.mrb[0].mxu0
    %v5039 = vadd.f32 %v4822, %v5038
    %5040 = vdwg.mxu0
    %v5041 = vand.u32 %v4081, 4294901760
    %v5042 = vsub.f32 %v4081, %v5041
    %v5043 = vand.u32 %v5042, 4294901760
    %5044 = vmatprep.subr.mxu0 %v5043
    %v5045 = vand.u32 %v4080, 4294901760
    %v5046 = vsub.f32 %v4080, %v5045
    %v5047 = vand.u32 %v5046, 4294901760
    %5048 = vmatpush1.msra.mxu0 %v5047
    %v5049 = vand.u32 %v4083, 4294901760
    %v5050 = vsub.f32 %v4083, %v5049
    %v5051 = vand.u32 %v5050, 4294901760
    %5052 = vmatprep.subr.mxu0 %v5051
    %v5053 = vand.u32 %v4082, 4294901760
    %v5054 = vsub.f32 %v4082, %v5053
    %v5055 = vand.u32 %v5054, 4294901760
    %5056 = vmatpush1.msra.mxu0 %v5055
    %v5057 = vand.u32 %v4085, 4294901760
    %v5058 = vsub.f32 %v4085, %v5057
    %v5059 = vand.u32 %v5058, 4294901760
    %5060 = vmatprep.subr.mxu0 %v5059
    %v5061 = vand.u32 %v4084, 4294901760
    %v5062 = vsub.f32 %v4084, %v5061
    %v5063 = vand.u32 %v5062, 4294901760
    %5064 = vmatpush1.msra.mxu0 %v5063
    %v5065 = vand.u32 %v4087, 4294901760
    %v5066 = vsub.f32 %v4087, %v5065
    %v5067 = vand.u32 %v5066, 4294901760
    %5068 = vmatprep.subr.mxu0 %v5067
    %v5069 = vand.u32 %v4086, 4294901760
    %v5070 = vsub.f32 %v4086, %v5069
    %v5071 = vand.u32 %v5070, 4294901760
    %5072 = vmatpush1.msra.mxu0 %v5071
    %5073 = vmatprep.subr.mxu0 0.0
    %5074 = vmatpush1.msra.mxu0 0.0
    %5075 = vmatprep.subr.mxu0 0.0
    %5076 = vmatpush1.msra.mxu0 0.0
    %5077 = vmatprep.subr.mxu0 0.0
    %5078 = vmatpush1.msra.mxu0 0.0
    %5079 = vmatprep.subr.mxu0 0.0
    %5080 = vmatpush1.msra.mxu0 0.0
    %5081 = vmatprep.subr.mxu0 0.0
    %5082 = vmatpush1.msra.mxu0 0.0
    %5083 = vmatprep.subr.mxu0 0.0
    %5084 = vmatpush1.msra.mxu0 0.0
    %5085 = vmatprep.subr.mxu0 0.0
    %5086 = vmatpush1.msra.mxu0 0.0
    %5087 = vmatprep.subr.mxu0 0.0
    %5088 = vmatpush1.msra.mxu0 0.0
    %5089 = vmatprep.subr.mxu0 0.0
    %5090 = vmatpush1.msra.mxu0 0.0
    %5091 = vmatprep.subr.mxu0 0.0
    %5092 = vmatpush1.msra.mxu0 0.0
    %5093 = vmatprep.subr.mxu0 0.0
    %5094 = vmatpush1.msra.mxu0 0.0
    %5095 = vmatprep.subr.mxu0 0.0
    %5096 = vmatpush1.msra.mxu0 0.0
    %5097 = vmatprep.subr.mxu0 0.0
    %5098 = vmatpush1.msra.mxu0 0.0
    %5099 = vmatprep.subr.mxu0 0.0
    %5100 = vmatpush1.msra.mxu0 0.0
    %5101 = vmatprep.subr.mxu0 0.0
    %5102 = vmatpush1.msra.mxu0 0.0
    %5103 = vmatprep.subr.mxu0 0.0
    %5104 = vmatpush1.msra.mxu0 0.0
    %5105 = vmatprep.subr.mxu0 0.0
    %5106 = vmatpush1.msra.mxu0 0.0
    %5107 = vmatprep.subr.mxu0 0.0
    %5108 = vmatpush1.msra.mxu0 0.0
    %5109 = vmatprep.subr.mxu0 0.0
    %5110 = vmatpush1.msra.mxu0 0.0
    %5111 = vmatprep.subr.mxu0 0.0
    %5112 = vmatpush1.msra.mxu0 0.0
    %5113 = vmatprep.subr.mxu0 0.0
    %5114 = vmatpush1.msra.mxu0 0.0
    %5115 = vmatprep.subr.mxu0 0.0
    %5116 = vmatpush1.msra.mxu0 0.0
    %5117 = vmatprep.subr.mxu0 0.0
    %5118 = vmatpush1.msra.mxu0 0.0
    %5119 = vmatprep.subr.mxu0 0.0
    %5120 = vmatpush1.msra.mxu0 0.0
    %5121 = vmatprep.subr.mxu0 0.0
    %5122 = vmatpush1.msra.mxu0 0.0
    %5123 = vmatprep.subr.mxu0 0.0
    %5124 = vmatpush1.msra.mxu0 0.0
    %5125 = vmatprep.subr.mxu0 0.0
    %5126 = vmatpush1.msra.mxu0 0.0
    %5127 = vmatprep.subr.mxu0 0.0
    %5128 = vmatpush1.msra.mxu0 0.0
    %5129 = vmatprep.mubr.f32.mxu0 0.0
    %v5130 = vand.u32 %v4102, 4294901760
    %5131 = vmatmul.mubr.f32.gmra.mrb[0].mxu0 %v5130
    %v5132 = vpop.f32.mrb[0].mxu0
    %v5133 = vadd.f32 %v4902, %v5132
    %v5134 = vpop.f32.mrb[0].mxu0
    %v5135 = vadd.f32 %v4904, %v5134
    %5136 = vmatprep.mubr.f32.mxu0 0.0
    %v5137 = vand.u32 %v4105, 4294901760
    %5138 = vmatmul.mubr.f32.gmra.mrb[0].mxu0 %v5137
    %v5139 = vpop.f32.mrb[0].mxu0
    %v5140 = vadd.f32 %v4911, %v5139
    %v5141 = vpop.f32.mrb[0].mxu0
    %v5142 = vadd.f32 %v4913, %v5141
    %5143 = vmatprep.mubr.f32.mxu0 0.0
    %v5144 = vand.u32 %v4108, 4294901760
    %5145 = vmatmul.mubr.f32.gmra.mrb[0].mxu0 %v5144
    %v5146 = vpop.f32.mrb[0].mxu0
    %v5147 = vadd.f32 %v4920, %v5146
    %v5148 = vpop.f32.mrb[0].mxu0
    %v5149 = vadd.f32 %v4922, %v5148
    %5150 = vmatprep.mubr.f32.mxu0 0.0
    %v5151 = vand.u32 %v4111, 4294901760
    %5152 = vmatmul.mubr.f32.gmra.mrb[0].mxu0 %v5151
    %v5153 = vpop.f32.mrb[0].mxu0
    %v5154 = vadd.f32 %v4929, %v5153
    %v5155 = vpop.f32.mrb[0].mxu0
    %v5156 = vadd.f32 %v4931, %v5155
    %5157 = vmatprep.mubr.f32.mxu0 0.0
    %v5158 = vand.u32 %v4114, 4294901760
    %5159 = vmatmul.mubr.f32.gmra.mrb[0].mxu0 %v5158
    %v5160 = vpop.f32.mrb[0].mxu0
    %v5161 = vadd.f32 %v4938, %v5160
    %v5162 = vpop.f32.mrb[0].mxu0
    %v5163 = vadd.f32 %v4940, %v5162
    %5164 = vmatprep.mubr.f32.mxu0 0.0
    %v5165 = vand.u32 %v4117, 4294901760
    %5166 = vmatmul.mubr.f32.gmra.mrb[0].mxu0 %v5165
    %v5167 = vpop.f32.mrb[0].mxu0
    %v5168 = vadd.f32 %v4947, %v5167
    %v5169 = vpop.f32.mrb[0].mxu0
    %v5170 = vadd.f32 %v4949, %v5169
    %5171 = vmatprep.mubr.f32.mxu0 0.0
    %v5172 = vand.u32 %v4120, 4294901760
    %5173 = vmatmul.mubr.f32.gmra.mrb[0].mxu0 %v5172
    %v5174 = vpop.f32.mrb[0].mxu0
    %v5175 = vadd.f32 %v4956, %v5174
    %v5176 = vpop.f32.mrb[0].mxu0
    %v5177 = vadd.f32 %v4958, %v5176
    %5178 = vmatprep.mubr.f32.mxu0 0.0
    %v5179 = vand.u32 %v4123, 4294901760
    %5180 = vmatmul.mubr.f32.gmra.mrb[0].mxu0 %v5179
    %v5181 = vpop.f32.mrb[0].mxu0
    %v5182 = vadd.f32 %v4965, %v5181
    %v5183 = vpop.f32.mrb[0].mxu0
    %v5184 = vadd.f32 %v4967, %v5183
    %5185 = vmatprep.mubr.f32.mxu0 0.0
    %v5186 = vand.u32 %v4126, 4294901760
    %5187 = vmatmul.mubr.f32.gmra.mrb[0].mxu0 %v5186
    %v5188 = vpop.f32.mrb[0].mxu0
    %v5189 = vadd.f32 %v4974, %v5188
    %v5190 = vpop.f32.mrb[0].mxu0
    %v5191 = vadd.f32 %v4976, %v5190
    %5192 = vmatprep.mubr.f32.mxu0 0.0
    %v5193 = vand.u32 %v4129, 4294901760
    %5194 = vmatmul.mubr.f32.gmra.mrb[0].mxu0 %v5193
    %v5195 = vpop.f32.mrb[0].mxu0
    %v5196 = vadd.f32 %v4983, %v5195
    %v5197 = vpop.f32.mrb[0].mxu0
    %v5198 = vadd.f32 %v4985, %v5197
    %5199 = vmatprep.mubr.f32.mxu0 0.0
    %v5200 = vand.u32 %v4132, 4294901760
    %5201 = vmatmul.mubr.f32.gmra.mrb[0].mxu0 %v5200
    %v5202 = vpop.f32.mrb[0].mxu0
    %v5203 = vadd.f32 %v4992, %v5202
    %v5204 = vpop.f32.mrb[0].mxu0
    %v5205 = vadd.f32 %v4994, %v5204
    %5206 = vmatprep.mubr.f32.mxu0 0.0
    %v5207 = vand.u32 %v4135, 4294901760
    %5208 = vmatmul.mubr.f32.gmra.mrb[0].mxu0 %v5207
    %v5209 = vpop.f32.mrb[0].mxu0
    %v5210 = vadd.f32 %v5001, %v5209
    %v5211 = vpop.f32.mrb[0].mxu0
    %v5212 = vadd.f32 %v5003, %v5211
    %5213 = vmatprep.mubr.f32.mxu0 0.0
    %v5214 = vand.u32 %v4138, 4294901760
    %5215 = vmatmul.mubr.f32.gmra.mrb[0].mxu0 %v5214
    %v5216 = vpop.f32.mrb[0].mxu0
    %v5217 = vadd.f32 %v5010, %v5216
    %v5218 = vpop.f32.mrb[0].mxu0
    %v5219 = vadd.f32 %v5012, %v5218
    %5220 = vmatprep.mubr.f32.mxu0 0.0
    %v5221 = vand.u32 %v4141, 4294901760
    %5222 = vmatmul.mubr.f32.gmra.mrb[0].mxu0 %v5221
    %v5223 = vpop.f32.mrb[0].mxu0
    %v5224 = vadd.f32 %v5019, %v5223
    %v5225 = vpop.f32.mrb[0].mxu0
    %v5226 = vadd.f32 %v5021, %v5225
    %5227 = vmatprep.mubr.f32.mxu0 0.0
    %v5228 = vand.u32 %v4144, 4294901760
    %5229 = vmatmul.mubr.f32.gmra.mrb[0].mxu0 %v5228
    %v5230 = vpop.f32.mrb[0].mxu0
    %v5231 = vadd.f32 %v5028, %v5230
    %v5232 = vpop.f32.mrb[0].mxu0
    %v5233 = vadd.f32 %v5030, %v5232
    %5234 = vmatprep.mubr.f32.mxu0 0.0
    %v5235 = vand.u32 %v4147, 4294901760
    %5236 = vmatmul.mubr.f32.gmra.mrb[0].mxu0 %v5235
    %v5237 = vpop.f32.mrb[0].mxu0
    %v5238 = vadd.f32 %v5037, %v5237
    %v5239 = vpop.f32.mrb[0].mxu0
    %v5240 = vadd.f32 %v5039, %v5239
    %5241 = vdwg.mxu0
    %v5242 = vand.u32 %v4081, 4294901760
    %5243 = vmatprep.subr.mxu0 %v5242
    %v5244 = vand.u32 %v4080, 4294901760
    %5245 = vmatpush1.msra.mxu0 %v5244
    %v5246 = vand.u32 %v4083, 4294901760
    %5247 = vmatprep.subr.mxu0 %v5246
    %v5248 = vand.u32 %v4082, 4294901760
    %5249 = vmatpush1.msra.mxu0 %v5248
    %v5250 = vand.u32 %v4085, 4294901760
    %5251 = vmatprep.subr.mxu0 %v5250
    %v5252 = vand.u32 %v4084, 4294901760
    %5253 = vmatpush1.msra.mxu0 %v5252
    %v5254 = vand.u32 %v4087, 4294901760
    %5255 = vmatprep.subr.mxu0 %v5254
    %v5256 = vand.u32 %v4086, 4294901760
    %5257 = vmatpush1.msra.mxu0 %v5256
    %5258 = vmatprep.subr.mxu0 0.0
    %5259 = vmatpush1.msra.mxu0 0.0
    %5260 = vmatprep.subr.mxu0 0.0
    %5261 = vmatpush1.msra.mxu0 0.0
    %5262 = vmatprep.subr.mxu0 0.0
    %5263 = vmatpush1.msra.mxu0 0.0
    %5264 = vmatprep.subr.mxu0 0.0
    %5265 = vmatpush1.msra.mxu0 0.0
    %5266 = vmatprep.subr.mxu0 0.0
    %5267 = vmatpush1.msra.mxu0 0.0
    %5268 = vmatprep.subr.mxu0 0.0
    %5269 = vmatpush1.msra.mxu0 0.0
    %5270 = vmatprep.subr.mxu0 0.0
    %5271 = vmatpush1.msra.mxu0 0.0
    %5272 = vmatprep.subr.mxu0 0.0
    %5273 = vmatpush1.msra.mxu0 0.0
    %5274 = vmatprep.subr.mxu0 0.0
    %5275 = vmatpush1.msra.mxu0 0.0
    %5276 = vmatprep.subr.mxu0 0.0
    %5277 = vmatpush1.msra.mxu0 0.0
    %5278 = vmatprep.subr.mxu0 0.0
    %5279 = vmatpush1.msra.mxu0 0.0
    %5280 = vmatprep.subr.mxu0 0.0
    %5281 = vmatpush1.msra.mxu0 0.0
    %5282 = vmatprep.subr.mxu0 0.0
    %5283 = vmatpush1.msra.mxu0 0.0
    %5284 = vmatprep.subr.mxu0 0.0
    %5285 = vmatpush1.msra.mxu0 0.0
    %5286 = vmatprep.subr.mxu0 0.0
    %5287 = vmatpush1.msra.mxu0 0.0
    %5288 = vmatprep.subr.mxu0 0.0
    %5289 = vmatpush1.msra.mxu0 0.0
    %5290 = vmatprep.subr.mxu0 0.0
    %5291 = vmatpush1.msra.mxu0 0.0
    %5292 = vmatprep.subr.mxu0 0.0
    %5293 = vmatpush1.msra.mxu0 0.0
    %5294 = vmatprep.subr.mxu0 0.0
    %5295 = vmatpush1.msra.mxu0 0.0
    %5296 = vmatprep.subr.mxu0 0.0
    %5297 = vmatpush1.msra.mxu0 0.0
    %5298 = vmatprep.subr.mxu0 0.0
    %5299 = vmatpush1.msra.mxu0 0.0
    %5300 = vmatprep.subr.mxu0 0.0
    %5301 = vmatpush1.msra.mxu0 0.0
    %5302 = vmatprep.subr.mxu0 0.0
    %5303 = vmatpush1.msra.mxu0 0.0
    %5304 = vmatprep.subr.mxu0 0.0
    %5305 = vmatpush1.msra.mxu0 0.0
    %5306 = vmatprep.subr.mxu0 0.0
    %5307 = vmatpush1.msra.mxu0 0.0
    %5308 = vmatprep.subr.mxu0 0.0
    %5309 = vmatpush1.msra.mxu0 0.0
    %5310 = vmatprep.subr.mxu0 0.0
    %5311 = vmatpush1.msra.mxu0 0.0
    %5312 = vmatprep.subr.mxu0 0.0
    %5313 = vmatpush1.msra.mxu0 0.0
    %5314 = vmatprep.mubr.f32.mxu0 0.0
    %v5315 = vand.u32 %v4102, 4294901760
    %5316 = vmatmul.mubr.f32.gmra.mrb[0].mxu0 %v5315
    %v5317 = vpop.f32.mrb[0].mxu0
    %v5318 = vadd.f32 %v5133, %v5317
    %v5319 = vpop.f32.mrb[0].mxu0
    %v5320 = vadd.f32 %v5135, %v5319
    %5321 = vmatprep.mubr.f32.mxu0 0.0
    %v5322 = vand.u32 %v4105, 4294901760
    %5323 = vmatmul.mubr.f32.gmra.mrb[0].mxu0 %v5322
    %v5324 = vpop.f32.mrb[0].mxu0
    %v5325 = vadd.f32 %v5140, %v5324
    %v5326 = vpop.f32.mrb[0].mxu0
    %v5327 = vadd.f32 %v5142, %v5326
    %5328 = vmatprep.mubr.f32.mxu0 0.0
    %v5329 = vand.u32 %v4108, 4294901760
    %5330 = vmatmul.mubr.f32.gmra.mrb[0].mxu0 %v5329
    %v5331 = vpop.f32.mrb[0].mxu0
    %v5332 = vadd.f32 %v5147, %v5331
    %v5333 = vpop.f32.mrb[0].mxu0
    %v5334 = vadd.f32 %v5149, %v5333
    %5335 = vmatprep.mubr.f32.mxu0 0.0
    %v5336 = vand.u32 %v4111, 4294901760
    %5337 = vmatmul.mubr.f32.gmra.mrb[0].mxu0 %v5336
    %v5338 = vpop.f32.mrb[0].mxu0
    %v5339 = vadd.f32 %v5154, %v5338
    %v5340 = vpop.f32.mrb[0].mxu0
    %v5341 = vadd.f32 %v5156, %v5340
    %5342 = vmatprep.mubr.f32.mxu0 0.0
    %v5343 = vand.u32 %v4114, 4294901760
    %5344 = vmatmul.mubr.f32.gmra.mrb[0].mxu0 %v5343
    %v5345 = vpop.f32.mrb[0].mxu0
    %v5346 = vadd.f32 %v5161, %v5345
    %v5347 = vpop.f32.mrb[0].mxu0
    %v5348 = vadd.f32 %v5163, %v5347
    %5349 = vmatprep.mubr.f32.mxu0 0.0
    %v5350 = vand.u32 %v4117, 4294901760
    %5351 = vmatmul.mubr.f32.gmra.mrb[0].mxu0 %v5350
    %v5352 = vpop.f32.mrb[0].mxu0
    %v5353 = vadd.f32 %v5168, %v5352
    %v5354 = vpop.f32.mrb[0].mxu0
    %v5355 = vadd.f32 %v5170, %v5354
    %5356 = vmatprep.mubr.f32.mxu0 0.0
    %v5357 = vand.u32 %v4120, 4294901760
    %5358 = vmatmul.mubr.f32.gmra.mrb[0].mxu0 %v5357
    %v5359 = vpop.f32.mrb[0].mxu0
    %v5360 = vadd.f32 %v5175, %v5359
    %v5361 = vpop.f32.mrb[0].mxu0
    %v5362 = vadd.f32 %v5177, %v5361
    %5363 = vmatprep.mubr.f32.mxu0 0.0
    %v5364 = vand.u32 %v4123, 4294901760
    %5365 = vmatmul.mubr.f32.gmra.mrb[0].mxu0 %v5364
    %v5366 = vpop.f32.mrb[0].mxu0
    %v5367 = vadd.f32 %v5182, %v5366
    %v5368 = vpop.f32.mrb[0].mxu0
    %v5369 = vadd.f32 %v5184, %v5368
    %5370 = vmatprep.mubr.f32.mxu0 0.0
    %v5371 = vand.u32 %v4126, 4294901760
    %5372 = vmatmul.mubr.f32.gmra.mrb[0].mxu0 %v5371
    %v5373 = vpop.f32.mrb[0].mxu0
    %v5374 = vadd.f32 %v5189, %v5373
    %v5375 = vpop.f32.mrb[0].mxu0
    %v5376 = vadd.f32 %v5191, %v5375
    %5377 = vmatprep.mubr.f32.mxu0 0.0
    %v5378 = vand.u32 %v4129, 4294901760
    %5379 = vmatmul.mubr.f32.gmra.mrb[0].mxu0 %v5378
    %v5380 = vpop.f32.mrb[0].mxu0
    %v5381 = vadd.f32 %v5196, %v5380
    %v5382 = vpop.f32.mrb[0].mxu0
    %v5383 = vadd.f32 %v5198, %v5382
    %5384 = vmatprep.mubr.f32.mxu0 0.0
    %v5385 = vand.u32 %v4132, 4294901760
    %5386 = vmatmul.mubr.f32.gmra.mrb[0].mxu0 %v5385
    %v5387 = vpop.f32.mrb[0].mxu0
    %v5388 = vadd.f32 %v5203, %v5387
    %v5389 = vpop.f32.mrb[0].mxu0
    %v5390 = vadd.f32 %v5205, %v5389
    %5391 = vmatprep.mubr.f32.mxu0 0.0
    %v5392 = vand.u32 %v4135, 4294901760
    %5393 = vmatmul.mubr.f32.gmra.mrb[0].mxu0 %v5392
    %v5394 = vpop.f32.mrb[0].mxu0
    %v5395 = vadd.f32 %v5210, %v5394
    %v5396 = vpop.f32.mrb[0].mxu0
    %v5397 = vadd.f32 %v5212, %v5396
    %5398 = vmatprep.mubr.f32.mxu0 0.0
    %v5399 = vand.u32 %v4138, 4294901760
    %5400 = vmatmul.mubr.f32.gmra.mrb[0].mxu0 %v5399
    %v5401 = vpop.f32.mrb[0].mxu0
    %v5402 = vadd.f32 %v5217, %v5401
    %v5403 = vpop.f32.mrb[0].mxu0
    %v5404 = vadd.f32 %v5219, %v5403
    %5405 = vmatprep.mubr.f32.mxu0 0.0
    %v5406 = vand.u32 %v4141, 4294901760
    %5407 = vmatmul.mubr.f32.gmra.mrb[0].mxu0 %v5406
    %v5408 = vpop.f32.mrb[0].mxu0
    %v5409 = vadd.f32 %v5224, %v5408
    %v5410 = vpop.f32.mrb[0].mxu0
    %v5411 = vadd.f32 %v5226, %v5410
    %5412 = vmatprep.mubr.f32.mxu0 0.0
    %v5413 = vand.u32 %v4144, 4294901760
    %5414 = vmatmul.mubr.f32.gmra.mrb[0].mxu0 %v5413
    %v5415 = vpop.f32.mrb[0].mxu0
    %v5416 = vadd.f32 %v5231, %v5415
    %v5417 = vpop.f32.mrb[0].mxu0
    %v5418 = vadd.f32 %v5233, %v5417
    %5419 = vmatprep.mubr.f32.mxu0 0.0
    %v5420 = vand.u32 %v4147, 4294901760
    %5421 = vmatmul.mubr.f32.gmra.mrb[0].mxu0 %v5420
    %v5422 = vpop.f32.mrb[0].mxu0
    %v5423 = vadd.f32 %v5238, %v5422
    %v5424 = vpop.f32.mrb[0].mxu0
    %v5425 = vadd.f32 %v5240, %v5424
    %5426 = vdwg.mxu0
    %v5427 = vxor.u32 %v5320, 2147483648
    %v5428 = vxor.u32 %v5327, 2147483648
    %v5429 = vxor.u32 %v5334, 2147483648
    %v5430 = vxor.u32 %v5341, 2147483648
    %v5431 = vxor.u32 %v5348, 2147483648
    %v5432 = vxor.u32 %v5355, 2147483648
    %v5433 = vxor.u32 %v5362, 2147483648
    %v5434 = vxor.u32 %v5369, 2147483648
    %v5435 = vxor.u32 %v5376, 2147483648
    %v5436 = vxor.u32 %v5383, 2147483648
    %v5437 = vxor.u32 %v5390, 2147483648
    %v5438 = vxor.u32 %v5397, 2147483648
    %v5439 = vxor.u32 %v5404, 2147483648
    %v5440 = vxor.u32 %v5411, 2147483648
    %v5441 = vxor.u32 %v5418, 2147483648
    %v5442 = vxor.u32 %v5425, 2147483648
    %v5443 = vmul.f32 %v5427, 1.442695
    %v5444 = vpow.pop %v5443
    %v5445 = vmul.f32 %v5428, 1.442695
    %v5446 = vpow.pop %v5445
    %v5447 = vmul.f32 %v5429, 1.442695
    %v5448 = vpow.pop %v5447
    %v5449 = vmul.f32 %v5430, 1.442695
    %v5450 = vpow.pop %v5449
    %v5451 = vmul.f32 %v5431, 1.442695
    %v5452 = vpow.pop %v5451
    %v5453 = vmul.f32 %v5432, 1.442695
    %v5454 = vpow.pop %v5453
    %v5455 = vmul.f32 %v5433, 1.442695
    %v5456 = vpow.pop %v5455
    %v5457 = vmul.f32 %v5434, 1.442695
    %v5458 = vpow.pop %v5457
    %v5459 = vmul.f32 %v5435, 1.442695
    %v5460 = vpow.pop %v5459
    %v5461 = vmul.f32 %v5436, 1.442695
    %v5462 = vpow.pop %v5461
    %v5463 = vmul.f32 %v5437, 1.442695
    %v5464 = vpow.pop %v5463
    %v5465 = vmul.f32 %v5438, 1.442695
    %v5466 = vpow.pop %v5465
    %v5467 = vmul.f32 %v5439, 1.442695
    %v5468 = vpow.pop %v5467
    %v5469 = vmul.f32 %v5440, 1.442695
    %v5470 = vpow.pop %v5469
    %v5471 = vmul.f32 %v5441, 1.442695
    %v5472 = vpow.pop %v5471
    %v5473 = vmul.f32 %v5442, 1.442695
    %v5474 = vpow.pop %v5473
    %v5475 = vadd.f32 %v5444, 1.0
    %v5476 = vadd.f32 %v5446, 1.0
    %v5477 = vadd.f32 %v5448, 1.0
    %v5478 = vadd.f32 %v5450, 1.0
    %v5479 = vadd.f32 %v5452, 1.0
    %v5480 = vadd.f32 %v5454, 1.0
    %v5481 = vadd.f32 %v5456, 1.0
    %v5482 = vadd.f32 %v5458, 1.0
    %v5483 = vadd.f32 %v5460, 1.0
    %v5484 = vadd.f32 %v5462, 1.0
    %v5485 = vadd.f32 %v5464, 1.0
    %v5486 = vadd.f32 %v5466, 1.0
    %v5487 = vadd.f32 %v5468, 1.0
    %v5488 = vadd.f32 %v5470, 1.0
    %v5489 = vadd.f32 %v5472, 1.0
    %v5490 = vadd.f32 %v5474, 1.0
    %v5491 = vrcp.pop %v5475
    %v5492 = vmul.f32 1.0, %v5491
    %v5493 = vrcp.pop %v5476
    %v5494 = vmul.f32 1.0, %v5493
    %v5495 = vrcp.pop %v5477
    %v5496 = vmul.f32 1.0, %v5495
    %v5497 = vrcp.pop %v5478
    %v5498 = vmul.f32 1.0, %v5497
    %v5499 = vrcp.pop %v5479
    %v5500 = vmul.f32 1.0, %v5499
    %v5501 = vrcp.pop %v5480
    %v5502 = vmul.f32 1.0, %v5501
    %v5503 = vrcp.pop %v5481
    %v5504 = vmul.f32 1.0, %v5503
    %v5505 = vrcp.pop %v5482
    %v5506 = vmul.f32 1.0, %v5505
    %v5507 = vrcp.pop %v5483
    %v5508 = vmul.f32 1.0, %v5507
    %v5509 = vrcp.pop %v5484
    %v5510 = vmul.f32 1.0, %v5509
    %v5511 = vrcp.pop %v5485
    %v5512 = vmul.f32 1.0, %v5511
    %v5513 = vrcp.pop %v5486
    %v5514 = vmul.f32 1.0, %v5513
    %v5515 = vrcp.pop %v5487
    %v5516 = vmul.f32 1.0, %v5515
    %v5517 = vrcp.pop %v5488
    %v5518 = vmul.f32 1.0, %v5517
    %v5519 = vrcp.pop %v5489
    %v5520 = vmul.f32 1.0, %v5519
    %v5521 = vrcp.pop %v5490
    %v5522 = vmul.f32 1.0, %v5521
    %v5523 = vmul.f32 %v5318, %v5492
    %v5524 = vmul.f32 %v5325, %v5494
    %v5525 = vmul.f32 %v5332, %v5496
    %v5526 = vmul.f32 %v5339, %v5498
    %v5527 = vmul.f32 %v5346, %v5500
    %v5528 = vmul.f32 %v5353, %v5502
    %v5529 = vmul.f32 %v5360, %v5504
    %v5530 = vmul.f32 %v5367, %v5506
    %v5531 = vmul.f32 %v5374, %v5508
    %v5532 = vmul.f32 %v5381, %v5510
    %v5533 = vmul.f32 %v5388, %v5512
    %v5534 = vmul.f32 %v5395, %v5514
    %v5535 = vmul.f32 %v5402, %v5516
    %v5536 = vmul.f32 %v5409, %v5518
    %v5537 = vmul.f32 %v5416, %v5520
    %v5538 = vmul.f32 %v5423, %v5522
    %5539 = vst [vmem:[#allocation5] sm:$0xff] %v5523
    %5540 = vst [vmem:[#allocation5 + $0x8] sm:$0xff] %v5524
    %5541 = vst [vmem:[#allocation5 + $0x10] sm:$0xff] %v5525
    %5542 = vst [vmem:[#allocation5 + $0x18] sm:$0xff] %v5526
    %5543 = vst [vmem:[#allocation5 + $0x20] sm:$0xff] %v5527
    %5544 = vst [vmem:[#allocation5 + $0x28] sm:$0xff] %v5528
    %5545 = vst [vmem:[#allocation5 + $0x30] sm:$0xff] %v5529
    %5546 = vst [vmem:[#allocation5 + $0x38] sm:$0xff] %v5530
    %5547 = vst [vmem:[#allocation5 + $0x40] sm:$0xff] %v5531
    %5548 = vst [vmem:[#allocation5 + $0x48] sm:$0xff] %v5532
    %5549 = vst [vmem:[#allocation5 + $0x50] sm:$0xff] %v5533
    %5550 = vst [vmem:[#allocation5 + $0x58] sm:$0xff] %v5534
    %5551 = vst [vmem:[#allocation5 + $0x60] sm:$0xff] %v5535
    %5552 = vst [vmem:[#allocation5 + $0x68] sm:$0xff] %v5536
    %5553 = vst [vmem:[#allocation5 + $0x70] sm:$0xff] %v5537
    %5554 = vst [vmem:[#allocation5 + $0x78] sm:$0xff] %v5538
    // Predicated region
    $region22: #{gcnl.1} parent=1 // pred_check
      _
    $region23: #{gcnl.1} parent=1 // pred_check_branch
      %5556 = sbr.rel (0) target = $region25
    $region24: #{gcnl.1} parent=1 // pred_region
      %s5558 = ssub.s32 2048, 2048
      %5559 = vsyncadd [#allocation4], %s5558
      %s5560 = sshll.u32 [#allocation5], 4
      %s5561 = int_to_ptr.vmem [resolvable:$true] %s5560
      %5566 = dma.vmem_to_hbm [thread:$0]  %s5561, 2048, %s4, [#allocation4], 128, 128, 8
    $region25: #{gcnl.1} parent=1 // pred_fallthru
      _
    // Predicated region
    $region26: #{gcnl.1} parent=1 // pred_check
      _
    $region27: #{gcnl.1} parent=1 // pred_check_branch
      %5568 = sbr.rel (0) target = $region29
    $region28: #{gcnl.1} parent=1 // pred_region
      %5569 = dma.done [#allocation4], 2048
    $region29: #{gcnl.1} parent=1 // pred_fallthru
      _
    %5570 = vsyncpa [#allocation3], 1
    %5571 = vsyncpa [#allocation4], 1

</llo_original>
